<compile_context>
chip_gen: v5e
topology: v5e:2x2
jax: 0.10.0
libtpu: 0.0.40
codegen_flags: <defaults>
</compile_context>

<pallas_src>
import functools

import jax
import jax.numpy as jnp
from jax import lax
from jax.experimental import pallas as pl
from jax.experimental.pallas import tpu as pltpu


# ------------------------------ kernel helpers --------------------------------

def _layer_norm(z, g, b, eps=1e-5):
    mu = jnp.mean(z, axis=-1, keepdims=True)
    var = jnp.mean((z - mu) ** 2, axis=-1, keepdims=True)
    return g * (z - mu) * lax.rsqrt(var + eps) + b


_QKT_DIMS = (((2,), (2,)), ((0,), (0,)))  # (BN,T,hd) x (BN,S,hd) -> (BN,T,S)
_AV_DIMS = (((2,), (1,)), ((0,), (0,)))   # (BN,T,S)  x (BN,S,hd) -> (BN,T,hd)


# --------------------------------- kernel --------------------------------------

def decoder_block_kernel(x_ref, mem_ref,
                         sa_wqkv_ref, sa_bqkv_ref, sa_wo_ref, sa_bo_ref,
                         ca_wq_ref, ca_bq_ref, ca_wkv_ref, ca_bkv_ref,
                         ca_wo_ref, ca_bo_ref,
                         w1_ref, b1_ref, w2_ref, b2_ref,
                         ln_g_ref, ln_b_ref,
                         o_ref,
                         q_sc, ks_sc, vs_sc, kc_sc, vc_sc, merge_sc,
                         *, num_heads):
    nh = num_heads
    blk, t, d = x_ref.shape
    s_mem = mem_ref.shape[1]
    hd = d // nh
    scale = 1.0 / (d ** 0.5)   # the reference module scales by sqrt(dim_v) == sqrt(D)
    cdt = x_ref.dtype          # MXU operand dtype (bf16); accumulation is f32

    # Only the tiny LN params are hoisted; the big weights are read at their
    # single use site so their live ranges stay short (no whole-kernel hoist).
    ln_g = ln_g_ref[...]
    ln_b = ln_b_ref[...]

    x0 = x_ref[...].reshape(blk * t, d)          # (BT, D) bf16, token-flattened
    mem = mem_ref[...].reshape(blk * s_mem, d)   # (BS, D) bf16

    def split_heads(a2d, seq, dst_ref):
        # a2d: (blk*seq, nh*hd) value.  Scatter per-(batch, head) tiles into a
        # (blk*nh, seq, hd) VMEM scratch so QK^T / A@V run as head-batched dots.
        # Static slices only -> cheap masked stores, no in-kernel transposes.
        a2d = a2d.astype(cdt)
        for b in range(blk):
            rows = a2d[b * seq:(b + 1) * seq]
            for h in range(nh):
                dst_ref[b * nh + h] = rows[:, h * hd:(h + 1) * hd]

    def attn_core(k_heads_ref, v_heads_ref, wo_ref, bo_ref):
        # q/k/v staged as (blk*nh, seq, hd) bf16; q already scaled by 1/sqrt(D).
        # NOTE: contraction is dim-2/dim-2; if the bundle dump shows per-head
        # vxpose on K, stage K pre-transposed as (blk*nh, hd, S) instead.
        s = lax.dot_general(q_sc[...], k_heads_ref[...], _QKT_DIMS,
                            preferred_element_type=jnp.float32)       # (BN,T,S)
        m = jnp.max(s, axis=-1, keepdims=True)
        e = jnp.exp(s - m)                                            # f32, EUP
        p = (e * pl.reciprocal(jnp.sum(e, axis=-1, keepdims=True),
                               approx=True)).astype(cdt)
        av = lax.dot_general(p, v_heads_ref[...], _AV_DIMS,
                             preferred_element_type=jnp.float32).astype(cdt)
        # Re-pack heads onto lanes (head h -> columns [h*hd, (h+1)*hd)) so the
        # output projection is one dense (BT,D)x(D,D) matmul: the head
        # reduction happens on the MXU (K = D), not as a VPU sum.
        for b in range(blk):
            for h in range(nh):
                merge_sc[b * t:(b + 1) * t, h * hd:(h + 1) * hd] = av[b * nh + h]
        return (jnp.dot(merge_sc[...], wo_ref[...],
                        preferred_element_type=jnp.float32) + bo_ref[...])

    # ---- 1) self-attention (dense fused QKV projection) + residual + LN1 ----
    qkv = (jnp.dot(x0, sa_wqkv_ref[...], preferred_element_type=jnp.float32)
           + sa_bqkv_ref[...])                                        # (BT, 3D) f32
    split_heads(qkv[:, :d] * scale, t, q_sc)
    split_heads(qkv[:, d:2 * d], t, ks_sc)
    split_heads(qkv[:, 2 * d:], t, vs_sc)
    a1 = attn_core(ks_sc, vs_sc, sa_wo_ref, sa_bo_ref)
    h1 = _layer_norm(x0.astype(jnp.float32) + a1, ln_g[0], ln_b[0])

    # ---- 2) cross-attention over `memory` + residual + LN2 -------------------
    q2 = (jnp.dot(h1.astype(cdt), ca_wq_ref[...],
                  preferred_element_type=jnp.float32) + ca_bq_ref[...])   # (BT, D)
    kv2 = (jnp.dot(mem, ca_wkv_ref[...],
                   preferred_element_type=jnp.float32) + ca_bkv_ref[...])  # (BS, 2D)
    split_heads(q2 * scale, t, q_sc)
    split_heads(kv2[:, :d], s_mem, kc_sc)
    split_heads(kv2[:, d:], s_mem, vc_sc)
    a2 = attn_core(kc_sc, vc_sc, ca_wo_ref, ca_bo_ref)
    h2 = _layer_norm(h1 + a2, ln_g[1], ln_b[1])

    # ---- 3) position-wise FFN + residual + LN3 --------------------------------
    hid = jnp.maximum(jnp.dot(h2.astype(cdt), w1_ref[...],
                              preferred_element_type=jnp.float32) + b1_ref[...],
                      0.0)
    f = (jnp.dot(hid.astype(cdt), w2_ref[...],
                 preferred_element_type=jnp.float32) + b2_ref[...])
    h3 = _layer_norm(h2 + f, ln_g[2], ln_b[2])

    o_ref[...] = h3.reshape(blk, t, d).astype(o_ref.dtype)


# ---------------------------------- wrapper -------------------------------------

def decoder_block(x, memory, params, *, num_heads, block_b=1,
                  compute_dtype=jnp.bfloat16, out_dtype=None):
    B, T, D = x.shape
    Bm, S, Dm = memory.shape
    assert Bm == B and Dm == D
    H = params["w1"].shape[-1]
    assert D % num_heads == 0 and B % block_b == 0
    cdt = compute_dtype
    out_dtype = cdt if out_dtype is None else out_dtype
    hd = D // num_heads
    bn = block_b * num_heads

    aw, ab = params["attn_w"], params["attn_b"]   # (4,D,D) / (4,1,D)  [q,k,v,o]
    mw, mb = params["mattn_w"], params["mattn_b"]

    # Dense fused projection weights: full-width N on the MXU, no per-head form.
    sa_wqkv = jnp.concatenate([aw[0], aw[1], aw[2]], axis=-1).astype(cdt)      # (D,3D)
    sa_bqkv = jnp.concatenate([ab[0], ab[1], ab[2]], axis=-1).astype(jnp.float32)
    sa_wo = aw[3].astype(cdt)                                                  # (D,D)
    sa_bo = ab[3].astype(jnp.float32)
    ca_wq = mw[0].astype(cdt)                                                  # (D,D)
    ca_bq = mb[0].astype(jnp.float32)
    ca_wkv = jnp.concatenate([mw[1], mw[2]], axis=-1).astype(cdt)              # (D,2D)
    ca_bkv = jnp.concatenate([mb[1], mb[2]], axis=-1).astype(jnp.float32)
    ca_wo = mw[3].astype(cdt)
    ca_bo = mb[3].astype(jnp.float32)

    w1 = params["w1"].astype(cdt)
    b1 = params["b1"].astype(jnp.float32)
    w2 = params["w2"].astype(cdt)
    b2 = params["b2"].astype(jnp.float32)
    ln_g = params["ln_g"].astype(jnp.float32)
    ln_b = params["ln_b"].astype(jnp.float32)

    operands = (x.astype(cdt), memory.astype(cdt),
                sa_wqkv, sa_bqkv, sa_wo, sa_bo,
                ca_wq, ca_bq, ca_wkv, ca_bkv, ca_wo, ca_bo,
                w1, b1, w2, b2, ln_g, ln_b)

    grid = (B // block_b,)

    # ---- VMEM budget computed from actual sizes (not a fixed constant) --------
    def nbytes(a):
        return int(a.size) * a.dtype.itemsize

    weight_bytes = sum(nbytes(a) for a in operands[2:])
    io_block_bytes = ((block_b * T * D + block_b * S * D) * jnp.dtype(cdt).itemsize
                      + block_b * T * D * jnp.dtype(out_dtype).itemsize)
    scratch_bytes = ((3 * bn * T * hd + 2 * bn * S * hd + block_b * T * D)
                     * jnp.dtype(cdt).itemsize)
    try:
        phys_vmem = pltpu.get_tpu_info().vmem_capacity_bytes
    except Exception:
        phys_vmem = 64 << 20    # conservative (v7x per-TensorCore VMEM)
    # Everything carried by a BlockSpec is double-buffered by the pipeline.
    need = 2 * (weight_bytes + io_block_bytes) + scratch_bytes + (16 << 20)
    vmem_limit = int(min(max(need, 48 << 20), (phys_vmem * 3) // 4))

    # ---- advisory cost estimate for XLA's surrounding scheduling --------------
    flops = int(2 * B * T * (8 * D * D + 2 * D * H) + 4 * B * T * (T + S) * D)
    transcendentals = int(B * num_heads * T * (T + S)
                          + 2 * B * num_heads * T + 3 * B * T)
    bytes_accessed = int(sum(nbytes(a) for a in operands)
                         + B * T * D * jnp.dtype(out_dtype).itemsize)

    def act_spec(seq):
        return pl.BlockSpec((block_b, seq, D), lambda b: (b, 0, 0))

    def const_spec(a):
        n = a.ndim
        return pl.BlockSpec(a.shape, lambda b, _n=n: (0,) * _n)

    scratch_shapes = [
        pltpu.VMEM((bn, T, hd), cdt),        # Q heads (shared by both attentions)
        pltpu.VMEM((bn, T, hd), cdt),        # self-attn K heads
        pltpu.VMEM((bn, T, hd), cdt),        # self-attn V heads
        pltpu.VMEM((bn, S, hd), cdt),        # cross-attn K heads
        pltpu.VMEM((bn, S, hd), cdt),        # cross-attn V heads
        pltpu.VMEM((block_b * T, D), cdt),   # merged per-head attention output
    ]

    kernel = functools.partial(decoder_block_kernel, num_heads=num_heads)

    return pl.pallas_call(
        kernel,
        out_shape=jax.ShapeDtypeStruct((B, T, D), out_dtype),
        grid_spec=pltpu.PrefetchScalarGridSpec(
            num_scalar_prefetch=0,
            grid=grid,
            in_specs=[act_spec(T), act_spec(S)]
                     + [const_spec(a) for a in operands[2:]],
            out_specs=pl.BlockSpec((block_b, T, D), lambda b: (b, 0, 0)),
            scratch_shapes=scratch_shapes),
        compiler_params=pltpu.CompilerParams(
            dimension_semantics=("parallel",),
            vmem_limit_bytes=vmem_limit),
        cost_estimate=pl.CostEstimate(flops=flops,
                                      transcendentals=transcendentals,
                                      bytes_accessed=bytes_accessed),
    )(*operands)


# ----------------------------- pure-JAX reference -------------------------------

def decoder_block_ref(x, memory, params, *, num_heads):
    def ln(z, g, b):
        mu = z.mean(-1, keepdims=True)
        var = ((z - mu) ** 2).mean(-1, keepdims=True)
        return g * (z - mu) / jnp.sqrt(var + 1e-5) + b

    def mha(q_in, k_in, v_in, w, b):
        B, T, D = q_in.shape
        hd = D // num_heads
        q = q_in @ w[0] + b[0]
        k = k_in @ w[1] + b[1]
        v = v_in @ w[2] + b[2]
        S = k.shape[1]
        qh = q.reshape(B, T, num_heads, hd).transpose(0, 2, 1, 3)
        kh = k.reshape(B, S, num_heads, hd).transpose(0, 2, 1, 3)
        vh = v.reshape(B, S, num_heads, hd).transpose(0, 2, 1, 3)
        sc = jnp.einsum("bhqd,bhkd->bhqk", qh, kh) / (D ** 0.5)
        a = jax.nn.softmax(sc, axis=-1)
        o = jnp.einsum("bhqk,bhkd->bhqd", a, vh)
        o = o.transpose(0, 2, 1, 3).reshape(B, T, D)
        return o @ w[3] + b[3]

    ln_g, ln_b = params["ln_g"], params["ln_b"]
    x = ln(x + mha(x, x, x, params["attn_w"], params["attn_b"]), ln_g[0], ln_b[0])
    x = ln(x + mha(x, memory, memory, params["mattn_w"], params["mattn_b"]),
           ln_g[1], ln_b[1])
    h = jax.nn.relu(x @ params["w1"] + params["b1"])
    f = h @ params["w2"] + params["b2"]
    x = ln(x + f, ln_g[2], ln_b[2])
    return x


# -------------------------------- param init ------------------------------------

def init_params(key, dim, hidden_dim):
    ks = jax.random.split(key, 4)
    xavier_std = (2.0 / (dim + dim)) ** 0.5          # xavier_normal for attn Linears
    attn_w = xavier_std * jax.random.normal(ks[0], (4, dim, dim), jnp.float32)
    mattn_w = xavier_std * jax.random.normal(ks[1], (4, dim, dim), jnp.float32)
    attn_b = jnp.zeros((4, 1, dim), jnp.float32)     # nn.init.constant_(bias, 0.)
    mattn_b = jnp.zeros((4, 1, dim), jnp.float32)
    w1 = ((2.0 / dim) ** 0.5) * jax.random.normal(ks[2], (dim, hidden_dim), jnp.float32)
    w2 = ((2.0 / hidden_dim) ** 0.5) * jax.random.normal(ks[3], (hidden_dim, dim),
                                                         jnp.float32)
    b1 = jnp.zeros((1, hidden_dim), jnp.float32)
    b2 = jnp.zeros((1, dim), jnp.float32)
    ln_g = jnp.ones((3, 1, dim), jnp.float32)        # LayerNorm default init
    ln_b = jnp.zeros((3, 1, dim), jnp.float32)
    return dict(attn_w=attn_w, attn_b=attn_b, mattn_w=mattn_w, mattn_b=mattn_b,
                w1=w1, b1=b1, w2=w2, b2=b2, ln_g=ln_g, ln_b=ln_b)


# ----------------------------------- main ----------------------------------------

if __name__ == "__main__":
    B, T, D, H, NH = 2, 8, 32, 64, 8
    key = jax.random.PRNGKey(0)
    kx, km, kp = jax.random.split(key, 3)
    x = jax.random.normal(kx, (B, T, D), jnp.float32)
    memory = jax.random.normal(km, (B, T, D), jnp.float32)
    params = init_params(kp, D, H)

    # block_b=1 keeps 2 "parallel" grid steps for B=2 (both TCs busy on v7x).
    out = decoder_block(x, memory, params, num_heads=NH, block_b=1)
    out = jax.block_until_ready(out)
    assert out.shape == (B, T, D)

    # Reference evaluated on the same bf16-rounded matmul operands the kernel
    # consumes.  Remaining differences: bf16 rounding of intermediate matmul
    # operands and the bf16 output, f32 accumulation order, and the approximate
    # EUP reciprocal in the softmax -> tolerance set accordingly.
    def rt(a):
        return a.astype(jnp.bfloat16).astype(jnp.float32)

    params_r = dict(params)
    for k in ("attn_w", "mattn_w", "w1", "w2"):
        params_r[k] = rt(params[k])
    ref = decoder_block_ref(rt(x), rt(memory), params_r, num_heads=NH)

    out_f32 = out.astype(jnp.float32)
    err = jnp.max(jnp.abs(out_f32 - ref))
    assert jnp.allclose(out_f32, ref, atol=5e-2, rtol=5e-2), f"max abs err {err}"
    print("KERNEL_OK")
</pallas_src>

<mosaic_0001>
module attributes {stable_mosaic.version = 11 : i64} {
  func.func @decoder_block_kernel(%arg0: i32, %arg1: memref<1x8x32xbf16, #tpu.memory_space<vmem>>, %arg2: memref<1x8x32xbf16, #tpu.memory_space<vmem>>, %arg3: memref<32x96xbf16, #tpu.memory_space<vmem>>, %arg4: memref<1x96xf32, #tpu.memory_space<vmem>>, %arg5: memref<32x32xbf16, #tpu.memory_space<vmem>>, %arg6: memref<1x32xf32, #tpu.memory_space<vmem>>, %arg7: memref<32x32xbf16, #tpu.memory_space<vmem>>, %arg8: memref<1x32xf32, #tpu.memory_space<vmem>>, %arg9: memref<32x64xbf16, #tpu.memory_space<vmem>>, %arg10: memref<1x64xf32, #tpu.memory_space<vmem>>, %arg11: memref<32x32xbf16, #tpu.memory_space<vmem>>, %arg12: memref<1x32xf32, #tpu.memory_space<vmem>>, %arg13: memref<32x64xbf16, #tpu.memory_space<vmem>>, %arg14: memref<1x64xf32, #tpu.memory_space<vmem>>, %arg15: memref<64x32xbf16, #tpu.memory_space<vmem>>, %arg16: memref<1x32xf32, #tpu.memory_space<vmem>>, %arg17: memref<3x1x32xf32, #tpu.memory_space<vmem>>, %arg18: memref<3x1x32xf32, #tpu.memory_space<vmem>>, %arg19: memref<1x8x32xbf16, #tpu.memory_space<vmem>>, %arg20: memref<8x8x4xbf16, #tpu.memory_space<vmem>>, %arg21: memref<8x8x4xbf16, #tpu.memory_space<vmem>>, %arg22: memref<8x8x4xbf16, #tpu.memory_space<vmem>>, %arg23: memref<8x8x4xbf16, #tpu.memory_space<vmem>>, %arg24: memref<8x8x4xbf16, #tpu.memory_space<vmem>>, %arg25: memref<8x32xbf16, #tpu.memory_space<vmem>>) attributes {dimension_semantics = [#tpu.dimension_semantics<parallel>], iteration_bounds = array<i64: 2>, scalar_prefetch = 0 : i64, scratch_operands = 6 : i64, tpu.core_type = #tpu.core_type<tc>, window_params = [{transform_indices = @transform_0, window_bounds = array<i64: 1, 8, 32>}, {transform_indices = @transform_1, window_bounds = array<i64: 1, 8, 32>}, {pipeline_mode = #tpu.pipeline_mode<synchronous>, transform_indices = @transform_2, window_bounds = array<i64: 32, 96>}, {pipeline_mode = #tpu.pipeline_mode<synchronous>, transform_indices = @transform_3, window_bounds = array<i64: 1, 96>}, {pipeline_mode = #tpu.pipeline_mode<synchronous>, transform_indices = @transform_4, window_bounds = array<i64: 32, 32>}, {pipeline_mode = #tpu.pipeline_mode<synchronous>, transform_indices = @transform_5, window_bounds = array<i64: 1, 32>}, {pipeline_mode = #tpu.pipeline_mode<synchronous>, transform_indices = @transform_6, window_bounds = array<i64: 32, 32>}, {pipeline_mode = #tpu.pipeline_mode<synchronous>, transform_indices = @transform_7, window_bounds = array<i64: 1, 32>}, {pipeline_mode = #tpu.pipeline_mode<synchronous>, transform_indices = @transform_8, window_bounds = array<i64: 32, 64>}, {pipeline_mode = #tpu.pipeline_mode<synchronous>, transform_indices = @transform_9, window_bounds = array<i64: 1, 64>}, {pipeline_mode = #tpu.pipeline_mode<synchronous>, transform_indices = @transform_10, window_bounds = array<i64: 32, 32>}, {pipeline_mode = #tpu.pipeline_mode<synchronous>, transform_indices = @transform_11, window_bounds = array<i64: 1, 32>}, {pipeline_mode = #tpu.pipeline_mode<synchronous>, transform_indices = @transform_12, window_bounds = array<i64: 32, 64>}, {pipeline_mode = #tpu.pipeline_mode<synchronous>, transform_indices = @transform_13, window_bounds = array<i64: 1, 64>}, {pipeline_mode = #tpu.pipeline_mode<synchronous>, transform_indices = @transform_14, window_bounds = array<i64: 64, 32>}, {pipeline_mode = #tpu.pipeline_mode<synchronous>, transform_indices = @transform_15, window_bounds = array<i64: 1, 32>}, {pipeline_mode = #tpu.pipeline_mode<synchronous>, transform_indices = @transform_16, window_bounds = array<i64: 3, 1, 32>}, {pipeline_mode = #tpu.pipeline_mode<synchronous>, transform_indices = @transform_17, window_bounds = array<i64: 3, 1, 32>}, {transform_indices = @transform_18, window_bounds = array<i64: 1, 8, 32>}]} {
    %c0 = arith.constant 0 : index
    %c0_0 = arith.constant 0 : index
    %c0_1 = arith.constant 0 : index
    %0 = vector.load %arg17[%c0, %c0_0, %c0_1] : memref<3x1x32xf32, #tpu.memory_space<vmem>>, vector<3x1x32xf32>
    %c0_2 = arith.constant 0 : index
    %c0_3 = arith.constant 0 : index
    %c0_4 = arith.constant 0 : index
    %1 = vector.load %arg18[%c0_2, %c0_3, %c0_4] : memref<3x1x32xf32, #tpu.memory_space<vmem>>, vector<3x1x32xf32>
    %c0_5 = arith.constant 0 : index
    %c0_6 = arith.constant 0 : index
    %c0_7 = arith.constant 0 : index
    %2 = vector.load %arg1[%c0_5, %c0_6, %c0_7] : memref<1x8x32xbf16, #tpu.memory_space<vmem>>, vector<1x8x32xbf16>
    %3 = vector.shape_cast %2 : vector<1x8x32xbf16> to vector<8x32xbf16>
    %c0_8 = arith.constant 0 : index
    %c0_9 = arith.constant 0 : index
    %c0_10 = arith.constant 0 : index
    %4 = vector.load %arg2[%c0_8, %c0_9, %c0_10] : memref<1x8x32xbf16, #tpu.memory_space<vmem>>, vector<1x8x32xbf16>
    %5 = vector.shape_cast %4 : vector<1x8x32xbf16> to vector<8x32xbf16>
    %c0_11 = arith.constant 0 : index
    %c0_12 = arith.constant 0 : index
    %6 = vector.load %arg3[%c0_11, %c0_12] : memref<32x96xbf16, #tpu.memory_space<vmem>>, vector<32x96xbf16>
    %cst = arith.constant dense<0.000000e+00> : vector<8x96xf32>
    %7 = tpu.matmul %3, %6, %cst {dimension_numbers = #tpu.dot_dimension_numbers<[1], [0], [0], [1], [0, 0, 1, 1], [], []>} : vector<8x32xbf16>, vector<32x96xbf16>, vector<8x96xf32> -> vector<8x96xf32>
    %c0_13 = arith.constant 0 : index
    %c0_14 = arith.constant 0 : index
    %8 = vector.load %arg4[%c0_13, %c0_14] : memref<1x96xf32, #tpu.memory_space<vmem>>, vector<1x96xf32>
    %9 = vector.broadcast %8 : vector<1x96xf32> to vector<8x96xf32>
    %10 = arith.addf %7, %9 : vector<8x96xf32>
    %11 = vector.extract_strided_slice %10 {offsets = [0, 0], sizes = [8, 32], strides = [1, 1]} : vector<8x96xf32> to vector<8x32xf32>
    %cst_15 = arith.constant 0.176776692 : f32
    %12 = vector.broadcast %cst_15 : f32 to vector<8x32xf32>
    %13 = arith.mulf %11, %12 : vector<8x32xf32>
    %14 = arith.truncf %13 : vector<8x32xf32> to vector<8x32xbf16>
    %15 = vector.extract_strided_slice %14 {offsets = [0, 0], sizes = [8, 4], strides = [1, 1]} : vector<8x32xbf16> to vector<8x4xbf16>
    %c0_16 = arith.constant 0 : index
    %c0_17 = arith.constant 0 : index
    %c0_18 = arith.constant 0 : index
    %16 = vector.load %arg20[%c0_16, %c0_17, %c0_18] : memref<8x8x4xbf16, #tpu.memory_space<vmem>>, vector<1x8x4xbf16>
    %17 = vector.shape_cast %16 : vector<1x8x4xbf16> to vector<8x4xbf16>
    %18 = vector.shape_cast %15 : vector<8x4xbf16> to vector<1x8x4xbf16>
    tpu.vector_store %arg20[%c0_16, %c0_17, %c0_18], %18 {strides = array<i32>} : memref<8x8x4xbf16, #tpu.memory_space<vmem>>, vector<1x8x4xbf16>,
    %19 = vector.extract_strided_slice %14 {offsets = [0, 4], sizes = [8, 4], strides = [1, 1]} : vector<8x32xbf16> to vector<8x4xbf16>
    %c1 = arith.constant 1 : index
    %c0_19 = arith.constant 0 : index
    %c0_20 = arith.constant 0 : index
    %20 = vector.load %arg20[%c1, %c0_19, %c0_20] : memref<8x8x4xbf16, #tpu.memory_space<vmem>>, vector<1x8x4xbf16>
    %21 = vector.shape_cast %20 : vector<1x8x4xbf16> to vector<8x4xbf16>
    %22 = vector.shape_cast %19 : vector<8x4xbf16> to vector<1x8x4xbf16>
    tpu.vector_store %arg20[%c1, %c0_19, %c0_20], %22 {strides = array<i32>} : memref<8x8x4xbf16, #tpu.memory_space<vmem>>, vector<1x8x4xbf16>,
    %23 = vector.extract_strided_slice %14 {offsets = [0, 8], sizes = [8, 4], strides = [1, 1]} : vector<8x32xbf16> to vector<8x4xbf16>
    %c2 = arith.constant 2 : index
    %c0_21 = arith.constant 0 : index
    %c0_22 = arith.constant 0 : index
    %24 = vector.load %arg20[%c2, %c0_21, %c0_22] : memref<8x8x4xbf16, #tpu.memory_space<vmem>>, vector<1x8x4xbf16>
    %25 = vector.shape_cast %24 : vector<1x8x4xbf16> to vector<8x4xbf16>
    %26 = vector.shape_cast %23 : vector<8x4xbf16> to vector<1x8x4xbf16>
    tpu.vector_store %arg20[%c2, %c0_21, %c0_22], %26 {strides = array<i32>} : memref<8x8x4xbf16, #tpu.memory_space<vmem>>, vector<1x8x4xbf16>,
    %27 = vector.extract_strided_slice %14 {offsets = [0, 12], sizes = [8, 4], strides = [1, 1]} : vector<8x32xbf16> to vector<8x4xbf16>
    %c3 = arith.constant 3 : index
    %c0_23 = arith.constant 0 : index
    %c0_24 = arith.constant 0 : index
    %28 = vector.load %arg20[%c3, %c0_23, %c0_24] : memref<8x8x4xbf16, #tpu.memory_space<vmem>>, vector<1x8x4xbf16>
    %29 = vector.shape_cast %28 : vector<1x8x4xbf16> to vector<8x4xbf16>
    %30 = vector.shape_cast %27 : vector<8x4xbf16> to vector<1x8x4xbf16>
    tpu.vector_store %arg20[%c3, %c0_23, %c0_24], %30 {strides = array<i32>} : memref<8x8x4xbf16, #tpu.memory_space<vmem>>, vector<1x8x4xbf16>,
    %31 = vector.extract_strided_slice %14 {offsets = [0, 16], sizes = [8, 4], strides = [1, 1]} : vector<8x32xbf16> to vector<8x4xbf16>
    %c4 = arith.constant 4 : index
    %c0_25 = arith.constant 0 : index
    %c0_26 = arith.constant 0 : index
    %32 = vector.load %arg20[%c4, %c0_25, %c0_26] : memref<8x8x4xbf16, #tpu.memory_space<vmem>>, vector<1x8x4xbf16>
    %33 = vector.shape_cast %32 : vector<1x8x4xbf16> to vector<8x4xbf16>
    %34 = vector.shape_cast %31 : vector<8x4xbf16> to vector<1x8x4xbf16>
    tpu.vector_store %arg20[%c4, %c0_25, %c0_26], %34 {strides = array<i32>} : memref<8x8x4xbf16, #tpu.memory_space<vmem>>, vector<1x8x4xbf16>,
    %35 = vector.extract_strided_slice %14 {offsets = [0, 20], sizes = [8, 4], strides = [1, 1]} : vector<8x32xbf16> to vector<8x4xbf16>
    %c5 = arith.constant 5 : index
    %c0_27 = arith.constant 0 : index
    %c0_28 = arith.constant 0 : index
    %36 = vector.load %arg20[%c5, %c0_27, %c0_28] : memref<8x8x4xbf16, #tpu.memory_space<vmem>>, vector<1x8x4xbf16>
    %37 = vector.shape_cast %36 : vector<1x8x4xbf16> to vector<8x4xbf16>
    %38 = vector.shape_cast %35 : vector<8x4xbf16> to vector<1x8x4xbf16>
    tpu.vector_store %arg20[%c5, %c0_27, %c0_28], %38 {strides = array<i32>} : memref<8x8x4xbf16, #tpu.memory_space<vmem>>, vector<1x8x4xbf16>,
    %39 = vector.extract_strided_slice %14 {offsets = [0, 24], sizes = [8, 4], strides = [1, 1]} : vector<8x32xbf16> to vector<8x4xbf16>
    %c6 = arith.constant 6 : index
    %c0_29 = arith.constant 0 : index
    %c0_30 = arith.constant 0 : index
    %40 = vector.load %arg20[%c6, %c0_29, %c0_30] : memref<8x8x4xbf16, #tpu.memory_space<vmem>>, vector<1x8x4xbf16>
    %41 = vector.shape_cast %40 : vector<1x8x4xbf16> to vector<8x4xbf16>
    %42 = vector.shape_cast %39 : vector<8x4xbf16> to vector<1x8x4xbf16>
    tpu.vector_store %arg20[%c6, %c0_29, %c0_30], %42 {strides = array<i32>} : memref<8x8x4xbf16, #tpu.memory_space<vmem>>, vector<1x8x4xbf16>,
    %43 = vector.extract_strided_slice %14 {offsets = [0, 28], sizes = [8, 4], strides = [1, 1]} : vector<8x32xbf16> to vector<8x4xbf16>
    %c7 = arith.constant 7 : index
    %c0_31 = arith.constant 0 : index
    %c0_32 = arith.constant 0 : index
    %44 = vector.load %arg20[%c7, %c0_31, %c0_32] : memref<8x8x4xbf16, #tpu.memory_space<vmem>>, vector<1x8x4xbf16>
    %45 = vector.shape_cast %44 : vector<1x8x4xbf16> to vector<8x4xbf16>
    %46 = vector.shape_cast %43 : vector<8x4xbf16> to vector<1x8x4xbf16>
    tpu.vector_store %arg20[%c7, %c0_31, %c0_32], %46 {strides = array<i32>} : memref<8x8x4xbf16, #tpu.memory_space<vmem>>, vector<1x8x4xbf16>,
    %47 = vector.extract_strided_slice %10 {offsets = [0, 32], sizes = [8, 32], strides = [1, 1]} : vector<8x96xf32> to vector<8x32xf32>
    %48 = arith.truncf %47 : vector<8x32xf32> to vector<8x32xbf16>
    %49 = vector.extract_strided_slice %48 {offsets = [0, 0], sizes = [8, 4], strides = [1, 1]} : vector<8x32xbf16> to vector<8x4xbf16>
    %c0_33 = arith.constant 0 : index
    %c0_34 = arith.constant 0 : index
    %c0_35 = arith.constant 0 : index
    %50 = vector.load %arg21[%c0_33, %c0_34, %c0_35] : memref<8x8x4xbf16, #tpu.memory_space<vmem>>, vector<1x8x4xbf16>
    %51 = vector.shape_cast %50 : vector<1x8x4xbf16> to vector<8x4xbf16>
    %52 = vector.shape_cast %49 : vector<8x4xbf16> to vector<1x8x4xbf16>
    tpu.vector_store %arg21[%c0_33, %c0_34, %c0_35], %52 {strides = array<i32>} : memref<8x8x4xbf16, #tpu.memory_space<vmem>>, vector<1x8x4xbf16>,
    %53 = vector.extract_strided_slice %48 {offsets = [0, 4], sizes = [8, 4], strides = [1, 1]} : vector<8x32xbf16> to vector<8x4xbf16>
    %c1_36 = arith.constant 1 : index
    %c0_37 = arith.constant 0 : index
    %c0_38 = arith.constant 0 : index
    %54 = vector.load %arg21[%c1_36, %c0_37, %c0_38] : memref<8x8x4xbf16, #tpu.memory_space<vmem>>, vector<1x8x4xbf16>
    %55 = vector.shape_cast %54 : vector<1x8x4xbf16> to vector<8x4xbf16>
    %56 = vector.shape_cast %53 : vector<8x4xbf16> to vector<1x8x4xbf16>
    tpu.vector_store %arg21[%c1_36, %c0_37, %c0_38], %56 {strides = array<i32>} : memref<8x8x4xbf16, #tpu.memory_space<vmem>>, vector<1x8x4xbf16>,
    %57 = vector.extract_strided_slice %48 {offsets = [0, 8], sizes = [8, 4], strides = [1, 1]} : vector<8x32xbf16> to vector<8x4xbf16>
    %c2_39 = arith.constant 2 : index
    %c0_40 = arith.constant 0 : index
    %c0_41 = arith.constant 0 : index
    %58 = vector.load %arg21[%c2_39, %c0_40, %c0_41] : memref<8x8x4xbf16, #tpu.memory_space<vmem>>, vector<1x8x4xbf16>
    %59 = vector.shape_cast %58 : vector<1x8x4xbf16> to vector<8x4xbf16>
    %60 = vector.shape_cast %57 : vector<8x4xbf16> to vector<1x8x4xbf16>
    tpu.vector_store %arg21[%c2_39, %c0_40, %c0_41], %60 {strides = array<i32>} : memref<8x8x4xbf16, #tpu.memory_space<vmem>>, vector<1x8x4xbf16>,
    %61 = vector.extract_strided_slice %48 {offsets = [0, 12], sizes = [8, 4], strides = [1, 1]} : vector<8x32xbf16> to vector<8x4xbf16>
    %c3_42 = arith.constant 3 : index
    %c0_43 = arith.constant 0 : index
    %c0_44 = arith.constant 0 : index
    %62 = vector.load %arg21[%c3_42, %c0_43, %c0_44] : memref<8x8x4xbf16, #tpu.memory_space<vmem>>, vector<1x8x4xbf16>
    %63 = vector.shape_cast %62 : vector<1x8x4xbf16> to vector<8x4xbf16>
    %64 = vector.shape_cast %61 : vector<8x4xbf16> to vector<1x8x4xbf16>
    tpu.vector_store %arg21[%c3_42, %c0_43, %c0_44], %64 {strides = array<i32>} : memref<8x8x4xbf16, #tpu.memory_space<vmem>>, vector<1x8x4xbf16>,
    %65 = vector.extract_strided_slice %48 {offsets = [0, 16], sizes = [8, 4], strides = [1, 1]} : vector<8x32xbf16> to vector<8x4xbf16>
    %c4_45 = arith.constant 4 : index
    %c0_46 = arith.constant 0 : index
    %c0_47 = arith.constant 0 : index
    %66 = vector.load %arg21[%c4_45, %c0_46, %c0_47] : memref<8x8x4xbf16, #tpu.memory_space<vmem>>, vector<1x8x4xbf16>
    %67 = vector.shape_cast %66 : vector<1x8x4xbf16> to vector<8x4xbf16>
    %68 = vector.shape_cast %65 : vector<8x4xbf16> to vector<1x8x4xbf16>
    tpu.vector_store %arg21[%c4_45, %c0_46, %c0_47], %68 {strides = array<i32>} : memref<8x8x4xbf16, #tpu.memory_space<vmem>>, vector<1x8x4xbf16>,
    %69 = vector.extract_strided_slice %48 {offsets = [0, 20], sizes = [8, 4], strides = [1, 1]} : vector<8x32xbf16> to vector<8x4xbf16>
    %c5_48 = arith.constant 5 : index
    %c0_49 = arith.constant 0 : index
    %c0_50 = arith.constant 0 : index
    %70 = vector.load %arg21[%c5_48, %c0_49, %c0_50] : memref<8x8x4xbf16, #tpu.memory_space<vmem>>, vector<1x8x4xbf16>
    %71 = vector.shape_cast %70 : vector<1x8x4xbf16> to vector<8x4xbf16>
    %72 = vector.shape_cast %69 : vector<8x4xbf16> to vector<1x8x4xbf16>
    tpu.vector_store %arg21[%c5_48, %c0_49, %c0_50], %72 {strides = array<i32>} : memref<8x8x4xbf16, #tpu.memory_space<vmem>>, vector<1x8x4xbf16>,
    %73 = vector.extract_strided_slice %48 {offsets = [0, 24], sizes = [8, 4], strides = [1, 1]} : vector<8x32xbf16> to vector<8x4xbf16>
    %c6_51 = arith.constant 6 : index
    %c0_52 = arith.constant 0 : index
    %c0_53 = arith.constant 0 : index
    %74 = vector.load %arg21[%c6_51, %c0_52, %c0_53] : memref<8x8x4xbf16, #tpu.memory_space<vmem>>, vector<1x8x4xbf16>
    %75 = vector.shape_cast %74 : vector<1x8x4xbf16> to vector<8x4xbf16>
    %76 = vector.shape_cast %73 : vector<8x4xbf16> to vector<1x8x4xbf16>
    tpu.vector_store %arg21[%c6_51, %c0_52, %c0_53], %76 {strides = array<i32>} : memref<8x8x4xbf16, #tpu.memory_space<vmem>>, vector<1x8x4xbf16>,
    %77 = vector.extract_strided_slice %48 {offsets = [0, 28], sizes = [8, 4], strides = [1, 1]} : vector<8x32xbf16> to vector<8x4xbf16>
    %c7_54 = arith.constant 7 : index
    %c0_55 = arith.constant 0 : index
    %c0_56 = arith.constant 0 : index
    %78 = vector.load %arg21[%c7_54, %c0_55, %c0_56] : memref<8x8x4xbf16, #tpu.memory_space<vmem>>, vector<1x8x4xbf16>
    %79 = vector.shape_cast %78 : vector<1x8x4xbf16> to vector<8x4xbf16>
    %80 = vector.shape_cast %77 : vector<8x4xbf16> to vector<1x8x4xbf16>
    tpu.vector_store %arg21[%c7_54, %c0_55, %c0_56], %80 {strides = array<i32>} : memref<8x8x4xbf16, #tpu.memory_space<vmem>>, vector<1x8x4xbf16>,
    %81 = vector.extract_strided_slice %10 {offsets = [0, 64], sizes = [8, 32], strides = [1, 1]} : vector<8x96xf32> to vector<8x32xf32>
    %82 = arith.truncf %81 : vector<8x32xf32> to vector<8x32xbf16>
    %83 = vector.extract_strided_slice %82 {offsets = [0, 0], sizes = [8, 4], strides = [1, 1]} : vector<8x32xbf16> to vector<8x4xbf16>
    %c0_57 = arith.constant 0 : index
    %c0_58 = arith.constant 0 : index
    %c0_59 = arith.constant 0 : index
    %84 = vector.load %arg22[%c0_57, %c0_58, %c0_59] : memref<8x8x4xbf16, #tpu.memory_space<vmem>>, vector<1x8x4xbf16>
    %85 = vector.shape_cast %84 : vector<1x8x4xbf16> to vector<8x4xbf16>
    %86 = vector.shape_cast %83 : vector<8x4xbf16> to vector<1x8x4xbf16>
    tpu.vector_store %arg22[%c0_57, %c0_58, %c0_59], %86 {strides = array<i32>} : memref<8x8x4xbf16, #tpu.memory_space<vmem>>, vector<1x8x4xbf16>,
    %87 = vector.extract_strided_slice %82 {offsets = [0, 4], sizes = [8, 4], strides = [1, 1]} : vector<8x32xbf16> to vector<8x4xbf16>
    %c1_60 = arith.constant 1 : index
    %c0_61 = arith.constant 0 : index
    %c0_62 = arith.constant 0 : index
    %88 = vector.load %arg22[%c1_60, %c0_61, %c0_62] : memref<8x8x4xbf16, #tpu.memory_space<vmem>>, vector<1x8x4xbf16>
    %89 = vector.shape_cast %88 : vector<1x8x4xbf16> to vector<8x4xbf16>
    %90 = vector.shape_cast %87 : vector<8x4xbf16> to vector<1x8x4xbf16>
    tpu.vector_store %arg22[%c1_60, %c0_61, %c0_62], %90 {strides = array<i32>} : memref<8x8x4xbf16, #tpu.memory_space<vmem>>, vector<1x8x4xbf16>,
    %91 = vector.extract_strided_slice %82 {offsets = [0, 8], sizes = [8, 4], strides = [1, 1]} : vector<8x32xbf16> to vector<8x4xbf16>
    %c2_63 = arith.constant 2 : index
    %c0_64 = arith.constant 0 : index
    %c0_65 = arith.constant 0 : index
    %92 = vector.load %arg22[%c2_63, %c0_64, %c0_65] : memref<8x8x4xbf16, #tpu.memory_space<vmem>>, vector<1x8x4xbf16>
    %93 = vector.shape_cast %92 : vector<1x8x4xbf16> to vector<8x4xbf16>
    %94 = vector.shape_cast %91 : vector<8x4xbf16> to vector<1x8x4xbf16>
    tpu.vector_store %arg22[%c2_63, %c0_64, %c0_65], %94 {strides = array<i32>} : memref<8x8x4xbf16, #tpu.memory_space<vmem>>, vector<1x8x4xbf16>,
    %95 = vector.extract_strided_slice %82 {offsets = [0, 12], sizes = [8, 4], strides = [1, 1]} : vector<8x32xbf16> to vector<8x4xbf16>
    %c3_66 = arith.constant 3 : index
    %c0_67 = arith.constant 0 : index
    %c0_68 = arith.constant 0 : index
    %96 = vector.load %arg22[%c3_66, %c0_67, %c0_68] : memref<8x8x4xbf16, #tpu.memory_space<vmem>>, vector<1x8x4xbf16>
    %97 = vector.shape_cast %96 : vector<1x8x4xbf16> to vector<8x4xbf16>
    %98 = vector.shape_cast %95 : vector<8x4xbf16> to vector<1x8x4xbf16>
    tpu.vector_store %arg22[%c3_66, %c0_67, %c0_68], %98 {strides = array<i32>} : memref<8x8x4xbf16, #tpu.memory_space<vmem>>, vector<1x8x4xbf16>,
    %99 = vector.extract_strided_slice %82 {offsets = [0, 16], sizes = [8, 4], strides = [1, 1]} : vector<8x32xbf16> to vector<8x4xbf16>
    %c4_69 = arith.constant 4 : index
    %c0_70 = arith.constant 0 : index
    %c0_71 = arith.constant 0 : index
    %100 = vector.load %arg22[%c4_69, %c0_70, %c0_71] : memref<8x8x4xbf16, #tpu.memory_space<vmem>>, vector<1x8x4xbf16>
    %101 = vector.shape_cast %100 : vector<1x8x4xbf16> to vector<8x4xbf16>
    %102 = vector.shape_cast %99 : vector<8x4xbf16> to vector<1x8x4xbf16>
    tpu.vector_store %arg22[%c4_69, %c0_70, %c0_71], %102 {strides = array<i32>} : memref<8x8x4xbf16, #tpu.memory_space<vmem>>, vector<1x8x4xbf16>,
    %103 = vector.extract_strided_slice %82 {offsets = [0, 20], sizes = [8, 4], strides = [1, 1]} : vector<8x32xbf16> to vector<8x4xbf16>
    %c5_72 = arith.constant 5 : index
    %c0_73 = arith.constant 0 : index
    %c0_74 = arith.constant 0 : index
    %104 = vector.load %arg22[%c5_72, %c0_73, %c0_74] : memref<8x8x4xbf16, #tpu.memory_space<vmem>>, vector<1x8x4xbf16>
    %105 = vector.shape_cast %104 : vector<1x8x4xbf16> to vector<8x4xbf16>
    %106 = vector.shape_cast %103 : vector<8x4xbf16> to vector<1x8x4xbf16>
    tpu.vector_store %arg22[%c5_72, %c0_73, %c0_74], %106 {strides = array<i32>} : memref<8x8x4xbf16, #tpu.memory_space<vmem>>, vector<1x8x4xbf16>,
    %107 = vector.extract_strided_slice %82 {offsets = [0, 24], sizes = [8, 4], strides = [1, 1]} : vector<8x32xbf16> to vector<8x4xbf16>
    %c6_75 = arith.constant 6 : index
    %c0_76 = arith.constant 0 : index
    %c0_77 = arith.constant 0 : index
    %108 = vector.load %arg22[%c6_75, %c0_76, %c0_77] : memref<8x8x4xbf16, #tpu.memory_space<vmem>>, vector<1x8x4xbf16>
    %109 = vector.shape_cast %108 : vector<1x8x4xbf16> to vector<8x4xbf16>
    %110 = vector.shape_cast %107 : vector<8x4xbf16> to vector<1x8x4xbf16>
    tpu.vector_store %arg22[%c6_75, %c0_76, %c0_77], %110 {strides = array<i32>} : memref<8x8x4xbf16, #tpu.memory_space<vmem>>, vector<1x8x4xbf16>,
    %111 = vector.extract_strided_slice %82 {offsets = [0, 28], sizes = [8, 4], strides = [1, 1]} : vector<8x32xbf16> to vector<8x4xbf16>
    %c7_78 = arith.constant 7 : index
    %c0_79 = arith.constant 0 : index
    %c0_80 = arith.constant 0 : index
    %112 = vector.load %arg22[%c7_78, %c0_79, %c0_80] : memref<8x8x4xbf16, #tpu.memory_space<vmem>>, vector<1x8x4xbf16>
    %113 = vector.shape_cast %112 : vector<1x8x4xbf16> to vector<8x4xbf16>
    %114 = vector.shape_cast %111 : vector<8x4xbf16> to vector<1x8x4xbf16>
    tpu.vector_store %arg22[%c7_78, %c0_79, %c0_80], %114 {strides = array<i32>} : memref<8x8x4xbf16, #tpu.memory_space<vmem>>, vector<1x8x4xbf16>,
    %c0_81 = arith.constant 0 : index
    %c0_82 = arith.constant 0 : index
    %c0_83 = arith.constant 0 : index
    %115 = vector.load %arg20[%c0_81, %c0_82, %c0_83] : memref<8x8x4xbf16, #tpu.memory_space<vmem>>, vector<8x8x4xbf16>
    %c0_84 = arith.constant 0 : index
    %c0_85 = arith.constant 0 : index
    %c0_86 = arith.constant 0 : index
    %116 = vector.load %arg21[%c0_84, %c0_85, %c0_86] : memref<8x8x4xbf16, #tpu.memory_space<vmem>>, vector<8x8x4xbf16>
    %cst_87 = arith.constant dense<0.000000e+00> : vector<8x8x8xf32>
    %117 = tpu.matmul %115, %116, %cst_87 {dimension_numbers = #tpu.dot_dimension_numbers<[2], [2], [1], [1], [0, 0, 0, 1, 1, 1], [0], [0]>} : vector<8x8x4xbf16>, vector<8x8x4xbf16>, vector<8x8x8xf32> -> vector<8x8x8xf32>
    %cst_88 = arith.constant dense<0xFF800000> : vector<8x8xf32>
    %118 = vector.multi_reduction <maximumf>, %117, %cst_88 [2] : vector<8x8x8xf32> to vector<8x8xf32>
    %119 = vector.shape_cast %118 : vector<8x8xf32> to vector<8x8x1xf32>
    %120 = vector.broadcast %119 : vector<8x8x1xf32> to vector<8x8x8xf32>
    %121 = arith.subf %117, %120 : vector<8x8x8xf32>
    %122 = math.exp %121 : vector<8x8x8xf32>
    %cst_89 = arith.constant dense<0.000000e+00> : vector<8x8xf32>
    %123 = vector.multi_reduction <add>, %122, %cst_89 [2] : vector<8x8x8xf32> to vector<8x8xf32>
    %124 = vector.shape_cast %123 : vector<8x8xf32> to vector<8x8x1xf32>
    %125 = tpu.reciprocal %124 {approx = true} : vector<8x8x1xf32> -> vector<8x8x1xf32>
    %126 = vector.broadcast %125 : vector<8x8x1xf32> to vector<8x8x8xf32>
    %127 = arith.mulf %122, %126 : vector<8x8x8xf32>
    %128 = arith.truncf %127 : vector<8x8x8xf32> to vector<8x8x8xbf16>
    %c0_90 = arith.constant 0 : index
    %c0_91 = arith.constant 0 : index
    %c0_92 = arith.constant 0 : index
    %129 = vector.load %arg22[%c0_90, %c0_91, %c0_92] : memref<8x8x4xbf16, #tpu.memory_space<vmem>>, vector<8x8x4xbf16>
    %cst_93 = arith.constant dense<0.000000e+00> : vector<8x8x4xf32>
    %130 = tpu.matmul %128, %129, %cst_93 {dimension_numbers = #tpu.dot_dimension_numbers<[2], [1], [1], [2], [0, 0, 0, 1, 1, 2], [0], [0]>} : vector<8x8x8xbf16>, vector<8x8x4xbf16>, vector<8x8x4xf32> -> vector<8x8x4xf32>
    %131 = arith.truncf %130 : vector<8x8x4xf32> to vector<8x8x4xbf16>
    %132 = vector.extract_strided_slice %131 {offsets = [0, 0, 0], sizes = [1, 8, 4], strides = [1, 1, 1]} : vector<8x8x4xbf16> to vector<1x8x4xbf16>
    %133 = vector.shape_cast %132 : vector<1x8x4xbf16> to vector<8x4xbf16>
    %c0_94 = arith.constant 0 : index
    %c0_95 = arith.constant 0 : index
    %134 = vector.load %arg25[%c0_94, %c0_95] : memref<8x32xbf16, #tpu.memory_space<vmem>>, vector<8x4xbf16>
    tpu.vector_store %arg25[%c0_94, %c0_95], %133 {strides = array<i32>} : memref<8x32xbf16, #tpu.memory_space<vmem>>, vector<8x4xbf16>,
    %135 = vector.extract_strided_slice %131 {offsets = [1, 0, 0], sizes = [1, 8, 4], strides = [1, 1, 1]} : vector<8x8x4xbf16> to vector<1x8x4xbf16>
    %136 = vector.shape_cast %135 : vector<1x8x4xbf16> to vector<8x4xbf16>
    %c0_96 = arith.constant 0 : index
    %c4_97 = arith.constant 4 : index
    %137 = vector.load %arg25[%c0_96, %c4_97] : memref<8x32xbf16, #tpu.memory_space<vmem>>, vector<8x4xbf16>
    tpu.vector_store %arg25[%c0_96, %c4_97], %136 {strides = array<i32>} : memref<8x32xbf16, #tpu.memory_space<vmem>>, vector<8x4xbf16>,
    %138 = vector.extract_strided_slice %131 {offsets = [2, 0, 0], sizes = [1, 8, 4], strides = [1, 1, 1]} : vector<8x8x4xbf16> to vector<1x8x4xbf16>
    %139 = vector.shape_cast %138 : vector<1x8x4xbf16> to vector<8x4xbf16>
    %c0_98 = arith.constant 0 : index
    %c8 = arith.constant 8 : index
    %140 = vector.load %arg25[%c0_98, %c8] : memref<8x32xbf16, #tpu.memory_space<vmem>>, vector<8x4xbf16>
    tpu.vector_store %arg25[%c0_98, %c8], %139 {strides = array<i32>} : memref<8x32xbf16, #tpu.memory_space<vmem>>, vector<8x4xbf16>,
    %141 = vector.extract_strided_slice %131 {offsets = [3, 0, 0], sizes = [1, 8, 4], strides = [1, 1, 1]} : vector<8x8x4xbf16> to vector<1x8x4xbf16>
    %142 = vector.shape_cast %141 : vector<1x8x4xbf16> to vector<8x4xbf16>
    %c0_99 = arith.constant 0 : index
    %c12 = arith.constant 12 : index
    %143 = vector.load %arg25[%c0_99, %c12] : memref<8x32xbf16, #tpu.memory_space<vmem>>, vector<8x4xbf16>
    tpu.vector_store %arg25[%c0_99, %c12], %142 {strides = array<i32>} : memref<8x32xbf16, #tpu.memory_space<vmem>>, vector<8x4xbf16>,
    %144 = vector.extract_strided_slice %131 {offsets = [4, 0, 0], sizes = [1, 8, 4], strides = [1, 1, 1]} : vector<8x8x4xbf16> to vector<1x8x4xbf16>
    %145 = vector.shape_cast %144 : vector<1x8x4xbf16> to vector<8x4xbf16>
    %c0_100 = arith.constant 0 : index
    %c16 = arith.constant 16 : index
    %146 = vector.load %arg25[%c0_100, %c16] : memref<8x32xbf16, #tpu.memory_space<vmem>>, vector<8x4xbf16>
    tpu.vector_store %arg25[%c0_100, %c16], %145 {strides = array<i32>} : memref<8x32xbf16, #tpu.memory_space<vmem>>, vector<8x4xbf16>,
    %147 = vector.extract_strided_slice %131 {offsets = [5, 0, 0], sizes = [1, 8, 4], strides = [1, 1, 1]} : vector<8x8x4xbf16> to vector<1x8x4xbf16>
    %148 = vector.shape_cast %147 : vector<1x8x4xbf16> to vector<8x4xbf16>
    %c0_101 = arith.constant 0 : index
    %c20 = arith.constant 20 : index
    %149 = vector.load %arg25[%c0_101, %c20] : memref<8x32xbf16, #tpu.memory_space<vmem>>, vector<8x4xbf16>
    tpu.vector_store %arg25[%c0_101, %c20], %148 {strides = array<i32>} : memref<8x32xbf16, #tpu.memory_space<vmem>>, vector<8x4xbf16>,
    %150 = vector.extract_strided_slice %131 {offsets = [6, 0, 0], sizes = [1, 8, 4], strides = [1, 1, 1]} : vector<8x8x4xbf16> to vector<1x8x4xbf16>
    %151 = vector.shape_cast %150 : vector<1x8x4xbf16> to vector<8x4xbf16>
    %c0_102 = arith.constant 0 : index
    %c24 = arith.constant 24 : index
    %152 = vector.load %arg25[%c0_102, %c24] : memref<8x32xbf16, #tpu.memory_space<vmem>>, vector<8x4xbf16>
    tpu.vector_store %arg25[%c0_102, %c24], %151 {strides = array<i32>} : memref<8x32xbf16, #tpu.memory_space<vmem>>, vector<8x4xbf16>,
    %153 = vector.extract_strided_slice %131 {offsets = [7, 0, 0], sizes = [1, 8, 4], strides = [1, 1, 1]} : vector<8x8x4xbf16> to vector<1x8x4xbf16>
    %154 = vector.shape_cast %153 : vector<1x8x4xbf16> to vector<8x4xbf16>
    %c0_103 = arith.constant 0 : index
    %c28 = arith.constant 28 : index
    %155 = vector.load %arg25[%c0_103, %c28] : memref<8x32xbf16, #tpu.memory_space<vmem>>, vector<8x4xbf16>
    tpu.vector_store %arg25[%c0_103, %c28], %154 {strides = array<i32>} : memref<8x32xbf16, #tpu.memory_space<vmem>>, vector<8x4xbf16>,
    %c0_104 = arith.constant 0 : index
    %c0_105 = arith.constant 0 : index
    %156 = vector.load %arg25[%c0_104, %c0_105] : memref<8x32xbf16, #tpu.memory_space<vmem>>, vector<8x32xbf16>
    %c0_106 = arith.constant 0 : index
    %c0_107 = arith.constant 0 : index
    %157 = vector.load %arg5[%c0_106, %c0_107] : memref<32x32xbf16, #tpu.memory_space<vmem>>, vector<32x32xbf16>
    %cst_108 = arith.constant dense<0.000000e+00> : vector<8x32xf32>
    %158 = tpu.matmul %156, %157, %cst_108 {dimension_numbers = #tpu.dot_dimension_numbers<[1], [0], [0], [1], [0, 0, 1, 1], [], []>} : vector<8x32xbf16>, vector<32x32xbf16>, vector<8x32xf32> -> vector<8x32xf32>
    %c0_109 = arith.constant 0 : index
    %c0_110 = arith.constant 0 : index
    %159 = vector.load %arg6[%c0_109, %c0_110] : memref<1x32xf32, #tpu.memory_space<vmem>>, vector<1x32xf32>
    %160 = vector.broadcast %159 : vector<1x32xf32> to vector<8x32xf32>
    %161 = arith.addf %158, %160 : vector<8x32xf32>
    %162 = arith.extf %3 : vector<8x32xbf16> to vector<8x32xf32>
    %163 = arith.addf %162, %161 : vector<8x32xf32>
    %164 = vector.extract_strided_slice %0 {offsets = [0, 0, 0], sizes = [1, 1, 32], strides = [1, 1, 1]} : vector<3x1x32xf32> to vector<1x1x32xf32>
    %165 = vector.shape_cast %164 : vector<1x1x32xf32> to vector<1x32xf32>
    %166 = vector.extract_strided_slice %1 {offsets = [0, 0, 0], sizes = [1, 1, 32], strides = [1, 1, 1]} : vector<3x1x32xf32> to vector<1x1x32xf32>
    %167 = vector.shape_cast %166 : vector<1x1x32xf32> to vector<1x32xf32>
    %cst_111 = arith.constant dense<0.000000e+00> : vector<8xf32>
    %168 = vector.multi_reduction <add>, %163, %cst_111 [1] : vector<8x32xf32> to vector<8xf32>
    %169 = vector.shape_cast %168 : vector<8xf32> to vector<8x1xf32>
    %cst_112 = arith.constant 3.200000e+01 : f32
    %170 = vector.broadcast %cst_112 : f32 to vector<8x1xf32>
    %171 = arith.divf %169, %170 : vector<8x1xf32>
    %172 = vector.broadcast %171 : vector<8x1xf32> to vector<8x32xf32>
    %173 = arith.subf %163, %172 : vector<8x32xf32>
    %174 = arith.mulf %173, %173 : vector<8x32xf32>
    %cst_113 = arith.constant dense<0.000000e+00> : vector<8xf32>
    %175 = vector.multi_reduction <add>, %174, %cst_113 [1] : vector<8x32xf32> to vector<8xf32>
    %176 = vector.shape_cast %175 : vector<8xf32> to vector<8x1xf32>
    %cst_114 = arith.constant 3.200000e+01 : f32
    %177 = vector.broadcast %cst_114 : f32 to vector<8x1xf32>
    %178 = arith.divf %176, %177 : vector<8x1xf32>
    %179 = vector.broadcast %171 : vector<8x1xf32> to vector<8x32xf32>
    %180 = arith.subf %163, %179 : vector<8x32xf32>
    %181 = vector.broadcast %165 : vector<1x32xf32> to vector<8x32xf32>
    %182 = arith.mulf %181, %180 : vector<8x32xf32>
    %cst_115 = arith.constant 9.99999974E-6 : f32
    %183 = vector.broadcast %cst_115 : f32 to vector<8x1xf32>
    %184 = arith.addf %178, %183 : vector<8x1xf32>
    %185 = math.rsqrt %184 : vector<8x1xf32>
    %186 = vector.broadcast %185 : vector<8x1xf32> to vector<8x32xf32>
    %187 = arith.mulf %182, %186 : vector<8x32xf32>
    %188 = vector.broadcast %167 : vector<1x32xf32> to vector<8x32xf32>
    %189 = arith.addf %187, %188 : vector<8x32xf32>
    %190 = arith.truncf %189 : vector<8x32xf32> to vector<8x32xbf16>
    %c0_116 = arith.constant 0 : index
    %c0_117 = arith.constant 0 : index
    %191 = vector.load %arg7[%c0_116, %c0_117] : memref<32x32xbf16, #tpu.memory_space<vmem>>, vector<32x32xbf16>
    %cst_118 = arith.constant dense<0.000000e+00> : vector<8x32xf32>
    %192 = tpu.matmul %190, %191, %cst_118 {dimension_numbers = #tpu.dot_dimension_numbers<[1], [0], [0], [1], [0, 0, 1, 1], [], []>} : vector<8x32xbf16>, vector<32x32xbf16>, vector<8x32xf32> -> vector<8x32xf32>
    %c0_119 = arith.constant 0 : index
    %c0_120 = arith.constant 0 : index
    %193 = vector.load %arg8[%c0_119, %c0_120] : memref<1x32xf32, #tpu.memory_space<vmem>>, vector<1x32xf32>
    %194 = vector.broadcast %193 : vector<1x32xf32> to vector<8x32xf32>
    %195 = arith.addf %192, %194 : vector<8x32xf32>
    %c0_121 = arith.constant 0 : index
    %c0_122 = arith.constant 0 : index
    %196 = vector.load %arg9[%c0_121, %c0_122] : memref<32x64xbf16, #tpu.memory_space<vmem>>, vector<32x64xbf16>
    %cst_123 = arith.constant dense<0.000000e+00> : vector<8x64xf32>
    %197 = tpu.matmul %5, %196, %cst_123 {dimension_numbers = #tpu.dot_dimension_numbers<[1], [0], [0], [1], [0, 0, 1, 1], [], []>} : vector<8x32xbf16>, vector<32x64xbf16>, vector<8x64xf32> -> vector<8x64xf32>
    %c0_124 = arith.constant 0 : index
    %c0_125 = arith.constant 0 : index
    %198 = vector.load %arg10[%c0_124, %c0_125] : memref<1x64xf32, #tpu.memory_space<vmem>>, vector<1x64xf32>
    %199 = vector.broadcast %198 : vector<1x64xf32> to vector<8x64xf32>
    %200 = arith.addf %197, %199 : vector<8x64xf32>
    %cst_126 = arith.constant 0.176776692 : f32
    %201 = vector.broadcast %cst_126 : f32 to vector<8x32xf32>
    %202 = arith.mulf %195, %201 : vector<8x32xf32>
    %203 = arith.truncf %202 : vector<8x32xf32> to vector<8x32xbf16>
    %204 = vector.extract_strided_slice %203 {offsets = [0, 0], sizes = [8, 4], strides = [1, 1]} : vector<8x32xbf16> to vector<8x4xbf16>
    %c0_127 = arith.constant 0 : index
    %c0_128 = arith.constant 0 : index
    %c0_129 = arith.constant 0 : index
    %205 = vector.load %arg20[%c0_127, %c0_128, %c0_129] : memref<8x8x4xbf16, #tpu.memory_space<vmem>>, vector<1x8x4xbf16>
    %206 = vector.shape_cast %205 : vector<1x8x4xbf16> to vector<8x4xbf16>
    %207 = vector.shape_cast %204 : vector<8x4xbf16> to vector<1x8x4xbf16>
    tpu.vector_store %arg20[%c0_127, %c0_128, %c0_129], %207 {strides = array<i32>} : memref<8x8x4xbf16, #tpu.memory_space<vmem>>, vector<1x8x4xbf16>,
    %208 = vector.extract_strided_slice %203 {offsets = [0, 4], sizes = [8, 4], strides = [1, 1]} : vector<8x32xbf16> to vector<8x4xbf16>
    %c1_130 = arith.constant 1 : index
    %c0_131 = arith.constant 0 : index
    %c0_132 = arith.constant 0 : index
    %209 = vector.load %arg20[%c1_130, %c0_131, %c0_132] : memref<8x8x4xbf16, #tpu.memory_space<vmem>>, vector<1x8x4xbf16>
    %210 = vector.shape_cast %209 : vector<1x8x4xbf16> to vector<8x4xbf16>
    %211 = vector.shape_cast %208 : vector<8x4xbf16> to vector<1x8x4xbf16>
    tpu.vector_store %arg20[%c1_130, %c0_131, %c0_132], %211 {strides = array<i32>} : memref<8x8x4xbf16, #tpu.memory_space<vmem>>, vector<1x8x4xbf16>,
    %212 = vector.extract_strided_slice %203 {offsets = [0, 8], sizes = [8, 4], strides = [1, 1]} : vector<8x32xbf16> to vector<8x4xbf16>
    %c2_133 = arith.constant 2 : index
    %c0_134 = arith.constant 0 : index
    %c0_135 = arith.constant 0 : index
    %213 = vector.load %arg20[%c2_133, %c0_134, %c0_135] : memref<8x8x4xbf16, #tpu.memory_space<vmem>>, vector<1x8x4xbf16>
    %214 = vector.shape_cast %213 : vector<1x8x4xbf16> to vector<8x4xbf16>
    %215 = vector.shape_cast %212 : vector<8x4xbf16> to vector<1x8x4xbf16>
    tpu.vector_store %arg20[%c2_133, %c0_134, %c0_135], %215 {strides = array<i32>} : memref<8x8x4xbf16, #tpu.memory_space<vmem>>, vector<1x8x4xbf16>,
    %216 = vector.extract_strided_slice %203 {offsets = [0, 12], sizes = [8, 4], strides = [1, 1]} : vector<8x32xbf16> to vector<8x4xbf16>
    %c3_136 = arith.constant 3 : index
    %c0_137 = arith.constant 0 : index
    %c0_138 = arith.constant 0 : index
    %217 = vector.load %arg20[%c3_136, %c0_137, %c0_138] : memref<8x8x4xbf16, #tpu.memory_space<vmem>>, vector<1x8x4xbf16>
    %218 = vector.shape_cast %217 : vector<1x8x4xbf16> to vector<8x4xbf16>
    %219 = vector.shape_cast %216 : vector<8x4xbf16> to vector<1x8x4xbf16>
    tpu.vector_store %arg20[%c3_136, %c0_137, %c0_138], %219 {strides = array<i32>} : memref<8x8x4xbf16, #tpu.memory_space<vmem>>, vector<1x8x4xbf16>,
    %220 = vector.extract_strided_slice %203 {offsets = [0, 16], sizes = [8, 4], strides = [1, 1]} : vector<8x32xbf16> to vector<8x4xbf16>
    %c4_139 = arith.constant 4 : index
    %c0_140 = arith.constant 0 : index
    %c0_141 = arith.constant 0 : index
    %221 = vector.load %arg20[%c4_139, %c0_140, %c0_141] : memref<8x8x4xbf16, #tpu.memory_space<vmem>>, vector<1x8x4xbf16>
    %222 = vector.shape_cast %221 : vector<1x8x4xbf16> to vector<8x4xbf16>
    %223 = vector.shape_cast %220 : vector<8x4xbf16> to vector<1x8x4xbf16>
    tpu.vector_store %arg20[%c4_139, %c0_140, %c0_141], %223 {strides = array<i32>} : memref<8x8x4xbf16, #tpu.memory_space<vmem>>, vector<1x8x4xbf16>,
    %224 = vector.extract_strided_slice %203 {offsets = [0, 20], sizes = [8, 4], strides = [1, 1]} : vector<8x32xbf16> to vector<8x4xbf16>
    %c5_142 = arith.constant 5 : index
    %c0_143 = arith.constant 0 : index
    %c0_144 = arith.constant 0 : index
    %225 = vector.load %arg20[%c5_142, %c0_143, %c0_144] : memref<8x8x4xbf16, #tpu.memory_space<vmem>>, vector<1x8x4xbf16>
    %226 = vector.shape_cast %225 : vector<1x8x4xbf16> to vector<8x4xbf16>
    %227 = vector.shape_cast %224 : vector<8x4xbf16> to vector<1x8x4xbf16>
    tpu.vector_store %arg20[%c5_142, %c0_143, %c0_144], %227 {strides = array<i32>} : memref<8x8x4xbf16, #tpu.memory_space<vmem>>, vector<1x8x4xbf16>,
    %228 = vector.extract_strided_slice %203 {offsets = [0, 24], sizes = [8, 4], strides = [1, 1]} : vector<8x32xbf16> to vector<8x4xbf16>
    %c6_145 = arith.constant 6 : index
    %c0_146 = arith.constant 0 : index
    %c0_147 = arith.constant 0 : index
    %229 = vector.load %arg20[%c6_145, %c0_146, %c0_147] : memref<8x8x4xbf16, #tpu.memory_space<vmem>>, vector<1x8x4xbf16>
    %230 = vector.shape_cast %229 : vector<1x8x4xbf16> to vector<8x4xbf16>
    %231 = vector.shape_cast %228 : vector<8x4xbf16> to vector<1x8x4xbf16>
    tpu.vector_store %arg20[%c6_145, %c0_146, %c0_147], %231 {strides = array<i32>} : memref<8x8x4xbf16, #tpu.memory_space<vmem>>, vector<1x8x4xbf16>,
    %232 = vector.extract_strided_slice %203 {offsets = [0, 28], sizes = [8, 4], strides = [1, 1]} : vector<8x32xbf16> to vector<8x4xbf16>
    %c7_148 = arith.constant 7 : index
    %c0_149 = arith.constant 0 : index
    %c0_150 = arith.constant 0 : index
    %233 = vector.load %arg20[%c7_148, %c0_149, %c0_150] : memref<8x8x4xbf16, #tpu.memory_space<vmem>>, vector<1x8x4xbf16>
    %234 = vector.shape_cast %233 : vector<1x8x4xbf16> to vector<8x4xbf16>
    %235 = vector.shape_cast %232 : vector<8x4xbf16> to vector<1x8x4xbf16>
    tpu.vector_store %arg20[%c7_148, %c0_149, %c0_150], %235 {strides = array<i32>} : memref<8x8x4xbf16, #tpu.memory_space<vmem>>, vector<1x8x4xbf16>,
    %236 = vector.extract_strided_slice %200 {offsets = [0, 0], sizes = [8, 32], strides = [1, 1]} : vector<8x64xf32> to vector<8x32xf32>
    %237 = arith.truncf %236 : vector<8x32xf32> to vector<8x32xbf16>
    %238 = vector.extract_strided_slice %237 {offsets = [0, 0], sizes = [8, 4], strides = [1, 1]} : vector<8x32xbf16> to vector<8x4xbf16>
    %c0_151 = arith.constant 0 : index
    %c0_152 = arith.constant 0 : index
    %c0_153 = arith.constant 0 : index
    %239 = vector.load %arg23[%c0_151, %c0_152, %c0_153] : memref<8x8x4xbf16, #tpu.memory_space<vmem>>, vector<1x8x4xbf16>
    %240 = vector.shape_cast %239 : vector<1x8x4xbf16> to vector<8x4xbf16>
    %241 = vector.shape_cast %238 : vector<8x4xbf16> to vector<1x8x4xbf16>
    tpu.vector_store %arg23[%c0_151, %c0_152, %c0_153], %241 {strides = array<i32>} : memref<8x8x4xbf16, #tpu.memory_space<vmem>>, vector<1x8x4xbf16>,
    %242 = vector.extract_strided_slice %237 {offsets = [0, 4], sizes = [8, 4], strides = [1, 1]} : vector<8x32xbf16> to vector<8x4xbf16>
    %c1_154 = arith.constant 1 : index
    %c0_155 = arith.constant 0 : index
    %c0_156 = arith.constant 0 : index
    %243 = vector.load %arg23[%c1_154, %c0_155, %c0_156] : memref<8x8x4xbf16, #tpu.memory_space<vmem>>, vector<1x8x4xbf16>
    %244 = vector.shape_cast %243 : vector<1x8x4xbf16> to vector<8x4xbf16>
    %245 = vector.shape_cast %242 : vector<8x4xbf16> to vector<1x8x4xbf16>
    tpu.vector_store %arg23[%c1_154, %c0_155, %c0_156], %245 {strides = array<i32>} : memref<8x8x4xbf16, #tpu.memory_space<vmem>>, vector<1x8x4xbf16>,
    %246 = vector.extract_strided_slice %237 {offsets = [0, 8], sizes = [8, 4], strides = [1, 1]} : vector<8x32xbf16> to vector<8x4xbf16>
    %c2_157 = arith.constant 2 : index
    %c0_158 = arith.constant 0 : index
    %c0_159 = arith.constant 0 : index
    %247 = vector.load %arg23[%c2_157, %c0_158, %c0_159] : memref<8x8x4xbf16, #tpu.memory_space<vmem>>, vector<1x8x4xbf16>
    %248 = vector.shape_cast %247 : vector<1x8x4xbf16> to vector<8x4xbf16>
    %249 = vector.shape_cast %246 : vector<8x4xbf16> to vector<1x8x4xbf16>
    tpu.vector_store %arg23[%c2_157, %c0_158, %c0_159], %249 {strides = array<i32>} : memref<8x8x4xbf16, #tpu.memory_space<vmem>>, vector<1x8x4xbf16>,
    %250 = vector.extract_strided_slice %237 {offsets = [0, 12], sizes = [8, 4], strides = [1, 1]} : vector<8x32xbf16> to vector<8x4xbf16>
    %c3_160 = arith.constant 3 : index
    %c0_161 = arith.constant 0 : index
    %c0_162 = arith.constant 0 : index
    %251 = vector.load %arg23[%c3_160, %c0_161, %c0_162] : memref<8x8x4xbf16, #tpu.memory_space<vmem>>, vector<1x8x4xbf16>
    %252 = vector.shape_cast %251 : vector<1x8x4xbf16> to vector<8x4xbf16>
    %253 = vector.shape_cast %250 : vector<8x4xbf16> to vector<1x8x4xbf16>
    tpu.vector_store %arg23[%c3_160, %c0_161, %c0_162], %253 {strides = array<i32>} : memref<8x8x4xbf16, #tpu.memory_space<vmem>>, vector<1x8x4xbf16>,
    %254 = vector.extract_strided_slice %237 {offsets = [0, 16], sizes = [8, 4], strides = [1, 1]} : vector<8x32xbf16> to vector<8x4xbf16>
    %c4_163 = arith.constant 4 : index
    %c0_164 = arith.constant 0 : index
    %c0_165 = arith.constant 0 : index
    %255 = vector.load %arg23[%c4_163, %c0_164, %c0_165] : memref<8x8x4xbf16, #tpu.memory_space<vmem>>, vector<1x8x4xbf16>
    %256 = vector.shape_cast %255 : vector<1x8x4xbf16> to vector<8x4xbf16>
    %257 = vector.shape_cast %254 : vector<8x4xbf16> to vector<1x8x4xbf16>
    tpu.vector_store %arg23[%c4_163, %c0_164, %c0_165], %257 {strides = array<i32>} : memref<8x8x4xbf16, #tpu.memory_space<vmem>>, vector<1x8x4xbf16>,
    %258 = vector.extract_strided_slice %237 {offsets = [0, 20], sizes = [8, 4], strides = [1, 1]} : vector<8x32xbf16> to vector<8x4xbf16>
    %c5_166 = arith.constant 5 : index
    %c0_167 = arith.constant 0 : index
    %c0_168 = arith.constant 0 : index
    %259 = vector.load %arg23[%c5_166, %c0_167, %c0_168] : memref<8x8x4xbf16, #tpu.memory_space<vmem>>, vector<1x8x4xbf16>
    %260 = vector.shape_cast %259 : vector<1x8x4xbf16> to vector<8x4xbf16>
    %261 = vector.shape_cast %258 : vector<8x4xbf16> to vector<1x8x4xbf16>
    tpu.vector_store %arg23[%c5_166, %c0_167, %c0_168], %261 {strides = array<i32>} : memref<8x8x4xbf16, #tpu.memory_space<vmem>>, vector<1x8x4xbf16>,
    %262 = vector.extract_strided_slice %237 {offsets = [0, 24], sizes = [8, 4], strides = [1, 1]} : vector<8x32xbf16> to vector<8x4xbf16>
    %c6_169 = arith.constant 6 : index
    %c0_170 = arith.constant 0 : index
    %c0_171 = arith.constant 0 : index
    %263 = vector.load %arg23[%c6_169, %c0_170, %c0_171] : memref<8x8x4xbf16, #tpu.memory_space<vmem>>, vector<1x8x4xbf16>
    %264 = vector.shape_cast %263 : vector<1x8x4xbf16> to vector<8x4xbf16>
    %265 = vector.shape_cast %262 : vector<8x4xbf16> to vector<1x8x4xbf16>
    tpu.vector_store %arg23[%c6_169, %c0_170, %c0_171], %265 {strides = array<i32>} : memref<8x8x4xbf16, #tpu.memory_space<vmem>>, vector<1x8x4xbf16>,
    %266 = vector.extract_strided_slice %237 {offsets = [0, 28], sizes = [8, 4], strides = [1, 1]} : vector<8x32xbf16> to vector<8x4xbf16>
    %c7_172 = arith.constant 7 : index
    %c0_173 = arith.constant 0 : index
    %c0_174 = arith.constant 0 : index
    %267 = vector.load %arg23[%c7_172, %c0_173, %c0_174] : memref<8x8x4xbf16, #tpu.memory_space<vmem>>, vector<1x8x4xbf16>
    %268 = vector.shape_cast %267 : vector<1x8x4xbf16> to vector<8x4xbf16>
    %269 = vector.shape_cast %266 : vector<8x4xbf16> to vector<1x8x4xbf16>
    tpu.vector_store %arg23[%c7_172, %c0_173, %c0_174], %269 {strides = array<i32>} : memref<8x8x4xbf16, #tpu.memory_space<vmem>>, vector<1x8x4xbf16>,
    %270 = vector.extract_strided_slice %200 {offsets = [0, 32], sizes = [8, 32], strides = [1, 1]} : vector<8x64xf32> to vector<8x32xf32>
    %271 = arith.truncf %270 : vector<8x32xf32> to vector<8x32xbf16>
    %272 = vector.extract_strided_slice %271 {offsets = [0, 0], sizes = [8, 4], strides = [1, 1]} : vector<8x32xbf16> to vector<8x4xbf16>
    %c0_175 = arith.constant 0 : index
    %c0_176 = arith.constant 0 : index
    %c0_177 = arith.constant 0 : index
    %273 = vector.load %arg24[%c0_175, %c0_176, %c0_177] : memref<8x8x4xbf16, #tpu.memory_space<vmem>>, vector<1x8x4xbf16>
    %274 = vector.shape_cast %273 : vector<1x8x4xbf16> to vector<8x4xbf16>
    %275 = vector.shape_cast %272 : vector<8x4xbf16> to vector<1x8x4xbf16>
    tpu.vector_store %arg24[%c0_175, %c0_176, %c0_177], %275 {strides = array<i32>} : memref<8x8x4xbf16, #tpu.memory_space<vmem>>, vector<1x8x4xbf16>,
    %276 = vector.extract_strided_slice %271 {offsets = [0, 4], sizes = [8, 4], strides = [1, 1]} : vector<8x32xbf16> to vector<8x4xbf16>
    %c1_178 = arith.constant 1 : index
    %c0_179 = arith.constant 0 : index
    %c0_180 = arith.constant 0 : index
    %277 = vector.load %arg24[%c1_178, %c0_179, %c0_180] : memref<8x8x4xbf16, #tpu.memory_space<vmem>>, vector<1x8x4xbf16>
    %278 = vector.shape_cast %277 : vector<1x8x4xbf16> to vector<8x4xbf16>
    %279 = vector.shape_cast %276 : vector<8x4xbf16> to vector<1x8x4xbf16>
    tpu.vector_store %arg24[%c1_178, %c0_179, %c0_180], %279 {strides = array<i32>} : memref<8x8x4xbf16, #tpu.memory_space<vmem>>, vector<1x8x4xbf16>,
    %280 = vector.extract_strided_slice %271 {offsets = [0, 8], sizes = [8, 4], strides = [1, 1]} : vector<8x32xbf16> to vector<8x4xbf16>
    %c2_181 = arith.constant 2 : index
    %c0_182 = arith.constant 0 : index
    %c0_183 = arith.constant 0 : index
    %281 = vector.load %arg24[%c2_181, %c0_182, %c0_183] : memref<8x8x4xbf16, #tpu.memory_space<vmem>>, vector<1x8x4xbf16>
    %282 = vector.shape_cast %281 : vector<1x8x4xbf16> to vector<8x4xbf16>
    %283 = vector.shape_cast %280 : vector<8x4xbf16> to vector<1x8x4xbf16>
    tpu.vector_store %arg24[%c2_181, %c0_182, %c0_183], %283 {strides = array<i32>} : memref<8x8x4xbf16, #tpu.memory_space<vmem>>, vector<1x8x4xbf16>,
    %284 = vector.extract_strided_slice %271 {offsets = [0, 12], sizes = [8, 4], strides = [1, 1]} : vector<8x32xbf16> to vector<8x4xbf16>
    %c3_184 = arith.constant 3 : index
    %c0_185 = arith.constant 0 : index
    %c0_186 = arith.constant 0 : index
    %285 = vector.load %arg24[%c3_184, %c0_185, %c0_186] : memref<8x8x4xbf16, #tpu.memory_space<vmem>>, vector<1x8x4xbf16>
    %286 = vector.shape_cast %285 : vector<1x8x4xbf16> to vector<8x4xbf16>
    %287 = vector.shape_cast %284 : vector<8x4xbf16> to vector<1x8x4xbf16>
    tpu.vector_store %arg24[%c3_184, %c0_185, %c0_186], %287 {strides = array<i32>} : memref<8x8x4xbf16, #tpu.memory_space<vmem>>, vector<1x8x4xbf16>,
    %288 = vector.extract_strided_slice %271 {offsets = [0, 16], sizes = [8, 4], strides = [1, 1]} : vector<8x32xbf16> to vector<8x4xbf16>
    %c4_187 = arith.constant 4 : index
    %c0_188 = arith.constant 0 : index
    %c0_189 = arith.constant 0 : index
    %289 = vector.load %arg24[%c4_187, %c0_188, %c0_189] : memref<8x8x4xbf16, #tpu.memory_space<vmem>>, vector<1x8x4xbf16>
    %290 = vector.shape_cast %289 : vector<1x8x4xbf16> to vector<8x4xbf16>
    %291 = vector.shape_cast %288 : vector<8x4xbf16> to vector<1x8x4xbf16>
    tpu.vector_store %arg24[%c4_187, %c0_188, %c0_189], %291 {strides = array<i32>} : memref<8x8x4xbf16, #tpu.memory_space<vmem>>, vector<1x8x4xbf16>,
    %292 = vector.extract_strided_slice %271 {offsets = [0, 20], sizes = [8, 4], strides = [1, 1]} : vector<8x32xbf16> to vector<8x4xbf16>
    %c5_190 = arith.constant 5 : index
    %c0_191 = arith.constant 0 : index
    %c0_192 = arith.constant 0 : index
    %293 = vector.load %arg24[%c5_190, %c0_191, %c0_192] : memref<8x8x4xbf16, #tpu.memory_space<vmem>>, vector<1x8x4xbf16>
    %294 = vector.shape_cast %293 : vector<1x8x4xbf16> to vector<8x4xbf16>
    %295 = vector.shape_cast %292 : vector<8x4xbf16> to vector<1x8x4xbf16>
    tpu.vector_store %arg24[%c5_190, %c0_191, %c0_192], %295 {strides = array<i32>} : memref<8x8x4xbf16, #tpu.memory_space<vmem>>, vector<1x8x4xbf16>,
    %296 = vector.extract_strided_slice %271 {offsets = [0, 24], sizes = [8, 4], strides = [1, 1]} : vector<8x32xbf16> to vector<8x4xbf16>
    %c6_193 = arith.constant 6 : index
    %c0_194 = arith.constant 0 : index
    %c0_195 = arith.constant 0 : index
    %297 = vector.load %arg24[%c6_193, %c0_194, %c0_195] : memref<8x8x4xbf16, #tpu.memory_space<vmem>>, vector<1x8x4xbf16>
    %298 = vector.shape_cast %297 : vector<1x8x4xbf16> to vector<8x4xbf16>
    %299 = vector.shape_cast %296 : vector<8x4xbf16> to vector<1x8x4xbf16>
    tpu.vector_store %arg24[%c6_193, %c0_194, %c0_195], %299 {strides = array<i32>} : memref<8x8x4xbf16, #tpu.memory_space<vmem>>, vector<1x8x4xbf16>,
    %300 = vector.extract_strided_slice %271 {offsets = [0, 28], sizes = [8, 4], strides = [1, 1]} : vector<8x32xbf16> to vector<8x4xbf16>
    %c7_196 = arith.constant 7 : index
    %c0_197 = arith.constant 0 : index
    %c0_198 = arith.constant 0 : index
    %301 = vector.load %arg24[%c7_196, %c0_197, %c0_198] : memref<8x8x4xbf16, #tpu.memory_space<vmem>>, vector<1x8x4xbf16>
    %302 = vector.shape_cast %301 : vector<1x8x4xbf16> to vector<8x4xbf16>
    %303 = vector.shape_cast %300 : vector<8x4xbf16> to vector<1x8x4xbf16>
    tpu.vector_store %arg24[%c7_196, %c0_197, %c0_198], %303 {strides = array<i32>} : memref<8x8x4xbf16, #tpu.memory_space<vmem>>, vector<1x8x4xbf16>,
    %c0_199 = arith.constant 0 : index
    %c0_200 = arith.constant 0 : index
    %c0_201 = arith.constant 0 : index
    %304 = vector.load %arg20[%c0_199, %c0_200, %c0_201] : memref<8x8x4xbf16, #tpu.memory_space<vmem>>, vector<8x8x4xbf16>
    %c0_202 = arith.constant 0 : index
    %c0_203 = arith.constant 0 : index
    %c0_204 = arith.constant 0 : index
    %305 = vector.load %arg23[%c0_202, %c0_203, %c0_204] : memref<8x8x4xbf16, #tpu.memory_space<vmem>>, vector<8x8x4xbf16>
    %cst_205 = arith.constant dense<0.000000e+00> : vector<8x8x8xf32>
    %306 = tpu.matmul %304, %305, %cst_205 {dimension_numbers = #tpu.dot_dimension_numbers<[2], [2], [1], [1], [0, 0, 0, 1, 1, 1], [0], [0]>} : vector<8x8x4xbf16>, vector<8x8x4xbf16>, vector<8x8x8xf32> -> vector<8x8x8xf32>
    %cst_206 = arith.constant dense<0xFF800000> : vector<8x8xf32>
    %307 = vector.multi_reduction <maximumf>, %306, %cst_206 [2] : vector<8x8x8xf32> to vector<8x8xf32>
    %308 = vector.shape_cast %307 : vector<8x8xf32> to vector<8x8x1xf32>
    %309 = vector.broadcast %308 : vector<8x8x1xf32> to vector<8x8x8xf32>
    %310 = arith.subf %306, %309 : vector<8x8x8xf32>
    %311 = math.exp %310 : vector<8x8x8xf32>
    %cst_207 = arith.constant dense<0.000000e+00> : vector<8x8xf32>
    %312 = vector.multi_reduction <add>, %311, %cst_207 [2] : vector<8x8x8xf32> to vector<8x8xf32>
    %313 = vector.shape_cast %312 : vector<8x8xf32> to vector<8x8x1xf32>
    %314 = tpu.reciprocal %313 {approx = true} : vector<8x8x1xf32> -> vector<8x8x1xf32>
    %315 = vector.broadcast %314 : vector<8x8x1xf32> to vector<8x8x8xf32>
    %316 = arith.mulf %311, %315 : vector<8x8x8xf32>
    %317 = arith.truncf %316 : vector<8x8x8xf32> to vector<8x8x8xbf16>
    %c0_208 = arith.constant 0 : index
    %c0_209 = arith.constant 0 : index
    %c0_210 = arith.constant 0 : index
    %318 = vector.load %arg24[%c0_208, %c0_209, %c0_210] : memref<8x8x4xbf16, #tpu.memory_space<vmem>>, vector<8x8x4xbf16>
    %cst_211 = arith.constant dense<0.000000e+00> : vector<8x8x4xf32>
    %319 = tpu.matmul %317, %318, %cst_211 {dimension_numbers = #tpu.dot_dimension_numbers<[2], [1], [1], [2], [0, 0, 0, 1, 1, 2], [0], [0]>} : vector<8x8x8xbf16>, vector<8x8x4xbf16>, vector<8x8x4xf32> -> vector<8x8x4xf32>
    %320 = arith.truncf %319 : vector<8x8x4xf32> to vector<8x8x4xbf16>
    %321 = vector.extract_strided_slice %320 {offsets = [0, 0, 0], sizes = [1, 8, 4], strides = [1, 1, 1]} : vector<8x8x4xbf16> to vector<1x8x4xbf16>
    %322 = vector.shape_cast %321 : vector<1x8x4xbf16> to vector<8x4xbf16>
    %c0_212 = arith.constant 0 : index
    %c0_213 = arith.constant 0 : index
    %323 = vector.load %arg25[%c0_212, %c0_213] : memref<8x32xbf16, #tpu.memory_space<vmem>>, vector<8x4xbf16>
    tpu.vector_store %arg25[%c0_212, %c0_213], %322 {strides = array<i32>} : memref<8x32xbf16, #tpu.memory_space<vmem>>, vector<8x4xbf16>,
    %324 = vector.extract_strided_slice %320 {offsets = [1, 0, 0], sizes = [1, 8, 4], strides = [1, 1, 1]} : vector<8x8x4xbf16> to vector<1x8x4xbf16>
    %325 = vector.shape_cast %324 : vector<1x8x4xbf16> to vector<8x4xbf16>
    %c0_214 = arith.constant 0 : index
    %c4_215 = arith.constant 4 : index
    %326 = vector.load %arg25[%c0_214, %c4_215] : memref<8x32xbf16, #tpu.memory_space<vmem>>, vector<8x4xbf16>
    tpu.vector_store %arg25[%c0_214, %c4_215], %325 {strides = array<i32>} : memref<8x32xbf16, #tpu.memory_space<vmem>>, vector<8x4xbf16>,
    %327 = vector.extract_strided_slice %320 {offsets = [2, 0, 0], sizes = [1, 8, 4], strides = [1, 1, 1]} : vector<8x8x4xbf16> to vector<1x8x4xbf16>
    %328 = vector.shape_cast %327 : vector<1x8x4xbf16> to vector<8x4xbf16>
    %c0_216 = arith.constant 0 : index
    %c8_217 = arith.constant 8 : index
    %329 = vector.load %arg25[%c0_216, %c8_217] : memref<8x32xbf16, #tpu.memory_space<vmem>>, vector<8x4xbf16>
    tpu.vector_store %arg25[%c0_216, %c8_217], %328 {strides = array<i32>} : memref<8x32xbf16, #tpu.memory_space<vmem>>, vector<8x4xbf16>,
    %330 = vector.extract_strided_slice %320 {offsets = [3, 0, 0], sizes = [1, 8, 4], strides = [1, 1, 1]} : vector<8x8x4xbf16> to vector<1x8x4xbf16>
    %331 = vector.shape_cast %330 : vector<1x8x4xbf16> to vector<8x4xbf16>
    %c0_218 = arith.constant 0 : index
    %c12_219 = arith.constant 12 : index
    %332 = vector.load %arg25[%c0_218, %c12_219] : memref<8x32xbf16, #tpu.memory_space<vmem>>, vector<8x4xbf16>
    tpu.vector_store %arg25[%c0_218, %c12_219], %331 {strides = array<i32>} : memref<8x32xbf16, #tpu.memory_space<vmem>>, vector<8x4xbf16>,
    %333 = vector.extract_strided_slice %320 {offsets = [4, 0, 0], sizes = [1, 8, 4], strides = [1, 1, 1]} : vector<8x8x4xbf16> to vector<1x8x4xbf16>
    %334 = vector.shape_cast %333 : vector<1x8x4xbf16> to vector<8x4xbf16>
    %c0_220 = arith.constant 0 : index
    %c16_221 = arith.constant 16 : index
    %335 = vector.load %arg25[%c0_220, %c16_221] : memref<8x32xbf16, #tpu.memory_space<vmem>>, vector<8x4xbf16>
    tpu.vector_store %arg25[%c0_220, %c16_221], %334 {strides = array<i32>} : memref<8x32xbf16, #tpu.memory_space<vmem>>, vector<8x4xbf16>,
    %336 = vector.extract_strided_slice %320 {offsets = [5, 0, 0], sizes = [1, 8, 4], strides = [1, 1, 1]} : vector<8x8x4xbf16> to vector<1x8x4xbf16>
    %337 = vector.shape_cast %336 : vector<1x8x4xbf16> to vector<8x4xbf16>
    %c0_222 = arith.constant 0 : index
    %c20_223 = arith.constant 20 : index
    %338 = vector.load %arg25[%c0_222, %c20_223] : memref<8x32xbf16, #tpu.memory_space<vmem>>, vector<8x4xbf16>
    tpu.vector_store %arg25[%c0_222, %c20_223], %337 {strides = array<i32>} : memref<8x32xbf16, #tpu.memory_space<vmem>>, vector<8x4xbf16>,
    %339 = vector.extract_strided_slice %320 {offsets = [6, 0, 0], sizes = [1, 8, 4], strides = [1, 1, 1]} : vector<8x8x4xbf16> to vector<1x8x4xbf16>
    %340 = vector.shape_cast %339 : vector<1x8x4xbf16> to vector<8x4xbf16>
    %c0_224 = arith.constant 0 : index
    %c24_225 = arith.constant 24 : index
    %341 = vector.load %arg25[%c0_224, %c24_225] : memref<8x32xbf16, #tpu.memory_space<vmem>>, vector<8x4xbf16>
    tpu.vector_store %arg25[%c0_224, %c24_225], %340 {strides = array<i32>} : memref<8x32xbf16, #tpu.memory_space<vmem>>, vector<8x4xbf16>,
    %342 = vector.extract_strided_slice %320 {offsets = [7, 0, 0], sizes = [1, 8, 4], strides = [1, 1, 1]} : vector<8x8x4xbf16> to vector<1x8x4xbf16>
    %343 = vector.shape_cast %342 : vector<1x8x4xbf16> to vector<8x4xbf16>
    %c0_226 = arith.constant 0 : index
    %c28_227 = arith.constant 28 : index
    %344 = vector.load %arg25[%c0_226, %c28_227] : memref<8x32xbf16, #tpu.memory_space<vmem>>, vector<8x4xbf16>
    tpu.vector_store %arg25[%c0_226, %c28_227], %343 {strides = array<i32>} : memref<8x32xbf16, #tpu.memory_space<vmem>>, vector<8x4xbf16>,
    %c0_228 = arith.constant 0 : index
    %c0_229 = arith.constant 0 : index
    %345 = vector.load %arg25[%c0_228, %c0_229] : memref<8x32xbf16, #tpu.memory_space<vmem>>, vector<8x32xbf16>
    %c0_230 = arith.constant 0 : index
    %c0_231 = arith.constant 0 : index
    %346 = vector.load %arg11[%c0_230, %c0_231] : memref<32x32xbf16, #tpu.memory_space<vmem>>, vector<32x32xbf16>
    %cst_232 = arith.constant dense<0.000000e+00> : vector<8x32xf32>
    %347 = tpu.matmul %345, %346, %cst_232 {dimension_numbers = #tpu.dot_dimension_numbers<[1], [0], [0], [1], [0, 0, 1, 1], [], []>} : vector<8x32xbf16>, vector<32x32xbf16>, vector<8x32xf32> -> vector<8x32xf32>
    %c0_233 = arith.constant 0 : index
    %c0_234 = arith.constant 0 : index
    %348 = vector.load %arg12[%c0_233, %c0_234] : memref<1x32xf32, #tpu.memory_space<vmem>>, vector<1x32xf32>
    %349 = vector.broadcast %348 : vector<1x32xf32> to vector<8x32xf32>
    %350 = arith.addf %347, %349 : vector<8x32xf32>
    %351 = arith.addf %189, %350 : vector<8x32xf32>
    %352 = vector.extract_strided_slice %0 {offsets = [1, 0, 0], sizes = [1, 1, 32], strides = [1, 1, 1]} : vector<3x1x32xf32> to vector<1x1x32xf32>
    %353 = vector.shape_cast %352 : vector<1x1x32xf32> to vector<1x32xf32>
    %354 = vector.extract_strided_slice %1 {offsets = [1, 0, 0], sizes = [1, 1, 32], strides = [1, 1, 1]} : vector<3x1x32xf32> to vector<1x1x32xf32>
    %355 = vector.shape_cast %354 : vector<1x1x32xf32> to vector<1x32xf32>
    %cst_235 = arith.constant dense<0.000000e+00> : vector<8xf32>
    %356 = vector.multi_reduction <add>, %351, %cst_235 [1] : vector<8x32xf32> to vector<8xf32>
    %357 = vector.shape_cast %356 : vector<8xf32> to vector<8x1xf32>
    %cst_236 = arith.constant 3.200000e+01 : f32
    %358 = vector.broadcast %cst_236 : f32 to vector<8x1xf32>
    %359 = arith.divf %357, %358 : vector<8x1xf32>
    %360 = vector.broadcast %359 : vector<8x1xf32> to vector<8x32xf32>
    %361 = arith.subf %351, %360 : vector<8x32xf32>
    %362 = arith.mulf %361, %361 : vector<8x32xf32>
    %cst_237 = arith.constant dense<0.000000e+00> : vector<8xf32>
    %363 = vector.multi_reduction <add>, %362, %cst_237 [1] : vector<8x32xf32> to vector<8xf32>
    %364 = vector.shape_cast %363 : vector<8xf32> to vector<8x1xf32>
    %cst_238 = arith.constant 3.200000e+01 : f32
    %365 = vector.broadcast %cst_238 : f32 to vector<8x1xf32>
    %366 = arith.divf %364, %365 : vector<8x1xf32>
    %367 = vector.broadcast %359 : vector<8x1xf32> to vector<8x32xf32>
    %368 = arith.subf %351, %367 : vector<8x32xf32>
    %369 = vector.broadcast %353 : vector<1x32xf32> to vector<8x32xf32>
    %370 = arith.mulf %369, %368 : vector<8x32xf32>
    %cst_239 = arith.constant 9.99999974E-6 : f32
    %371 = vector.broadcast %cst_239 : f32 to vector<8x1xf32>
    %372 = arith.addf %366, %371 : vector<8x1xf32>
    %373 = math.rsqrt %372 : vector<8x1xf32>
    %374 = vector.broadcast %373 : vector<8x1xf32> to vector<8x32xf32>
    %375 = arith.mulf %370, %374 : vector<8x32xf32>
    %376 = vector.broadcast %355 : vector<1x32xf32> to vector<8x32xf32>
    %377 = arith.addf %375, %376 : vector<8x32xf32>
    %378 = arith.truncf %377 : vector<8x32xf32> to vector<8x32xbf16>
    %c0_240 = arith.constant 0 : index
    %c0_241 = arith.constant 0 : index
    %379 = vector.load %arg13[%c0_240, %c0_241] : memref<32x64xbf16, #tpu.memory_space<vmem>>, vector<32x64xbf16>
    %cst_242 = arith.constant dense<0.000000e+00> : vector<8x64xf32>
    %380 = tpu.matmul %378, %379, %cst_242 {dimension_numbers = #tpu.dot_dimension_numbers<[1], [0], [0], [1], [0, 0, 1, 1], [], []>} : vector<8x32xbf16>, vector<32x64xbf16>, vector<8x64xf32> -> vector<8x64xf32>
    %c0_243 = arith.constant 0 : index
    %c0_244 = arith.constant 0 : index
    %381 = vector.load %arg14[%c0_243, %c0_244] : memref<1x64xf32, #tpu.memory_space<vmem>>, vector<1x64xf32>
    %382 = vector.broadcast %381 : vector<1x64xf32> to vector<8x64xf32>
    %383 = arith.addf %380, %382 : vector<8x64xf32>
    %cst_245 = arith.constant 0.000000e+00 : f32
    %384 = vector.broadcast %cst_245 : f32 to vector<8x64xf32>
    %385 = arith.maximumf %383, %384 : vector<8x64xf32>
    %386 = arith.truncf %385 : vector<8x64xf32> to vector<8x64xbf16>
    %c0_246 = arith.constant 0 : index
    %c0_247 = arith.constant 0 : index
    %387 = vector.load %arg15[%c0_246, %c0_247] : memref<64x32xbf16, #tpu.memory_space<vmem>>, vector<64x32xbf16>
    %cst_248 = arith.constant dense<0.000000e+00> : vector<8x32xf32>
    %388 = tpu.matmul %386, %387, %cst_248 {dimension_numbers = #tpu.dot_dimension_numbers<[1], [0], [0], [1], [0, 0, 1, 1], [], []>} : vector<8x64xbf16>, vector<64x32xbf16>, vector<8x32xf32> -> vector<8x32xf32>
    %c0_249 = arith.constant 0 : index
    %c0_250 = arith.constant 0 : index
    %389 = vector.load %arg16[%c0_249, %c0_250] : memref<1x32xf32, #tpu.memory_space<vmem>>, vector<1x32xf32>
    %390 = vector.broadcast %389 : vector<1x32xf32> to vector<8x32xf32>
    %391 = arith.addf %388, %390 : vector<8x32xf32>
    %392 = arith.addf %377, %391 : vector<8x32xf32>
    %393 = vector.extract_strided_slice %0 {offsets = [2, 0, 0], sizes = [1, 1, 32], strides = [1, 1, 1]} : vector<3x1x32xf32> to vector<1x1x32xf32>
    %394 = vector.shape_cast %393 : vector<1x1x32xf32> to vector<1x32xf32>
    %395 = vector.extract_strided_slice %1 {offsets = [2, 0, 0], sizes = [1, 1, 32], strides = [1, 1, 1]} : vector<3x1x32xf32> to vector<1x1x32xf32>
    %396 = vector.shape_cast %395 : vector<1x1x32xf32> to vector<1x32xf32>
    %cst_251 = arith.constant dense<0.000000e+00> : vector<8xf32>
    %397 = vector.multi_reduction <add>, %392, %cst_251 [1] : vector<8x32xf32> to vector<8xf32>
    %398 = vector.shape_cast %397 : vector<8xf32> to vector<8x1xf32>
    %cst_252 = arith.constant 3.200000e+01 : f32
    %399 = vector.broadcast %cst_252 : f32 to vector<8x1xf32>
    %400 = arith.divf %398, %399 : vector<8x1xf32>
    %401 = vector.broadcast %400 : vector<8x1xf32> to vector<8x32xf32>
    %402 = arith.subf %392, %401 : vector<8x32xf32>
    %403 = arith.mulf %402, %402 : vector<8x32xf32>
    %cst_253 = arith.constant dense<0.000000e+00> : vector<8xf32>
    %404 = vector.multi_reduction <add>, %403, %cst_253 [1] : vector<8x32xf32> to vector<8xf32>
    %405 = vector.shape_cast %404 : vector<8xf32> to vector<8x1xf32>
    %cst_254 = arith.constant 3.200000e+01 : f32
    %406 = vector.broadcast %cst_254 : f32 to vector<8x1xf32>
    %407 = arith.divf %405, %406 : vector<8x1xf32>
    %408 = vector.broadcast %400 : vector<8x1xf32> to vector<8x32xf32>
    %409 = arith.subf %392, %408 : vector<8x32xf32>
    %410 = vector.broadcast %394 : vector<1x32xf32> to vector<8x32xf32>
    %411 = arith.mulf %410, %409 : vector<8x32xf32>
    %cst_255 = arith.constant 9.99999974E-6 : f32
    %412 = vector.broadcast %cst_255 : f32 to vector<8x1xf32>
    %413 = arith.addf %407, %412 : vector<8x1xf32>
    %414 = math.rsqrt %413 : vector<8x1xf32>
    %415 = vector.broadcast %414 : vector<8x1xf32> to vector<8x32xf32>
    %416 = arith.mulf %411, %415 : vector<8x32xf32>
    %417 = vector.broadcast %396 : vector<1x32xf32> to vector<8x32xf32>
    %418 = arith.addf %416, %417 : vector<8x32xf32>
    %419 = vector.shape_cast %418 : vector<8x32xf32> to vector<1x8x32xf32>
    %420 = arith.truncf %419 : vector<1x8x32xf32> to vector<1x8x32xbf16>
    %c0_256 = arith.constant 0 : index
    %c0_257 = arith.constant 0 : index
    %c0_258 = arith.constant 0 : index
    %421 = vector.load %arg19[%c0_256, %c0_257, %c0_258] : memref<1x8x32xbf16, #tpu.memory_space<vmem>>, vector<1x8x32xbf16>
    tpu.vector_store %arg19[%c0_256, %c0_257, %c0_258], %420 {strides = array<i32>} : memref<1x8x32xbf16, #tpu.memory_space<vmem>>, vector<1x8x32xbf16>,
    return
  }
  func.func @transform_0(%arg0: i32) -> (i32, i32, i32) {
    %c0_i32 = arith.constant 0 : i32
    %c0_i32_0 = arith.constant 0 : i32
    %c0_i32_1 = arith.constant 0 : i32
    return %arg0, %c0_i32, %c0_i32_0 : i32, i32, i32
  }
  func.func @transform_1(%arg0: i32) -> (i32, i32, i32) {
    %c0_i32 = arith.constant 0 : i32
    %c0_i32_0 = arith.constant 0 : i32
    %c0_i32_1 = arith.constant 0 : i32
    return %arg0, %c0_i32, %c0_i32_0 : i32, i32, i32
  }
  func.func @transform_2(%arg0: i32) -> (i32, i32) {
    %c0_i32 = arith.constant 0 : i32
    %c0_i32_0 = arith.constant 0 : i32
    %c0_i32_1 = arith.constant 0 : i32
    return %c0_i32, %c0_i32_0 : i32, i32
  }
  func.func @transform_3(%arg0: i32) -> (i32, i32) {
    %c0_i32 = arith.constant 0 : i32
    %c0_i32_0 = arith.constant 0 : i32
    %c0_i32_1 = arith.constant 0 : i32
    return %c0_i32, %c0_i32_0 : i32, i32
  }
  func.func @transform_4(%arg0: i32) -> (i32, i32) {
    %c0_i32 = arith.constant 0 : i32
    %c0_i32_0 = arith.constant 0 : i32
    %c0_i32_1 = arith.constant 0 : i32
    return %c0_i32, %c0_i32_0 : i32, i32
  }
  func.func @transform_5(%arg0: i32) -> (i32, i32) {
    %c0_i32 = arith.constant 0 : i32
    %c0_i32_0 = arith.constant 0 : i32
    %c0_i32_1 = arith.constant 0 : i32
    return %c0_i32, %c0_i32_0 : i32, i32
  }
  func.func @transform_6(%arg0: i32) -> (i32, i32) {
    %c0_i32 = arith.constant 0 : i32
    %c0_i32_0 = arith.constant 0 : i32
    %c0_i32_1 = arith.constant 0 : i32
    return %c0_i32, %c0_i32_0 : i32, i32
  }
  func.func @transform_7(%arg0: i32) -> (i32, i32) {
    %c0_i32 = arith.constant 0 : i32
    %c0_i32_0 = arith.constant 0 : i32
    %c0_i32_1 = arith.constant 0 : i32
    return %c0_i32, %c0_i32_0 : i32, i32
  }
  func.func @transform_8(%arg0: i32) -> (i32, i32) {
    %c0_i32 = arith.constant 0 : i32
    %c0_i32_0 = arith.constant 0 : i32
    %c0_i32_1 = arith.constant 0 : i32
    return %c0_i32, %c0_i32_0 : i32, i32
  }
  func.func @transform_9(%arg0: i32) -> (i32, i32) {
    %c0_i32 = arith.constant 0 : i32
    %c0_i32_0 = arith.constant 0 : i32
    %c0_i32_1 = arith.constant 0 : i32
    return %c0_i32, %c0_i32_0 : i32, i32
  }
  func.func @transform_10(%arg0: i32) -> (i32, i32) {
    %c0_i32 = arith.constant 0 : i32
    %c0_i32_0 = arith.constant 0 : i32
    %c0_i32_1 = arith.constant 0 : i32
    return %c0_i32, %c0_i32_0 : i32, i32
  }
  func.func @transform_11(%arg0: i32) -> (i32, i32) {
    %c0_i32 = arith.constant 0 : i32
    %c0_i32_0 = arith.constant 0 : i32
    %c0_i32_1 = arith.constant 0 : i32
    return %c0_i32, %c0_i32_0 : i32, i32
  }
  func.func @transform_12(%arg0: i32) -> (i32, i32) {
    %c0_i32 = arith.constant 0 : i32
    %c0_i32_0 = arith.constant 0 : i32
    %c0_i32_1 = arith.constant 0 : i32
    return %c0_i32, %c0_i32_0 : i32, i32
  }
  func.func @transform_13(%arg0: i32) -> (i32, i32) {
    %c0_i32 = arith.constant 0 : i32
    %c0_i32_0 = arith.constant 0 : i32
    %c0_i32_1 = arith.constant 0 : i32
    return %c0_i32, %c0_i32_0 : i32, i32
  }
  func.func @transform_14(%arg0: i32) -> (i32, i32) {
    %c0_i32 = arith.constant 0 : i32
    %c0_i32_0 = arith.constant 0 : i32
    %c0_i32_1 = arith.constant 0 : i32
    return %c0_i32, %c0_i32_0 : i32, i32
  }
  func.func @transform_15(%arg0: i32) -> (i32, i32) {
    %c0_i32 = arith.constant 0 : i32
    %c0_i32_0 = arith.constant 0 : i32
    %c0_i32_1 = arith.constant 0 : i32
    return %c0_i32, %c0_i32_0 : i32, i32
  }
  func.func @transform_16(%arg0: i32) -> (i32, i32, i32) {
    %c0_i32 = arith.constant 0 : i32
    %c0_i32_0 = arith.constant 0 : i32
    %c0_i32_1 = arith.constant 0 : i32
    %c0_i32_2 = arith.constant 0 : i32
    return %c0_i32, %c0_i32_0, %c0_i32_1 : i32, i32, i32
  }
  func.func @transform_17(%arg0: i32) -> (i32, i32, i32) {
    %c0_i32 = arith.constant 0 : i32
    %c0_i32_0 = arith.constant 0 : i32
    %c0_i32_1 = arith.constant 0 : i32
    %c0_i32_2 = arith.constant 0 : i32
    return %c0_i32, %c0_i32_0, %c0_i32_1 : i32, i32, i32
  }
  func.func @transform_18(%arg0: i32) -> (i32, i32, i32) {
    %c0_i32 = arith.constant 0 : i32
    %c0_i32_0 = arith.constant 0 : i32
    %c0_i32_1 = arith.constant 0 : i32
    return %arg0, %c0_i32, %c0_i32_0 : i32, i32, i32
  }
}

</mosaic_0001>

<llo_original>
// kernel: tpu_custom_call.1
$region0: #{tpu_custom_call.1}
  #allocation0 [shape = 'u32[]', space=smem, size = 0x4, offset = 0x4, fixed_abs, tag = 'smem constant byte address 0x4 - core index']
  #allocation1 [shape = 'u32[72,128]{1,0:T(1,128)}', space=vmem, size = 0x9000, scoped, tag = 'internal scratch']
  #allocation2 [shape = 'bf16[8,8,4]{2,1,0:T(8,128)(2,1)}', space=vmem, size = 0x4000, scoped, tag = 'scratch operand']
  #allocation3 [shape = 'bf16[8,8,4]{2,1,0:T(8,128)(2,1)}', space=vmem, size = 0x4000, scoped, tag = 'scratch operand']
  #allocation4 [shape = 'bf16[8,8,4]{2,1,0:T(8,128)(2,1)}', space=vmem, size = 0x4000, scoped, tag = 'scratch operand']
  #allocation5 [shape = 'bf16[8,8,4]{2,1,0:T(8,128)(2,1)}', space=vmem, size = 0x4000, scoped, tag = 'scratch operand']
  #allocation6 [shape = 'bf16[8,8,4]{2,1,0:T(8,128)(2,1)}', space=vmem, size = 0x4000, scoped, tag = 'scratch operand']
  #allocation7 [shape = 'bf16[8,32]{1,0:T(8,128)(2,1)}', space=vmem, size = 0x800, scoped, tag = 'scratch operand']
  %s0 = inlined_call_operand.hbm [shape: bf16[2,8,32], index: 0, kind: input, shape index: {}]
  %s1 = inlined_call_operand.hbm [shape: bf16[2,8,32], index: 1, kind: input, shape index: {}]
  %s2 = inlined_call_operand.vmem [shape: bf16[32,96], index: 2, kind: input, shape index: {}]
  %s3 = inlined_call_operand.hbm [shape: f32[1,96], index: 3, kind: input, shape index: {}]
  %s4 = inlined_call_operand.vmem [shape: bf16[32,32], index: 4, kind: input, shape index: {}]
  %s5 = inlined_call_operand.hbm [shape: f32[1,32], index: 5, kind: input, shape index: {}]
  %s6 = inlined_call_operand.vmem [shape: bf16[32,32], index: 6, kind: input, shape index: {}]
  %s7 = inlined_call_operand.hbm [shape: f32[1,32], index: 7, kind: input, shape index: {}]
  %s8 = inlined_call_operand.hbm [shape: bf16[32,64], index: 8, kind: input, shape index: {}]
  %s9 = inlined_call_operand.vmem [shape: f32[1,64], index: 9, kind: input, shape index: {}]
  %s10 = inlined_call_operand.hbm [shape: bf16[32,32], index: 10, kind: input, shape index: {}]
  %s11 = inlined_call_operand.vmem [shape: f32[1,32], index: 11, kind: input, shape index: {}]
  %s12 = inlined_call_operand.hbm [shape: bf16[32,64], index: 12, kind: input, shape index: {}]
  %s13 = inlined_call_operand.vmem [shape: f32[1,64], index: 13, kind: input, shape index: {}]
  %s14 = inlined_call_operand.vmem [shape: bf16[64,32], index: 14, kind: input, shape index: {}]
  %s15 = inlined_call_operand.vmem [shape: f32[1,32], index: 15, kind: input, shape index: {}]
  %s16 = inlined_call_operand.vmem [shape: f32[3,1,32], index: 16, kind: input, shape index: {}]
  %s17 = inlined_call_operand.vmem [shape: f32[3,1,32], index: 17, kind: input, shape index: {}]
  %s18 = inlined_call_operand.hbm [shape: bf16[2,8,32], index: 18, kind: output, shape index: {}]
  %s19 = sld [smem:[#allocation0]]
  $region137: #{tpu_custom_call.1} parent=0
    _
  %s21 = ssub.s32 1, %s19
  %s22 = scalar_select 0, %s21, %s19
  $region1: #{tpu_custom_call.1} parent=0
    #allocation8 [shape = 'u8[4096]{0}', space=vmem, size = 0x1000, scoped, tag = 'input window, operand 0']
    #allocation9 [shape = 's32[2]{0}', space=sflag, size = 0x8, scoped, tag = 'scoped memory for tpu_custom_call.1']
    #allocation10 [shape = 's32[2]{0}', space=sflag, size = 0x8, scoped, tag = 'scoped memory for tpu_custom_call.1']
    #allocation11 [shape = 'u8[4096]{0}', space=vmem, size = 0x1000, scoped, tag = 'input window, operand 1']
    #allocation12 [shape = 's32[2]{0}', space=sflag, size = 0x8, scoped, tag = 'scoped memory for tpu_custom_call.1']
    #allocation13 [shape = 'u8[512]{0}', space=vmem, size = 0x400, scoped, tag = 'input window, operand 3, single buffered']
    #allocation14 [shape = 'u8[512]{0}', space=vmem, size = 0x400, scoped, tag = 'input window, operand 5, single buffered']
    #allocation15 [shape = 's32[1]{0}', space=sflag, size = 0x4, scoped, tag = 'scoped memory for tpu_custom_call.1']
    #allocation16 [shape = 'u8[512]{0}', space=vmem, size = 0x400, scoped, tag = 'input window, operand 7, single buffered']
    #allocation17 [shape = 'u8[8192]{0}', space=vmem, size = 0x2000, scoped, tag = 'input window, operand 8, single buffered']
    #allocation18 [shape = 's32[1]{0}', space=sflag, size = 0x4, scoped, tag = 'scoped memory for tpu_custom_call.1']
    #allocation19 [shape = 'u8[8192]{0}', space=vmem, size = 0x2000, scoped, tag = 'input window, operand 10, single buffered']
    #allocation20 [shape = 'u8[8192]{0}', space=vmem, size = 0x2000, scoped, tag = 'input window, operand 12, single buffered']
    #allocation21 [shape = 's32[1]{0}', space=sflag, size = 0x4, scoped, tag = 'scoped memory for tpu_custom_call.1']
    #allocation22 [shape = 'u8[4096]{0}', space=vmem, size = 0x1000, scoped, tag = 'output window, operand 0']
    %23 = vsyncpa [#allocation9], 0
    %s24 = scalar_lea.sflag [#allocation9], 1
    %25 = vsyncpa %s24, 0
    %26 = vsyncpa [#allocation12], 0
    %s27 = scalar_lea.sflag [#allocation12], 1
    %28 = vsyncpa %s27, 0
    %29 = vsyncpa [#allocation15], 0
    %30 = vsyncpa [#allocation18], 0
    %31 = vsyncpa [#allocation21], 0
    %32 = vsyncpa [#allocation10], 0
    %s33 = scalar_lea.sflag [#allocation10], 1
    %34 = vsyncpa %s33, 0
    loop: start=0, step=1, limit=4
    $region2: #{tpu_custom_call.1} parent=1 // loop_pre_header
      _
    $region3: #{tpu_custom_call.1} parent=1 // loop_header
      %s36 = sphi 0, %s40
      %p37 = scmp.ge.s32.totalorder %s36, 4
      %s46 = sphi 0, %s48
      %s49 = sphi 0, %s46
      %s50 = sphi 0, %s49
      %s66 = sphi 0, %s50
      %s72 = sphi 0, %s74
      %s75 = sphi 0, %s72
      %s76 = sphi 0, %s75
      %s92 = sphi 0, %s76
      %s96 = sphi 0, %s96
      %s98 = sphi 0, %s96
      %s99 = sphi 0, %s98
      %s113 = sphi 0, %s99
      %s117 = sphi 0, %s117
      %s119 = sphi 0, %s117
      %s120 = sphi 0, %s119
      %s134 = sphi 0, %s120
      %s138 = sphi 0, %s138
      %s140 = sphi 0, %s138
      %s141 = sphi 0, %s140
      %s155 = sphi 0, %s141
      %s159 = sphi 0, %s159
      %s161 = sphi 0, %s159
      %s162 = sphi 0, %s161
      %s176 = sphi 0, %s162
      %s180 = sphi 0, %s180
      %s182 = sphi 0, %s180
      %s183 = sphi 0, %s182
      %s197 = sphi 0, %s183
      %s201 = sphi 0, %s201
      %s203 = sphi 0, %s201
      %s204 = sphi 0, %s203
      %s218 = sphi 0, %s204
      %s222 = sphi 0, %s222
      %s224 = sphi 0, %s222
      %s225 = sphi 0, %s224
      %s239 = sphi 0, %s225
      %s243 = sphi 0, %s243
      %s245 = sphi 0, %s243
      %s246 = sphi 0, %s245
      %s260 = sphi 0, %s246
      %s264 = sphi 0, %s264
      %s266 = sphi 0, %s264
      %s267 = sphi 0, %s266
      %s281 = sphi 0, %s267
      %s285 = sphi 0, %s285
      %s287 = sphi 0, %s285
      %s288 = sphi 0, %s287
      %s302 = sphi 0, %s288
      %s306 = sphi 0, %s306
      %s308 = sphi 0, %s306
      %s309 = sphi 0, %s308
      %s323 = sphi 0, %s309
      %s327 = sphi 0, %s327
      %s329 = sphi 0, %s327
      %s330 = sphi 0, %s329
      %s344 = sphi 0, %s330
      %s348 = sphi 0, %s348
      %s350 = sphi 0, %s348
      %s351 = sphi 0, %s350
      %s365 = sphi 0, %s351
      %s369 = sphi 0, %s369
      %s371 = sphi 0, %s369
      %s372 = sphi 0, %s371
      %s386 = sphi 0, %s372
      %s390 = sphi 0, %s390
      %s392 = sphi 0, %s390
      %s393 = sphi 0, %s392
      %s407 = sphi 0, %s393
      %s411 = sphi 0, %s411
      %s413 = sphi 0, %s411
      %s414 = sphi 0, %s413
      %s428 = sphi 0, %s414
      %s434 = sphi 0, %s436
      %s437 = sphi 0, %s434
      %s438 = sphi 0, %s437
      %s454 = sphi 0, %s438
    $region4: #{tpu_custom_call.1} parent=1 // loop_header_branch
      %39 = sbr.rel (%p37) target = $region8
    $region5: #{tpu_custom_call.1} parent=1 // loop_body
      %s41 = ssub.s32 %s36, 1
      %s42 = ssub.s32 %s36, 2
      %s43 = sadd.s32 %s36, 1
      %s44 = ssub.s32 %s36, %s43
      %p45 = scmp.eq.s32.totalorder %s44, 0
      %s47 = sadd.s32 %s46, 1
      %s48 = scalar_select %p45, %s46, %s47
      %p51 = pneg %p45
      %p52 = scmp.eq.s32.totalorder %s36, 1
      %p53 = por %p51, %p52
      %p54 = scmp.ne.s32.totalorder %s46, %s49
      %p55 = scmp.eq.s32.totalorder %s36, 0
      %p56 = por %p54, %p55
      %p57 = scmp.ne.s32.totalorder %s46, %s49
      %p58 = scmp.eq.s32.totalorder %s41, 1
      %p59 = por %p57, %p58
      %p60 = scmp.ne.s32.totalorder %s49, %s50
      %p61 = scmp.eq.s32.totalorder %s41, 0
      %p62 = por %p60, %p61
      %p63 = scmp.ne.s32.totalorder %s49, %s50
      %p64 = scmp.eq.s32.totalorder %s42, 1
      %p65 = por %p63, %p64
      %p67 = scmp.ne.s32.totalorder %s50, %s66
      %p68 = scmp.eq.s32.totalorder %s42, 0
      %p69 = por %p67, %p68
      %s70 = ssub.s32 %s36, %s43
      %p71 = scmp.eq.s32.totalorder %s70, 0
      %s73 = sadd.s32 %s72, 1
      %s74 = scalar_select %p71, %s72, %s73
      %p77 = pneg %p71
      %p78 = scmp.eq.s32.totalorder %s36, 1
      %p79 = por %p77, %p78
      %p80 = scmp.ne.s32.totalorder %s72, %s75
      %p81 = scmp.eq.s32.totalorder %s36, 0
      %p82 = por %p80, %p81
      %p83 = scmp.ne.s32.totalorder %s72, %s75
      %p84 = scmp.eq.s32.totalorder %s41, 1
      %p85 = por %p83, %p84
      %p86 = scmp.ne.s32.totalorder %s75, %s76
      %p87 = scmp.eq.s32.totalorder %s41, 0
      %p88 = por %p86, %p87
      %p89 = scmp.ne.s32.totalorder %s75, %s76
      %p90 = scmp.eq.s32.totalorder %s42, 1
      %p91 = por %p89, %p90
      %p93 = scmp.ne.s32.totalorder %s76, %s92
      %p94 = scmp.eq.s32.totalorder %s42, 0
      %p95 = por %p93, %p94
      %s97 = sadd.s32 %s96, 1
      %p100 = scmp.eq.s32.totalorder %s36, 1
      %p101 = scmp.ne.s32.totalorder %s96, %s98
      %p102 = scmp.eq.s32.totalorder %s36, 0
      %p103 = por %p101, %p102
      %p104 = scmp.ne.s32.totalorder %s96, %s98
      %p105 = scmp.eq.s32.totalorder %s41, 1
      %p106 = por %p104, %p105
      %p107 = scmp.ne.s32.totalorder %s98, %s99
      %p108 = scmp.eq.s32.totalorder %s41, 0
      %p109 = por %p107, %p108
      %p110 = scmp.ne.s32.totalorder %s98, %s99
      %p111 = scmp.eq.s32.totalorder %s42, 1
      %p112 = por %p110, %p111
      %p114 = scmp.ne.s32.totalorder %s99, %s113
      %p115 = scmp.eq.s32.totalorder %s42, 0
      %p116 = por %p114, %p115
      %s118 = sadd.s32 %s117, 1
      %p121 = scmp.eq.s32.totalorder %s36, 1
      %p122 = scmp.ne.s32.totalorder %s117, %s119
      %p123 = scmp.eq.s32.totalorder %s36, 0
      %p124 = por %p122, %p123
      %p125 = scmp.ne.s32.totalorder %s117, %s119
      %p126 = scmp.eq.s32.totalorder %s41, 1
      %p127 = por %p125, %p126
      %p128 = scmp.ne.s32.totalorder %s119, %s120
      %p129 = scmp.eq.s32.totalorder %s41, 0
      %p130 = por %p128, %p129
      %p131 = scmp.ne.s32.totalorder %s119, %s120
      %p132 = scmp.eq.s32.totalorder %s42, 1
      %p133 = por %p131, %p132
      %p135 = scmp.ne.s32.totalorder %s120, %s134
      %p136 = scmp.eq.s32.totalorder %s42, 0
      %p137 = por %p135, %p136
      %s139 = sadd.s32 %s138, 1
      %p142 = scmp.eq.s32.totalorder %s36, 1
      %p143 = scmp.ne.s32.totalorder %s138, %s140
      %p144 = scmp.eq.s32.totalorder %s36, 0
      %p145 = por %p143, %p144
      %p146 = scmp.ne.s32.totalorder %s138, %s140
      %p147 = scmp.eq.s32.totalorder %s41, 1
      %p148 = por %p146, %p147
      %p149 = scmp.ne.s32.totalorder %s140, %s141
      %p150 = scmp.eq.s32.totalorder %s41, 0
      %p151 = por %p149, %p150
      %p152 = scmp.ne.s32.totalorder %s140, %s141
      %p153 = scmp.eq.s32.totalorder %s42, 1
      %p154 = por %p152, %p153
      %p156 = scmp.ne.s32.totalorder %s141, %s155
      %p157 = scmp.eq.s32.totalorder %s42, 0
      %p158 = por %p156, %p157
      %s160 = sadd.s32 %s159, 1
      %p163 = scmp.eq.s32.totalorder %s36, 1
      %p164 = scmp.ne.s32.totalorder %s159, %s161
      %p165 = scmp.eq.s32.totalorder %s36, 0
      %p166 = por %p164, %p165
      %p167 = scmp.ne.s32.totalorder %s159, %s161
      %p168 = scmp.eq.s32.totalorder %s41, 1
      %p169 = por %p167, %p168
      %p170 = scmp.ne.s32.totalorder %s161, %s162
      %p171 = scmp.eq.s32.totalorder %s41, 0
      %p172 = por %p170, %p171
      %p173 = scmp.ne.s32.totalorder %s161, %s162
      %p174 = scmp.eq.s32.totalorder %s42, 1
      %p175 = por %p173, %p174
      %p177 = scmp.ne.s32.totalorder %s162, %s176
      %p178 = scmp.eq.s32.totalorder %s42, 0
      %p179 = por %p177, %p178
      %s181 = sadd.s32 %s180, 1
      %p184 = scmp.eq.s32.totalorder %s36, 1
      %p185 = scmp.ne.s32.totalorder %s180, %s182
      %p186 = scmp.eq.s32.totalorder %s36, 0
      %p187 = por %p185, %p186
      %p188 = scmp.ne.s32.totalorder %s180, %s182
      %p189 = scmp.eq.s32.totalorder %s41, 1
      %p190 = por %p188, %p189
      %p191 = scmp.ne.s32.totalorder %s182, %s183
      %p192 = scmp.eq.s32.totalorder %s41, 0
      %p193 = por %p191, %p192
      %p194 = scmp.ne.s32.totalorder %s182, %s183
      %p195 = scmp.eq.s32.totalorder %s42, 1
      %p196 = por %p194, %p195
      %p198 = scmp.ne.s32.totalorder %s183, %s197
      %p199 = scmp.eq.s32.totalorder %s42, 0
      %p200 = por %p198, %p199
      %s202 = sadd.s32 %s201, 1
      %p205 = scmp.eq.s32.totalorder %s36, 1
      %p206 = scmp.ne.s32.totalorder %s201, %s203
      %p207 = scmp.eq.s32.totalorder %s36, 0
      %p208 = por %p206, %p207
      %p209 = scmp.ne.s32.totalorder %s201, %s203
      %p210 = scmp.eq.s32.totalorder %s41, 1
      %p211 = por %p209, %p210
      %p212 = scmp.ne.s32.totalorder %s203, %s204
      %p213 = scmp.eq.s32.totalorder %s41, 0
      %p214 = por %p212, %p213
      %p215 = scmp.ne.s32.totalorder %s203, %s204
      %p216 = scmp.eq.s32.totalorder %s42, 1
      %p217 = por %p215, %p216
      %p219 = scmp.ne.s32.totalorder %s204, %s218
      %p220 = scmp.eq.s32.totalorder %s42, 0
      %p221 = por %p219, %p220
      %s223 = sadd.s32 %s222, 1
      %p226 = scmp.eq.s32.totalorder %s36, 1
      %p227 = scmp.ne.s32.totalorder %s222, %s224
      %p228 = scmp.eq.s32.totalorder %s36, 0
      %p229 = por %p227, %p228
      %p230 = scmp.ne.s32.totalorder %s222, %s224
      %p231 = scmp.eq.s32.totalorder %s41, 1
      %p232 = por %p230, %p231
      %p233 = scmp.ne.s32.totalorder %s224, %s225
      %p234 = scmp.eq.s32.totalorder %s41, 0
      %p235 = por %p233, %p234
      %p236 = scmp.ne.s32.totalorder %s224, %s225
      %p237 = scmp.eq.s32.totalorder %s42, 1
      %p238 = por %p236, %p237
      %p240 = scmp.ne.s32.totalorder %s225, %s239
      %p241 = scmp.eq.s32.totalorder %s42, 0
      %p242 = por %p240, %p241
      %s244 = sadd.s32 %s243, 1
      %p247 = scmp.eq.s32.totalorder %s36, 1
      %p248 = scmp.ne.s32.totalorder %s243, %s245
      %p249 = scmp.eq.s32.totalorder %s36, 0
      %p250 = por %p248, %p249
      %p251 = scmp.ne.s32.totalorder %s243, %s245
      %p252 = scmp.eq.s32.totalorder %s41, 1
      %p253 = por %p251, %p252
      %p254 = scmp.ne.s32.totalorder %s245, %s246
      %p255 = scmp.eq.s32.totalorder %s41, 0
      %p256 = por %p254, %p255
      %p257 = scmp.ne.s32.totalorder %s245, %s246
      %p258 = scmp.eq.s32.totalorder %s42, 1
      %p259 = por %p257, %p258
      %p261 = scmp.ne.s32.totalorder %s246, %s260
      %p262 = scmp.eq.s32.totalorder %s42, 0
      %p263 = por %p261, %p262
      %s265 = sadd.s32 %s264, 1
      %p268 = scmp.eq.s32.totalorder %s36, 1
      %p269 = scmp.ne.s32.totalorder %s264, %s266
      %p270 = scmp.eq.s32.totalorder %s36, 0
      %p271 = por %p269, %p270
      %p272 = scmp.ne.s32.totalorder %s264, %s266
      %p273 = scmp.eq.s32.totalorder %s41, 1
      %p274 = por %p272, %p273
      %p275 = scmp.ne.s32.totalorder %s266, %s267
      %p276 = scmp.eq.s32.totalorder %s41, 0
      %p277 = por %p275, %p276
      %p278 = scmp.ne.s32.totalorder %s266, %s267
      %p279 = scmp.eq.s32.totalorder %s42, 1
      %p280 = por %p278, %p279
      %p282 = scmp.ne.s32.totalorder %s267, %s281
      %p283 = scmp.eq.s32.totalorder %s42, 0
      %p284 = por %p282, %p283
      %s286 = sadd.s32 %s285, 1
      %p289 = scmp.eq.s32.totalorder %s36, 1
      %p290 = scmp.ne.s32.totalorder %s285, %s287
      %p291 = scmp.eq.s32.totalorder %s36, 0
      %p292 = por %p290, %p291
      %p293 = scmp.ne.s32.totalorder %s285, %s287
      %p294 = scmp.eq.s32.totalorder %s41, 1
      %p295 = por %p293, %p294
      %p296 = scmp.ne.s32.totalorder %s287, %s288
      %p297 = scmp.eq.s32.totalorder %s41, 0
      %p298 = por %p296, %p297
      %p299 = scmp.ne.s32.totalorder %s287, %s288
      %p300 = scmp.eq.s32.totalorder %s42, 1
      %p301 = por %p299, %p300
      %p303 = scmp.ne.s32.totalorder %s288, %s302
      %p304 = scmp.eq.s32.totalorder %s42, 0
      %p305 = por %p303, %p304
      %s307 = sadd.s32 %s306, 1
      %p310 = scmp.eq.s32.totalorder %s36, 1
      %p311 = scmp.ne.s32.totalorder %s306, %s308
      %p312 = scmp.eq.s32.totalorder %s36, 0
      %p313 = por %p311, %p312
      %p314 = scmp.ne.s32.totalorder %s306, %s308
      %p315 = scmp.eq.s32.totalorder %s41, 1
      %p316 = por %p314, %p315
      %p317 = scmp.ne.s32.totalorder %s308, %s309
      %p318 = scmp.eq.s32.totalorder %s41, 0
      %p319 = por %p317, %p318
      %p320 = scmp.ne.s32.totalorder %s308, %s309
      %p321 = scmp.eq.s32.totalorder %s42, 1
      %p322 = por %p320, %p321
      %p324 = scmp.ne.s32.totalorder %s309, %s323
      %p325 = scmp.eq.s32.totalorder %s42, 0
      %p326 = por %p324, %p325
      %s328 = sadd.s32 %s327, 1
      %p331 = scmp.eq.s32.totalorder %s36, 1
      %p332 = scmp.ne.s32.totalorder %s327, %s329
      %p333 = scmp.eq.s32.totalorder %s36, 0
      %p334 = por %p332, %p333
      %p335 = scmp.ne.s32.totalorder %s327, %s329
      %p336 = scmp.eq.s32.totalorder %s41, 1
      %p337 = por %p335, %p336
      %p338 = scmp.ne.s32.totalorder %s329, %s330
      %p339 = scmp.eq.s32.totalorder %s41, 0
      %p340 = por %p338, %p339
      %p341 = scmp.ne.s32.totalorder %s329, %s330
      %p342 = scmp.eq.s32.totalorder %s42, 1
      %p343 = por %p341, %p342
      %p345 = scmp.ne.s32.totalorder %s330, %s344
      %p346 = scmp.eq.s32.totalorder %s42, 0
      %p347 = por %p345, %p346
      %s349 = sadd.s32 %s348, 1
      %p352 = scmp.eq.s32.totalorder %s36, 1
      %p353 = scmp.ne.s32.totalorder %s348, %s350
      %p354 = scmp.eq.s32.totalorder %s36, 0
      %p355 = por %p353, %p354
      %p356 = scmp.ne.s32.totalorder %s348, %s350
      %p357 = scmp.eq.s32.totalorder %s41, 1
      %p358 = por %p356, %p357
      %p359 = scmp.ne.s32.totalorder %s350, %s351
      %p360 = scmp.eq.s32.totalorder %s41, 0
      %p361 = por %p359, %p360
      %p362 = scmp.ne.s32.totalorder %s350, %s351
      %p363 = scmp.eq.s32.totalorder %s42, 1
      %p364 = por %p362, %p363
      %p366 = scmp.ne.s32.totalorder %s351, %s365
      %p367 = scmp.eq.s32.totalorder %s42, 0
      %p368 = por %p366, %p367
      %s370 = sadd.s32 %s369, 1
      %p373 = scmp.eq.s32.totalorder %s36, 1
      %p374 = scmp.ne.s32.totalorder %s369, %s371
      %p375 = scmp.eq.s32.totalorder %s36, 0
      %p376 = por %p374, %p375
      %p377 = scmp.ne.s32.totalorder %s369, %s371
      %p378 = scmp.eq.s32.totalorder %s41, 1
      %p379 = por %p377, %p378
      %p380 = scmp.ne.s32.totalorder %s371, %s372
      %p381 = scmp.eq.s32.totalorder %s41, 0
      %p382 = por %p380, %p381
      %p383 = scmp.ne.s32.totalorder %s371, %s372
      %p384 = scmp.eq.s32.totalorder %s42, 1
      %p385 = por %p383, %p384
      %p387 = scmp.ne.s32.totalorder %s372, %s386
      %p388 = scmp.eq.s32.totalorder %s42, 0
      %p389 = por %p387, %p388
      %s391 = sadd.s32 %s390, 1
      %p394 = scmp.eq.s32.totalorder %s36, 1
      %p395 = scmp.ne.s32.totalorder %s390, %s392
      %p396 = scmp.eq.s32.totalorder %s36, 0
      %p397 = por %p395, %p396
      %p398 = scmp.ne.s32.totalorder %s390, %s392
      %p399 = scmp.eq.s32.totalorder %s41, 1
      %p400 = por %p398, %p399
      %p401 = scmp.ne.s32.totalorder %s392, %s393
      %p402 = scmp.eq.s32.totalorder %s41, 0
      %p403 = por %p401, %p402
      %p404 = scmp.ne.s32.totalorder %s392, %s393
      %p405 = scmp.eq.s32.totalorder %s42, 1
      %p406 = por %p404, %p405
      %p408 = scmp.ne.s32.totalorder %s393, %s407
      %p409 = scmp.eq.s32.totalorder %s42, 0
      %p410 = por %p408, %p409
      %s412 = sadd.s32 %s411, 1
      %p415 = scmp.eq.s32.totalorder %s36, 1
      %p416 = scmp.ne.s32.totalorder %s411, %s413
      %p417 = scmp.eq.s32.totalorder %s36, 0
      %p418 = por %p416, %p417
      %p419 = scmp.ne.s32.totalorder %s411, %s413
      %p420 = scmp.eq.s32.totalorder %s41, 1
      %p421 = por %p419, %p420
      %p422 = scmp.ne.s32.totalorder %s413, %s414
      %p423 = scmp.eq.s32.totalorder %s41, 0
      %p424 = por %p422, %p423
      %p425 = scmp.ne.s32.totalorder %s413, %s414
      %p426 = scmp.eq.s32.totalorder %s42, 1
      %p427 = por %p425, %p426
      %p429 = scmp.ne.s32.totalorder %s414, %s428
      %p430 = scmp.eq.s32.totalorder %s42, 0
      %p431 = por %p429, %p430
      %s432 = ssub.s32 %s36, %s43
      %p433 = scmp.eq.s32.totalorder %s432, 0
      %s435 = sadd.s32 %s434, 1
      %s436 = scalar_select %p433, %s434, %s435
      %p439 = pneg %p433
      %p440 = scmp.eq.s32.totalorder %s36, 1
      %p441 = por %p439, %p440
      %p442 = scmp.ne.s32.totalorder %s434, %s437
      %p443 = scmp.eq.s32.totalorder %s36, 0
      %p444 = por %p442, %p443
      %p445 = scmp.ne.s32.totalorder %s434, %s437
      %p446 = scmp.eq.s32.totalorder %s41, 1
      %p447 = por %p445, %p446
      %p448 = scmp.ne.s32.totalorder %s437, %s438
      %p449 = scmp.eq.s32.totalorder %s41, 0
      %p450 = por %p448, %p449
      %p451 = scmp.ne.s32.totalorder %s437, %s438
      %p452 = scmp.eq.s32.totalorder %s42, 1
      %p453 = por %p451, %p452
      %p455 = scmp.ne.s32.totalorder %s438, %s454
      %p456 = scmp.eq.s32.totalorder %s42, 0
      %p457 = por %p455, %p456
      %p458 = scmp.le.s32.totalorder 1, %s36
      %p459 = scmp.lt.s32.totalorder %s36, 3
      %p460 = pnand %p458, %p459
      %p461 = pneg %p460
      // Predicated region
      $region9: #{tpu_custom_call.1} parent=5 // pred_check
        _
      $region10: #{tpu_custom_call.1} parent=5 // pred_check_branch
        %463 = sbr.rel (%p460) target = $region12
      $region11: #{tpu_custom_call.1} parent=5 // pred_region
        %s464 = ssub.s32 %s36, 1
        // Predicated region
        $region13: #{tpu_custom_call.1} parent=11 // pred_check
          %p465 = pneg %p109
        $region14: #{tpu_custom_call.1} parent=11 // pred_check_branch
          %467 = sbr.rel (%p465) target = $region16
        $region15: #{tpu_custom_call.1} parent=11 // pred_region
          _
        $region16: #{tpu_custom_call.1} parent=11 // pred_fallthru
          _
        // Predicated region
        $region17: #{tpu_custom_call.1} parent=11 // pred_check
          %p468 = pneg %p130
        $region18: #{tpu_custom_call.1} parent=11 // pred_check_branch
          %470 = sbr.rel (%p468) target = $region20
        $region19: #{tpu_custom_call.1} parent=11 // pred_region
          %472 = vsyncadd [#allocation12], 0
          %s474 = sshll.u32 %s3, 4
          %s475 = int_to_ptr.hbm [resolvable:$true] %s474
          %s476 = sshll.u32 [#allocation13], 4
          %s477 = int_to_ptr.vmem [resolvable:$true] %s476
          %479 = dma.hbm_to_vmem [thread:$0]  %s475, 16, %s477, [#allocation12]
        $region20: #{tpu_custom_call.1} parent=11 // pred_fallthru
          _
        // Predicated region
        $region21: #{tpu_custom_call.1} parent=11 // pred_check
          %p480 = pneg %p151
        $region22: #{tpu_custom_call.1} parent=11 // pred_check_branch
          %482 = sbr.rel (%p480) target = $region24
        $region23: #{tpu_custom_call.1} parent=11 // pred_region
          _
        $region24: #{tpu_custom_call.1} parent=11 // pred_fallthru
          _
        // Predicated region
        $region25: #{tpu_custom_call.1} parent=11 // pred_check
          %p483 = pneg %p172
        $region26: #{tpu_custom_call.1} parent=11 // pred_check_branch
          %485 = sbr.rel (%p483) target = $region28
        $region27: #{tpu_custom_call.1} parent=11 // pred_region
          %487 = vsyncadd [#allocation15], 0
          %s489 = sshll.u32 %s5, 4
          %s490 = int_to_ptr.hbm [resolvable:$true] %s489
          %s491 = sshll.u32 [#allocation14], 4
          %s492 = int_to_ptr.vmem [resolvable:$true] %s491
          %494 = dma.hbm_to_vmem [thread:$0]  %s490, 16, %s492, [#allocation15]
        $region28: #{tpu_custom_call.1} parent=11 // pred_fallthru
          _
        // Predicated region
        $region29: #{tpu_custom_call.1} parent=11 // pred_check
          %p495 = pneg %p193
        $region30: #{tpu_custom_call.1} parent=11 // pred_check_branch
          %497 = sbr.rel (%p495) target = $region32
        $region31: #{tpu_custom_call.1} parent=11 // pred_region
          _
        $region32: #{tpu_custom_call.1} parent=11 // pred_fallthru
          _
        // Predicated region
        $region33: #{tpu_custom_call.1} parent=11 // pred_check
          %p498 = pneg %p214
        $region34: #{tpu_custom_call.1} parent=11 // pred_check_branch
          %500 = sbr.rel (%p498) target = $region36
        $region35: #{tpu_custom_call.1} parent=11 // pred_region
          %502 = vsyncadd [#allocation15], 0
          %s504 = sshll.u32 %s7, 4
          %s505 = int_to_ptr.hbm [resolvable:$true] %s504
          %s506 = sshll.u32 [#allocation16], 4
          %s507 = int_to_ptr.vmem [resolvable:$true] %s506
          %509 = dma.hbm_to_vmem [thread:$0]  %s505, 16, %s507, [#allocation15]
        $region36: #{tpu_custom_call.1} parent=11 // pred_fallthru
          _
        // Predicated region
        $region37: #{tpu_custom_call.1} parent=11 // pred_check
          %p510 = pneg %p235
        $region38: #{tpu_custom_call.1} parent=11 // pred_check_branch
          %512 = sbr.rel (%p510) target = $region40
        $region39: #{tpu_custom_call.1} parent=11 // pred_region
          %514 = vsyncadd [#allocation18], 0
          %s515 = sshll.u32 %s8, 4
          %s516 = int_to_ptr.hbm [resolvable:$true] %s515
          %s517 = sshll.u32 [#allocation17], 4
          %s518 = int_to_ptr.vmem [resolvable:$true] %s517
          %523 = dma.hbm_to_vmem [thread:$0]  %s516, 256, %s518, [#allocation18], 64, 64, 4
        $region40: #{tpu_custom_call.1} parent=11 // pred_fallthru
          _
        // Predicated region
        $region41: #{tpu_custom_call.1} parent=11 // pred_check
          %p524 = pneg %p256
        $region42: #{tpu_custom_call.1} parent=11 // pred_check_branch
          %526 = sbr.rel (%p524) target = $region44
        $region43: #{tpu_custom_call.1} parent=11 // pred_region
          _
        $region44: #{tpu_custom_call.1} parent=11 // pred_fallthru
          _
        // Predicated region
        $region45: #{tpu_custom_call.1} parent=11 // pred_check
          %p527 = pneg %p277
        $region46: #{tpu_custom_call.1} parent=11 // pred_check_branch
          %529 = sbr.rel (%p527) target = $region48
        $region47: #{tpu_custom_call.1} parent=11 // pred_region
          %531 = vsyncadd [#allocation18], 0
          %s532 = sshll.u32 %s10, 4
          %s533 = int_to_ptr.hbm [resolvable:$true] %s532
          %s534 = sshll.u32 [#allocation19], 4
          %s535 = int_to_ptr.vmem [resolvable:$true] %s534
          %540 = dma.hbm_to_vmem [thread:$0]  %s533, 256, %s535, [#allocation18], 64, 64, 4
        $region48: #{tpu_custom_call.1} parent=11 // pred_fallthru
          _
        // Predicated region
        $region49: #{tpu_custom_call.1} parent=11 // pred_check
          %p541 = pneg %p298
        $region50: #{tpu_custom_call.1} parent=11 // pred_check_branch
          %543 = sbr.rel (%p541) target = $region52
        $region51: #{tpu_custom_call.1} parent=11 // pred_region
          _
        $region52: #{tpu_custom_call.1} parent=11 // pred_fallthru
          _
        // Predicated region
        $region53: #{tpu_custom_call.1} parent=11 // pred_check
          %p544 = pneg %p319
        $region54: #{tpu_custom_call.1} parent=11 // pred_check_branch
          %546 = sbr.rel (%p544) target = $region56
        $region55: #{tpu_custom_call.1} parent=11 // pred_region
          %548 = vsyncadd [#allocation21], 0
          %s549 = sshll.u32 %s12, 4
          %s550 = int_to_ptr.hbm [resolvable:$true] %s549
          %s551 = sshll.u32 [#allocation20], 4
          %s552 = int_to_ptr.vmem [resolvable:$true] %s551
          %557 = dma.hbm_to_vmem [thread:$0]  %s550, 256, %s552, [#allocation21], 64, 64, 4
        $region56: #{tpu_custom_call.1} parent=11 // pred_fallthru
          _
        // Predicated region
        $region57: #{tpu_custom_call.1} parent=11 // pred_check
          %p558 = pneg %p340
        $region58: #{tpu_custom_call.1} parent=11 // pred_check_branch
          %560 = sbr.rel (%p558) target = $region60
        $region59: #{tpu_custom_call.1} parent=11 // pred_region
          _
        $region60: #{tpu_custom_call.1} parent=11 // pred_fallthru
          _
        // Predicated region
        $region61: #{tpu_custom_call.1} parent=11 // pred_check
          %p561 = pneg %p361
        $region62: #{tpu_custom_call.1} parent=11 // pred_check_branch
          %563 = sbr.rel (%p561) target = $region64
        $region63: #{tpu_custom_call.1} parent=11 // pred_region
          _
        $region64: #{tpu_custom_call.1} parent=11 // pred_fallthru
          _
        // Predicated region
        $region65: #{tpu_custom_call.1} parent=11 // pred_check
          %p564 = pneg %p382
        $region66: #{tpu_custom_call.1} parent=11 // pred_check_branch
          %566 = sbr.rel (%p564) target = $region68
        $region67: #{tpu_custom_call.1} parent=11 // pred_region
          _
        $region68: #{tpu_custom_call.1} parent=11 // pred_fallthru
          _
        // Predicated region
        $region69: #{tpu_custom_call.1} parent=11 // pred_check
          %p567 = pneg %p403
        $region70: #{tpu_custom_call.1} parent=11 // pred_check_branch
          %569 = sbr.rel (%p567) target = $region72
        $region71: #{tpu_custom_call.1} parent=11 // pred_region
          _
        $region72: #{tpu_custom_call.1} parent=11 // pred_fallthru
          _
        // Predicated region
        $region73: #{tpu_custom_call.1} parent=11 // pred_check
          %p570 = pneg %p424
        $region74: #{tpu_custom_call.1} parent=11 // pred_check_branch
          %572 = sbr.rel (%p570) target = $region76
        $region75: #{tpu_custom_call.1} parent=11 // pred_region
          _
        $region76: #{tpu_custom_call.1} parent=11 // pred_fallthru
          _
      $region12: #{tpu_custom_call.1} parent=5 // pred_fallthru
        _
      %p573 = scmp.lt.s32.totalorder %s36, 2
      // Predicated region
      $region77: #{tpu_custom_call.1} parent=5 // pred_check
        %p574 = pneg %p573
      $region78: #{tpu_custom_call.1} parent=5 // pred_check_branch
        %576 = sbr.rel (%p574) target = $region80
      $region79: #{tpu_custom_call.1} parent=5 // pred_region
        // Predicated region
        $region81: #{tpu_custom_call.1} parent=79 // pred_check
          %p577 = pneg %p56
        $region82: #{tpu_custom_call.1} parent=79 // pred_check_branch
          %579 = sbr.rel (%p577) target = $region84
        $region83: #{tpu_custom_call.1} parent=79 // pred_region
          %s580 = sand.u32 %s46, 1
          %s581 = scalar_lea.sflag [#allocation9], %s580
          %s582 = sand.u32 %s46, 1
          %s583 = smul.addr %s582, 4
          %s584 = scalar_lea.vmem [#allocation8], %s583
          %586 = vsyncadd %s581, 0
          %s587 = smul.addr %s36, 4
          %s588 = scalar_lea.hbm %s0, %s587
          %s590 = sshll.u32 %s588, 4
          %s591 = int_to_ptr.hbm [resolvable:$true] %s590
          %s592 = sshll.u32 %s584, 4
          %s593 = int_to_ptr.vmem [resolvable:$true] %s592
          %595 = dma.hbm_to_vmem [thread:$0]  %s591, 64, %s593, %s581
        $region84: #{tpu_custom_call.1} parent=79 // pred_fallthru
          _
        // Predicated region
        $region85: #{tpu_custom_call.1} parent=79 // pred_check
          %p596 = pneg %p82
        $region86: #{tpu_custom_call.1} parent=79 // pred_check_branch
          %598 = sbr.rel (%p596) target = $region88
        $region87: #{tpu_custom_call.1} parent=79 // pred_region
          %s599 = sand.u32 %s36, 1
          %s600 = scalar_lea.sflag [#allocation12], %s599
          %s601 = sand.u32 %s72, 1
          %s602 = smul.addr %s601, 4
          %s603 = scalar_lea.vmem [#allocation11], %s602
          %605 = vsyncadd %s600, 0
          %s606 = smul.addr %s36, 4
          %s607 = scalar_lea.hbm %s1, %s606
          %s609 = sshll.u32 %s607, 4
          %s610 = int_to_ptr.hbm [resolvable:$true] %s609
          %s611 = sshll.u32 %s603, 4
          %s612 = int_to_ptr.vmem [resolvable:$true] %s611
          %614 = dma.hbm_to_vmem [thread:$0]  %s610, 64, %s612, %s600
        $region88: #{tpu_custom_call.1} parent=79 // pred_fallthru
          _
      $region80: #{tpu_custom_call.1} parent=5 // pred_fallthru
        _
      %p615 = scmp.le.s32.totalorder 1, %s36
      %p616 = scmp.lt.s32.totalorder %s36, 3
      %p617 = pnand %p615, %p616
      %p618 = pneg %p617
      // Predicated region
      $region89: #{tpu_custom_call.1} parent=5 // pred_check
        _
      $region90: #{tpu_custom_call.1} parent=5 // pred_check_branch
        %620 = sbr.rel (%p617) target = $region92
      $region91: #{tpu_custom_call.1} parent=5 // pred_region
        %s621 = ssub.s32 %s36, 1
        %s622 = sand.u32 %s49, 1
        %s623 = scalar_lea.sflag [#allocation9], %s622
        %s624 = sand.u32 %s49, 1
        %s625 = smul.addr %s624, 4
        %s626 = scalar_lea.vmem [#allocation8], %s625
        // Predicated region
        $region93: #{tpu_custom_call.1} parent=91 // pred_check
          %p627 = pneg %p62
        $region94: #{tpu_custom_call.1} parent=91 // pred_check_branch
          %629 = sbr.rel (%p627) target = $region96
        $region95: #{tpu_custom_call.1} parent=91 // pred_region
          %631 = dma.done %s623, 64
        $region96: #{tpu_custom_call.1} parent=91 // pred_fallthru
          _
        %s632 = sand.u32 %s41, 1
        %s633 = scalar_lea.sflag [#allocation12], %s632
        %s634 = sand.u32 %s75, 1
        %s635 = smul.addr %s634, 4
        %s636 = scalar_lea.vmem [#allocation11], %s635
        // Predicated region
        $region97: #{tpu_custom_call.1} parent=91 // pred_check
          %p637 = pneg %p88
        $region98: #{tpu_custom_call.1} parent=91 // pred_check_branch
          %639 = sbr.rel (%p637) target = $region100
        $region99: #{tpu_custom_call.1} parent=91 // pred_region
          %641 = dma.done %s633, 64
        $region100: #{tpu_custom_call.1} parent=91 // pred_fallthru
          _
        // Predicated region
        $region101: #{tpu_custom_call.1} parent=91 // pred_check
          %p642 = pneg %p130
        $region102: #{tpu_custom_call.1} parent=91 // pred_check_branch
          %644 = sbr.rel (%p642) target = $region104
        $region103: #{tpu_custom_call.1} parent=91 // pred_region
          %646 = dma.done [#allocation12], 16
        $region104: #{tpu_custom_call.1} parent=91 // pred_fallthru
          _
        // Predicated region
        $region105: #{tpu_custom_call.1} parent=91 // pred_check
          %p647 = pneg %p172
        $region106: #{tpu_custom_call.1} parent=91 // pred_check_branch
          %649 = sbr.rel (%p647) target = $region108
        $region107: #{tpu_custom_call.1} parent=91 // pred_region
          %651 = dma.done [#allocation15], 16
        $region108: #{tpu_custom_call.1} parent=91 // pred_fallthru
          _
        // Predicated region
        $region109: #{tpu_custom_call.1} parent=91 // pred_check
          %p652 = pneg %p214
        $region110: #{tpu_custom_call.1} parent=91 // pred_check_branch
          %654 = sbr.rel (%p652) target = $region112
        $region111: #{tpu_custom_call.1} parent=91 // pred_region
          %656 = dma.done [#allocation15], 16
        $region112: #{tpu_custom_call.1} parent=91 // pred_fallthru
          _
        // Predicated region
        $region113: #{tpu_custom_call.1} parent=91 // pred_check
          %p657 = pneg %p235
        $region114: #{tpu_custom_call.1} parent=91 // pred_check_branch
          %659 = sbr.rel (%p657) target = $region116
        $region115: #{tpu_custom_call.1} parent=91 // pred_region
          %661 = dma.done [#allocation18], 256
        $region116: #{tpu_custom_call.1} parent=91 // pred_fallthru
          _
        // Predicated region
        $region117: #{tpu_custom_call.1} parent=91 // pred_check
          %p662 = pneg %p277
        $region118: #{tpu_custom_call.1} parent=91 // pred_check_branch
          %664 = sbr.rel (%p662) target = $region120
        $region119: #{tpu_custom_call.1} parent=91 // pred_region
          %666 = dma.done [#allocation18], 256
        $region120: #{tpu_custom_call.1} parent=91 // pred_fallthru
          _
        // Predicated region
        $region121: #{tpu_custom_call.1} parent=91 // pred_check
          %p667 = pneg %p319
        $region122: #{tpu_custom_call.1} parent=91 // pred_check_branch
          %669 = sbr.rel (%p667) target = $region124
        $region123: #{tpu_custom_call.1} parent=91 // pred_region
          %671 = dma.done [#allocation21], 256
        $region124: #{tpu_custom_call.1} parent=91 // pred_fallthru
          _
        %s672 = sand.u32 %s49, 1
        %s673 = scalar_lea.sflag [#allocation9], %s672
        %s674 = sand.u32 %s49, 1
        %s675 = smul.addr %s674, 4
        %s676 = scalar_lea.vmem [#allocation8], %s675
        %p677 = pneg %p62
        %p678 = pneg %p59
        %s679 = sand.u32 %s41, 1
        %s680 = scalar_lea.sflag [#allocation12], %s679
        %s681 = sand.u32 %s75, 1
        %s682 = smul.addr %s681, 4
        %s683 = scalar_lea.vmem [#allocation11], %s682
        %p684 = pneg %p88
        %p685 = pneg %p85
        %p686 = pneg %p109
        %p687 = pneg %p106
        %p688 = pneg %p130
        %p689 = pneg %p127
        %p690 = pneg %p151
        %p691 = pneg %p148
        %p692 = pneg %p172
        %p693 = pneg %p169
        %p694 = pneg %p193
        %p695 = pneg %p190
        %p696 = pneg %p214
        %p697 = pneg %p211
        %p698 = pneg %p235
        %p699 = pneg %p232
        %p700 = pneg %p256
        %p701 = pneg %p253
        %p702 = pneg %p277
        %p703 = pneg %p274
        %p704 = pneg %p298
        %p705 = pneg %p295
        %p706 = pneg %p319
        %p707 = pneg %p316
        %p708 = pneg %p340
        %p709 = pneg %p337
        %p710 = pneg %p361
        %p711 = pneg %p358
        %p712 = pneg %p382
        %p713 = pneg %p379
        %p714 = pneg %p403
        %p715 = pneg %p400
        %p716 = pneg %p424
        %p717 = pneg %p421
        %p718 = pneg %p450
        %p719 = pneg %p447
        %s720 = sand.u32 %s437, 1
        %s721 = scalar_lea.sflag [#allocation10], %s720
        %s722 = sand.u32 %s437, 1
        %s723 = smul.addr %s722, 4
        %s724 = scalar_lea.vmem [#allocation22], %s723
        %v726 = vld [vmem:[%s16] sm:$0x1]
        %v727 = vld [vmem:[%s16 + $0x1] sm:$0x1]
        %v728 = vld [vmem:[%s16 + $0x2] sm:$0x1]
        %v729 = vld [vmem:[%s17] sm:$0x1]
        %v730 = vld [vmem:[%s17 + $0x1] sm:$0x1]
        %v731 = vld [vmem:[%s17 + $0x2] sm:$0x1]
        %v732 = vld [vmem:[%s626] sm:$0xf]
        %v733 = vld [vmem:[%s636] sm:$0xf]
        %v734 = vld [vmem:[%s2] sm:$0xf]
        %v735 = vld [vmem:[%s2 + $0x4] sm:$0xf]
        %v736 = vld [vmem:[%s2 + $0x8] sm:$0xf]
        %v737 = vld [vmem:[%s2 + $0xc] sm:$0xf]
        %v738 = vld [vmem:[#allocation13] sm:$0x1]
        %v740 = vperm.slane %v738, 0
        %v746 = vunpack.c.l.b16 %v734
        %v747 = vunpack.c.l.b16 %v735
        %v748 = vunpack.c.l.b16 %v736
        %v749 = vunpack.c.l.b16 %v737
        %v750 = vpack.c.b16 %v747, %v746
        %v751 = vpack.c.b16 %v749, %v748
        %vm754 = vcmask 261120
        %v756 = vsel %vm754, %v732, 0
        %758 = vmatpush.bf16.msra.mxu0 0
        %759 = vmatpush.bf16.msra.mxu0 0
        %760 = vmatpush.bf16.msra.mxu0 0
        %761 = vmatpush.bf16.msra.mxu0 0
        %762 = vmatpush.bf16.msra.mxu0 0
        %763 = vmatpush.bf16.msra.mxu0 0
        %764 = vmatpush.bf16.msra.mxu0 %v751
        %765 = vmatpush.bf16.msra.mxu0 %v750
        %766 = vmatmul.bf16.gmra.mxu0 %v756
        %v767 = vpop.f32.mrf.mxu0
        %v768 = vadd.f32 %v740, %v767
        %v769 = vpop.f32.mrf.mxu0
        %770 = vdwg.mxu0
        %v771 = vmul.f32 %v768, 0.17677669
        %v772 = vpack.c.bf16 %v771, %v771
        %vm773 = vcmask 27648
        %774 = vst.msk [vmem:[#allocation2] sm:$0xf] %vm773, %v772
        %776 = vrot.lane.b32.xlu0 %v772, 124
        %v777 = vpop.permute.xlu0 %776
        %s779 = scalar_lea.vmem [#allocation2], 4
        %780 = vst.msk [vmem:[%s779] sm:$0xf] %vm773, %v777
        %781 = vrot.lane.b32.xlu0 %v772, 120
        %v782 = vpop.permute.xlu0 %781
        %s784 = scalar_lea.vmem [#allocation2], 8
        %785 = vst.msk [vmem:[%s784] sm:$0xf] %vm773, %v782
        %786 = vrot.lane.b32.xlu0 %v772, 116
        %v787 = vpop.permute.xlu0 %786
        %s789 = scalar_lea.vmem [#allocation2], 12
        %790 = vst.msk [vmem:[%s789] sm:$0xf] %vm773, %v787
        %791 = vrot.lane.b32.xlu0 %v772, 112
        %v792 = vpop.permute.xlu0 %791
        %s794 = scalar_lea.vmem [#allocation2], 16
        %795 = vst.msk [vmem:[%s794] sm:$0xf] %vm773, %v792
        %796 = vrot.lane.b32.xlu0 %v772, 108
        %v797 = vpop.permute.xlu0 %796
        %s799 = scalar_lea.vmem [#allocation2], 20
        %800 = vst.msk [vmem:[%s799] sm:$0xf] %vm773, %v797
        %801 = vrot.lane.b32.xlu0 %v772, 104
        %v802 = vpop.permute.xlu0 %801
        %s804 = scalar_lea.vmem [#allocation2], 24
        %805 = vst.msk [vmem:[%s804] sm:$0xf] %vm773, %v802
        %806 = vrot.lane.b32.xlu0 %v772, 100
        %v807 = vpop.permute.xlu0 %806
        %s809 = scalar_lea.vmem [#allocation2], 28
        %810 = vst.msk [vmem:[%s809] sm:$0xf] %vm773, %v807
        %v811 = vpack.c.bf16 %v768, %v768
        %813 = vrot.lane.b32.xlu0 %v811, 96
        %v814 = vpop.permute.xlu0 %813
        %816 = vst.msk [vmem:[#allocation3] sm:$0xf] %vm773, %v814
        %817 = vrot.lane.b32.xlu0 %v811, 92
        %v818 = vpop.permute.xlu0 %817
        %s820 = scalar_lea.vmem [#allocation3], 4
        %821 = vst.msk [vmem:[%s820] sm:$0xf] %vm773, %v818
        %822 = vrot.lane.b32.xlu0 %v811, 88
        %v823 = vpop.permute.xlu0 %822
        %s825 = scalar_lea.vmem [#allocation3], 8
        %826 = vst.msk [vmem:[%s825] sm:$0xf] %vm773, %v823
        %827 = vrot.lane.b32.xlu0 %v811, 84
        %v828 = vpop.permute.xlu0 %827
        %s830 = scalar_lea.vmem [#allocation3], 12
        %831 = vst.msk [vmem:[%s830] sm:$0xf] %vm773, %v828
        %832 = vrot.lane.b32.xlu0 %v811, 80
        %v833 = vpop.permute.xlu0 %832
        %s835 = scalar_lea.vmem [#allocation3], 16
        %836 = vst.msk [vmem:[%s835] sm:$0xf] %vm773, %v833
        %837 = vrot.lane.b32.xlu0 %v811, 76
        %v838 = vpop.permute.xlu0 %837
        %s840 = scalar_lea.vmem [#allocation3], 20
        %841 = vst.msk [vmem:[%s840] sm:$0xf] %vm773, %v838
        %842 = vrot.lane.b32.xlu0 %v811, 72
        %v843 = vpop.permute.xlu0 %842
        %s845 = scalar_lea.vmem [#allocation3], 24
        %846 = vst.msk [vmem:[%s845] sm:$0xf] %vm773, %v843
        %847 = vrot.lane.b32.xlu0 %v811, 68
        %v848 = vpop.permute.xlu0 %847
        %s850 = scalar_lea.vmem [#allocation3], 28
        %851 = vst.msk [vmem:[%s850] sm:$0xf] %vm773, %v848
        %852 = vrot.lane.b32.xlu0 %v811, 64
        %v853 = vpop.permute.xlu0 %852
        %855 = vst.msk [vmem:[#allocation4] sm:$0xf] %vm773, %v853
        %856 = vrot.lane.b32.xlu0 %v811, 60
        %v857 = vpop.permute.xlu0 %856
        %s859 = scalar_lea.vmem [#allocation4], 4
        %860 = vst.msk [vmem:[%s859] sm:$0xf] %vm773, %v857
        %861 = vrot.lane.b32.xlu0 %v811, 56
        %v862 = vpop.permute.xlu0 %861
        %s864 = scalar_lea.vmem [#allocation4], 8
        %865 = vst.msk [vmem:[%s864] sm:$0xf] %vm773, %v862
        %866 = vrot.lane.b32.xlu0 %v811, 52
        %v867 = vpop.permute.xlu0 %866
        %s869 = scalar_lea.vmem [#allocation4], 12
        %870 = vst.msk [vmem:[%s869] sm:$0xf] %vm773, %v867
        %871 = vrot.lane.b32.xlu0 %v811, 48
        %v872 = vpop.permute.xlu0 %871
        %s874 = scalar_lea.vmem [#allocation4], 16
        %875 = vst.msk [vmem:[%s874] sm:$0xf] %vm773, %v872
        %876 = vrot.lane.b32.xlu0 %v811, 44
        %v877 = vpop.permute.xlu0 %876
        %s879 = scalar_lea.vmem [#allocation4], 20
        %880 = vst.msk [vmem:[%s879] sm:$0xf] %vm773, %v877
        %881 = vrot.lane.b32.xlu0 %v811, 40
        %v882 = vpop.permute.xlu0 %881
        %s884 = scalar_lea.vmem [#allocation4], 24
        %885 = vst.msk [vmem:[%s884] sm:$0xf] %vm773, %v882
        %886 = vrot.lane.b32.xlu0 %v811, 36
        %v887 = vpop.permute.xlu0 %886
        %s889 = scalar_lea.vmem [#allocation4], 28
        %890 = vst.msk [vmem:[%s889] sm:$0xf] %vm773, %v887
        %v891 = vld [vmem:[#allocation2] sm:$0xf]
        %v892 = vld [vmem:[#allocation2 + $0x4] sm:$0xf]
        %v893 = vld [vmem:[#allocation2 + $0x8] sm:$0xf]
        %v894 = vld [vmem:[#allocation2 + $0xc] sm:$0xf]
        %v895 = vld [vmem:[#allocation2 + $0x10] sm:$0xf]
        %v896 = vld [vmem:[#allocation2 + $0x14] sm:$0xf]
        %v897 = vld [vmem:[#allocation2 + $0x18] sm:$0xf]
        %v898 = vld [vmem:[#allocation2 + $0x1c] sm:$0xf]
        %v899 = vld [vmem:[#allocation3] sm:$0xf]
        %v900 = vld [vmem:[#allocation3 + $0x4] sm:$0xf]
        %v901 = vld [vmem:[#allocation3 + $0x8] sm:$0xf]
        %v902 = vld [vmem:[#allocation3 + $0xc] sm:$0xf]
        %v903 = vld [vmem:[#allocation3 + $0x10] sm:$0xf]
        %v904 = vld [vmem:[#allocation3 + $0x14] sm:$0xf]
        %v905 = vld [vmem:[#allocation3 + $0x18] sm:$0xf]
        %v906 = vld [vmem:[#allocation3 + $0x1c] sm:$0xf]
        %vm907 = vcmask 31744
        %v909 = vsel %vm907, %v891, 0
        %v912 = vsel %vm907, %v899, 0
        %914 = vmatpush.bf16.xpose.msra.mxu0 0
        %915 = vmatpush.bf16.xpose.msra.mxu0 0
        %916 = vmatpush.bf16.xpose.msra.mxu0 0
        %917 = vmatpush.bf16.xpose.msra.mxu0 0
        %918 = vmatpush.bf16.xpose.msra.mxu0 0
        %919 = vmatpush.bf16.xpose.msra.mxu0 0
        %920 = vmatpush.bf16.xpose.msra.mxu0 0
        %921 = vmatpush.bf16.xpose.msra.mxu0 %v912
        %922 = vmatmul.bf16.gmra.mxu0 %v909
        %v923 = vpop.f32.mrf.mxu0
        %v924 = vadd.f32 0.0, %v923
        %v925 = vpop.f32.mrf.mxu0
        %926 = vdwg.mxu0
        %v928 = vsel %vm907, %v892, 0
        %v931 = vsel %vm907, %v900, 0
        %933 = vmatpush.bf16.xpose.msra.mxu0 0
        %934 = vmatpush.bf16.xpose.msra.mxu0 0
        %935 = vmatpush.bf16.xpose.msra.mxu0 0
        %936 = vmatpush.bf16.xpose.msra.mxu0 0
        %937 = vmatpush.bf16.xpose.msra.mxu0 0
        %938 = vmatpush.bf16.xpose.msra.mxu0 0
        %939 = vmatpush.bf16.xpose.msra.mxu0 0
        %940 = vmatpush.bf16.xpose.msra.mxu0 %v931
        %941 = vmatmul.bf16.gmra.mxu0 %v928
        %v942 = vpop.f32.mrf.mxu0
        %v943 = vadd.f32 0.0, %v942
        %v944 = vpop.f32.mrf.mxu0
        %945 = vdwg.mxu0
        %v947 = vsel %vm907, %v893, 0
        %v950 = vsel %vm907, %v901, 0
        %952 = vmatpush.bf16.xpose.msra.mxu0 0
        %953 = vmatpush.bf16.xpose.msra.mxu0 0
        %954 = vmatpush.bf16.xpose.msra.mxu0 0
        %955 = vmatpush.bf16.xpose.msra.mxu0 0
        %956 = vmatpush.bf16.xpose.msra.mxu0 0
        %957 = vmatpush.bf16.xpose.msra.mxu0 0
        %958 = vmatpush.bf16.xpose.msra.mxu0 0
        %959 = vmatpush.bf16.xpose.msra.mxu0 %v950
        %960 = vmatmul.bf16.gmra.mxu0 %v947
        %v961 = vpop.f32.mrf.mxu0
        %v962 = vadd.f32 0.0, %v961
        %v963 = vpop.f32.mrf.mxu0
        %964 = vdwg.mxu0
        %v966 = vsel %vm907, %v894, 0
        %v969 = vsel %vm907, %v902, 0
        %971 = vmatpush.bf16.xpose.msra.mxu0 0
        %972 = vmatpush.bf16.xpose.msra.mxu0 0
        %973 = vmatpush.bf16.xpose.msra.mxu0 0
        %974 = vmatpush.bf16.xpose.msra.mxu0 0
        %975 = vmatpush.bf16.xpose.msra.mxu0 0
        %976 = vmatpush.bf16.xpose.msra.mxu0 0
        %977 = vmatpush.bf16.xpose.msra.mxu0 0
        %978 = vmatpush.bf16.xpose.msra.mxu0 %v969
        %979 = vmatmul.bf16.gmra.mxu0 %v966
        %v980 = vpop.f32.mrf.mxu0
        %v981 = vadd.f32 0.0, %v980
        %v982 = vpop.f32.mrf.mxu0
        %983 = vdwg.mxu0
        %v985 = vsel %vm907, %v895, 0
        %v988 = vsel %vm907, %v903, 0
        %990 = vmatpush.bf16.xpose.msra.mxu0 0
        %991 = vmatpush.bf16.xpose.msra.mxu0 0
        %992 = vmatpush.bf16.xpose.msra.mxu0 0
        %993 = vmatpush.bf16.xpose.msra.mxu0 0
        %994 = vmatpush.bf16.xpose.msra.mxu0 0
        %995 = vmatpush.bf16.xpose.msra.mxu0 0
        %996 = vmatpush.bf16.xpose.msra.mxu0 0
        %997 = vmatpush.bf16.xpose.msra.mxu0 %v988
        %998 = vmatmul.bf16.gmra.mxu0 %v985
        %v999 = vpop.f32.mrf.mxu0
        %v1000 = vadd.f32 0.0, %v999
        %v1001 = vpop.f32.mrf.mxu0
        %1002 = vdwg.mxu0
        %v1004 = vsel %vm907, %v896, 0
        %v1007 = vsel %vm907, %v904, 0
        %1009 = vmatpush.bf16.xpose.msra.mxu0 0
        %1010 = vmatpush.bf16.xpose.msra.mxu0 0
        %1011 = vmatpush.bf16.xpose.msra.mxu0 0
        %1012 = vmatpush.bf16.xpose.msra.mxu0 0
        %1013 = vmatpush.bf16.xpose.msra.mxu0 0
        %1014 = vmatpush.bf16.xpose.msra.mxu0 0
        %1015 = vmatpush.bf16.xpose.msra.mxu0 0
        %1016 = vmatpush.bf16.xpose.msra.mxu0 %v1007
        %1017 = vmatmul.bf16.gmra.mxu0 %v1004
        %v1018 = vpop.f32.mrf.mxu0
        %v1019 = vadd.f32 0.0, %v1018
        %v1020 = vpop.f32.mrf.mxu0
        %1021 = vdwg.mxu0
        %v1023 = vsel %vm907, %v897, 0
        %v1026 = vsel %vm907, %v905, 0
        %1028 = vmatpush.bf16.xpose.msra.mxu0 0
        %1029 = vmatpush.bf16.xpose.msra.mxu0 0
        %1030 = vmatpush.bf16.xpose.msra.mxu0 0
        %1031 = vmatpush.bf16.xpose.msra.mxu0 0
        %1032 = vmatpush.bf16.xpose.msra.mxu0 0
        %1033 = vmatpush.bf16.xpose.msra.mxu0 0
        %1034 = vmatpush.bf16.xpose.msra.mxu0 0
        %1035 = vmatpush.bf16.xpose.msra.mxu0 %v1026
        %1036 = vmatmul.bf16.gmra.mxu0 %v1023
        %v1037 = vpop.f32.mrf.mxu0
        %v1038 = vadd.f32 0.0, %v1037
        %v1039 = vpop.f32.mrf.mxu0
        %1040 = vdwg.mxu0
        %v1042 = vsel %vm907, %v898, 0
        %v1045 = vsel %vm907, %v906, 0
        %1047 = vmatpush.bf16.xpose.msra.mxu0 0
        %1048 = vmatpush.bf16.xpose.msra.mxu0 0
        %1049 = vmatpush.bf16.xpose.msra.mxu0 0
        %1050 = vmatpush.bf16.xpose.msra.mxu0 0
        %1051 = vmatpush.bf16.xpose.msra.mxu0 0
        %1052 = vmatpush.bf16.xpose.msra.mxu0 0
        %1053 = vmatpush.bf16.xpose.msra.mxu0 0
        %1054 = vmatpush.bf16.xpose.msra.mxu0 %v1045
        %1055 = vmatmul.bf16.gmra.mxu0 %v1042
        %v1056 = vpop.f32.mrf.mxu0
        %v1057 = vadd.f32 0.0, %v1056
        %v1058 = vpop.f32.mrf.mxu0
        %1059 = vdwg.mxu0
        %vm1060 = vcmask 64512
        %v1061 = vsel %vm1060, %v924, -inf
        %1062 = vmax.xlane.f32.xlu0 %v1061
        %v1063 = vpop.xlane.xlu0 %1062
        %v1064 = vsel %vm1060, %v943, -inf
        %1065 = vmax.xlane.f32.xlu0 %v1064
        %v1066 = vpop.xlane.xlu0 %1065
        %v1067 = vsel %vm1060, %v962, -inf
        %1068 = vmax.xlane.f32.xlu0 %v1067
        %v1069 = vpop.xlane.xlu0 %1068
        %v1070 = vsel %vm1060, %v981, -inf
        %1071 = vmax.xlane.f32.xlu0 %v1070
        %v1072 = vpop.xlane.xlu0 %1071
        %v1073 = vsel %vm1060, %v1000, -inf
        %1074 = vmax.xlane.f32.xlu0 %v1073
        %v1075 = vpop.xlane.xlu0 %1074
        %v1076 = vsel %vm1060, %v1019, -inf
        %1077 = vmax.xlane.f32.xlu0 %v1076
        %v1078 = vpop.xlane.xlu0 %1077
        %v1079 = vsel %vm1060, %v1038, -inf
        %1080 = vmax.xlane.f32.xlu0 %v1079
        %v1081 = vpop.xlane.xlu0 %1080
        %v1082 = vsel %vm1060, %v1057, -inf
        %1083 = vmax.xlane.f32.xlu0 %v1082
        %v1084 = vpop.xlane.xlu0 %1083
        %v1085 = vsub.f32 %v924, %v1063
        %v1086 = vsub.f32 %v943, %v1066
        %v1087 = vsub.f32 %v962, %v1069
        %v1088 = vsub.f32 %v981, %v1072
        %v1089 = vsub.f32 %v1000, %v1075
        %v1090 = vsub.f32 %v1019, %v1078
        %v1091 = vsub.f32 %v1038, %v1081
        %v1092 = vsub.f32 %v1057, %v1084
        %v1093 = vmul.f32 %v1085, 1.442695
        %v1094 = vpow.pop %v1093
        %v1095 = vmul.f32 %v1086, 1.442695
        %v1096 = vpow.pop %v1095
        %v1097 = vmul.f32 %v1087, 1.442695
        %v1098 = vpow.pop %v1097
        %v1099 = vmul.f32 %v1088, 1.442695
        %v1100 = vpow.pop %v1099
        %v1101 = vmul.f32 %v1089, 1.442695
        %v1102 = vpow.pop %v1101
        %v1103 = vmul.f32 %v1090, 1.442695
        %v1104 = vpow.pop %v1103
        %v1105 = vmul.f32 %v1091, 1.442695
        %v1106 = vpow.pop %v1105
        %v1107 = vmul.f32 %v1092, 1.442695
        %v1108 = vpow.pop %v1107
        %v1109 = vsel %vm1060, %v1094, 0.0
        %1110 = vadd.xlane.f32.xlu0 %v1109
        %v1111 = vpop.xlane.xlu0 %1110
        %v1112 = vsel %vm1060, %v1096, 0.0
        %1113 = vadd.xlane.f32.xlu0 %v1112
        %v1114 = vpop.xlane.xlu0 %1113
        %v1115 = vsel %vm1060, %v1098, 0.0
        %1116 = vadd.xlane.f32.xlu0 %v1115
        %v1117 = vpop.xlane.xlu0 %1116
        %v1118 = vsel %vm1060, %v1100, 0.0
        %1119 = vadd.xlane.f32.xlu0 %v1118
        %v1120 = vpop.xlane.xlu0 %1119
        %v1121 = vsel %vm1060, %v1102, 0.0
        %1122 = vadd.xlane.f32.xlu0 %v1121
        %v1123 = vpop.xlane.xlu0 %1122
        %v1124 = vsel %vm1060, %v1104, 0.0
        %1125 = vadd.xlane.f32.xlu0 %v1124
        %v1126 = vpop.xlane.xlu0 %1125
        %v1127 = vsel %vm1060, %v1106, 0.0
        %1128 = vadd.xlane.f32.xlu0 %v1127
        %v1129 = vpop.xlane.xlu0 %1128
        %v1130 = vsel %vm1060, %v1108, 0.0
        %1131 = vadd.xlane.f32.xlu0 %v1130
        %v1132 = vpop.xlane.xlu0 %1131
        %v1133 = vrcp.pop %v1111
        %v1134 = vrcp.pop %v1114
        %v1135 = vrcp.pop %v1117
        %v1136 = vrcp.pop %v1120
        %v1137 = vrcp.pop %v1123
        %v1138 = vrcp.pop %v1126
        %v1139 = vrcp.pop %v1129
        %v1140 = vrcp.pop %v1132
        %v1141 = vmul.f32 %v1094, %v1133
        %v1142 = vmul.f32 %v1096, %v1134
        %v1143 = vmul.f32 %v1098, %v1135
        %v1144 = vmul.f32 %v1100, %v1136
        %v1145 = vmul.f32 %v1102, %v1137
        %v1146 = vmul.f32 %v1104, %v1138
        %v1147 = vmul.f32 %v1106, %v1139
        %v1148 = vmul.f32 %v1108, %v1140
        %v1149 = vpack.c.bf16 %v1141, %v1141
        %v1150 = vpack.c.bf16 %v1142, %v1142
        %v1151 = vpack.c.bf16 %v1143, %v1143
        %v1152 = vpack.c.bf16 %v1144, %v1144
        %v1153 = vpack.c.bf16 %v1145, %v1145
        %v1154 = vpack.c.bf16 %v1146, %v1146
        %v1155 = vpack.c.bf16 %v1147, %v1147
        %v1156 = vpack.c.bf16 %v1148, %v1148
        %v1157 = vld [vmem:[#allocation4] sm:$0xf]
        %v1158 = vld [vmem:[#allocation4 + $0x4] sm:$0xf]
        %v1159 = vld [vmem:[#allocation4 + $0x8] sm:$0xf]
        %v1160 = vld [vmem:[#allocation4 + $0xc] sm:$0xf]
        %v1161 = vld [vmem:[#allocation4 + $0x10] sm:$0xf]
        %v1162 = vld [vmem:[#allocation4 + $0x14] sm:$0xf]
        %v1163 = vld [vmem:[#allocation4 + $0x18] sm:$0xf]
        %v1164 = vld [vmem:[#allocation4 + $0x1c] sm:$0xf]
        %v1166 = vsel %vm1060, %v1149, 0
        %vm1168 = vcmask 1043456
        %v1170 = vsel %vm1168, %v1157, 0
        %1172 = vmatpush.bf16.msra.mxu0 0
        %1173 = vmatpush.bf16.msra.mxu0 0
        %1174 = vmatpush.bf16.msra.mxu0 0
        %1175 = vmatpush.bf16.msra.mxu0 0
        %1176 = vmatpush.bf16.msra.mxu0 0
        %1177 = vmatpush.bf16.msra.mxu0 0
        %1178 = vmatpush.bf16.msra.mxu0 0
        %1179 = vmatpush.bf16.msra.mxu0 %v1170
        %1180 = vmatmul.bf16.gmra.mxu0 %v1166
        %v1181 = vpop.f32.mrf.mxu0
        %v1182 = vadd.f32 0.0, %v1181
        %v1183 = vpop.f32.mrf.mxu0
        %1184 = vdwg.mxu0
        %v1186 = vsel %vm1060, %v1150, 0
        %v1189 = vsel %vm1168, %v1158, 0
        %1191 = vmatpush.bf16.msra.mxu0 0
        %1192 = vmatpush.bf16.msra.mxu0 0
        %1193 = vmatpush.bf16.msra.mxu0 0
        %1194 = vmatpush.bf16.msra.mxu0 0
        %1195 = vmatpush.bf16.msra.mxu0 0
        %1196 = vmatpush.bf16.msra.mxu0 0
        %1197 = vmatpush.bf16.msra.mxu0 0
        %1198 = vmatpush.bf16.msra.mxu0 %v1189
        %1199 = vmatmul.bf16.gmra.mxu0 %v1186
        %v1200 = vpop.f32.mrf.mxu0
        %v1201 = vadd.f32 0.0, %v1200
        %v1202 = vpop.f32.mrf.mxu0
        %1203 = vdwg.mxu0
        %v1205 = vsel %vm1060, %v1151, 0
        %v1208 = vsel %vm1168, %v1159, 0
        %1210 = vmatpush.bf16.msra.mxu0 0
        %1211 = vmatpush.bf16.msra.mxu0 0
        %1212 = vmatpush.bf16.msra.mxu0 0
        %1213 = vmatpush.bf16.msra.mxu0 0
        %1214 = vmatpush.bf16.msra.mxu0 0
        %1215 = vmatpush.bf16.msra.mxu0 0
        %1216 = vmatpush.bf16.msra.mxu0 0
        %1217 = vmatpush.bf16.msra.mxu0 %v1208
        %1218 = vmatmul.bf16.gmra.mxu0 %v1205
        %v1219 = vpop.f32.mrf.mxu0
        %v1220 = vadd.f32 0.0, %v1219
        %v1221 = vpop.f32.mrf.mxu0
        %1222 = vdwg.mxu0
        %v1224 = vsel %vm1060, %v1152, 0
        %v1227 = vsel %vm1168, %v1160, 0
        %1229 = vmatpush.bf16.msra.mxu0 0
        %1230 = vmatpush.bf16.msra.mxu0 0
        %1231 = vmatpush.bf16.msra.mxu0 0
        %1232 = vmatpush.bf16.msra.mxu0 0
        %1233 = vmatpush.bf16.msra.mxu0 0
        %1234 = vmatpush.bf16.msra.mxu0 0
        %1235 = vmatpush.bf16.msra.mxu0 0
        %1236 = vmatpush.bf16.msra.mxu0 %v1227
        %1237 = vmatmul.bf16.gmra.mxu0 %v1224
        %v1238 = vpop.f32.mrf.mxu0
        %v1239 = vadd.f32 0.0, %v1238
        %v1240 = vpop.f32.mrf.mxu0
        %1241 = vdwg.mxu0
        %v1243 = vsel %vm1060, %v1153, 0
        %v1246 = vsel %vm1168, %v1161, 0
        %1248 = vmatpush.bf16.msra.mxu0 0
        %1249 = vmatpush.bf16.msra.mxu0 0
        %1250 = vmatpush.bf16.msra.mxu0 0
        %1251 = vmatpush.bf16.msra.mxu0 0
        %1252 = vmatpush.bf16.msra.mxu0 0
        %1253 = vmatpush.bf16.msra.mxu0 0
        %1254 = vmatpush.bf16.msra.mxu0 0
        %1255 = vmatpush.bf16.msra.mxu0 %v1246
        %1256 = vmatmul.bf16.gmra.mxu0 %v1243
        %v1257 = vpop.f32.mrf.mxu0
        %v1258 = vadd.f32 0.0, %v1257
        %v1259 = vpop.f32.mrf.mxu0
        %1260 = vdwg.mxu0
        %v1262 = vsel %vm1060, %v1154, 0
        %v1265 = vsel %vm1168, %v1162, 0
        %1267 = vmatpush.bf16.msra.mxu0 0
        %1268 = vmatpush.bf16.msra.mxu0 0
        %1269 = vmatpush.bf16.msra.mxu0 0
        %1270 = vmatpush.bf16.msra.mxu0 0
        %1271 = vmatpush.bf16.msra.mxu0 0
        %1272 = vmatpush.bf16.msra.mxu0 0
        %1273 = vmatpush.bf16.msra.mxu0 0
        %1274 = vmatpush.bf16.msra.mxu0 %v1265
        %1275 = vmatmul.bf16.gmra.mxu0 %v1262
        %v1276 = vpop.f32.mrf.mxu0
        %v1277 = vadd.f32 0.0, %v1276
        %v1278 = vpop.f32.mrf.mxu0
        %1279 = vdwg.mxu0
        %v1281 = vsel %vm1060, %v1155, 0
        %v1284 = vsel %vm1168, %v1163, 0
        %1286 = vmatpush.bf16.msra.mxu0 0
        %1287 = vmatpush.bf16.msra.mxu0 0
        %1288 = vmatpush.bf16.msra.mxu0 0
        %1289 = vmatpush.bf16.msra.mxu0 0
        %1290 = vmatpush.bf16.msra.mxu0 0
        %1291 = vmatpush.bf16.msra.mxu0 0
        %1292 = vmatpush.bf16.msra.mxu0 0
        %1293 = vmatpush.bf16.msra.mxu0 %v1284
        %1294 = vmatmul.bf16.gmra.mxu0 %v1281
        %v1295 = vpop.f32.mrf.mxu0
        %v1296 = vadd.f32 0.0, %v1295
        %v1297 = vpop.f32.mrf.mxu0
        %1298 = vdwg.mxu0
        %v1300 = vsel %vm1060, %v1156, 0
        %v1303 = vsel %vm1168, %v1164, 0
        %1305 = vmatpush.bf16.msra.mxu0 0
        %1306 = vmatpush.bf16.msra.mxu0 0
        %1307 = vmatpush.bf16.msra.mxu0 0
        %1308 = vmatpush.bf16.msra.mxu0 0
        %1309 = vmatpush.bf16.msra.mxu0 0
        %1310 = vmatpush.bf16.msra.mxu0 0
        %1311 = vmatpush.bf16.msra.mxu0 0
        %1312 = vmatpush.bf16.msra.mxu0 %v1303
        %1313 = vmatmul.bf16.gmra.mxu0 %v1300
        %v1314 = vpop.f32.mrf.mxu0
        %v1315 = vadd.f32 0.0, %v1314
        %v1316 = vpop.f32.mrf.mxu0
        %1317 = vdwg.mxu0
        %v1318 = vpack.c.bf16 %v1182, %v1182
        %v1319 = vpack.c.bf16 %v1201, %v1201
        %v1320 = vpack.c.bf16 %v1220, %v1220
        %v1321 = vpack.c.bf16 %v1239, %v1239
        %v1322 = vpack.c.bf16 %v1258, %v1258
        %v1323 = vpack.c.bf16 %v1277, %v1277
        %v1324 = vpack.c.bf16 %v1296, %v1296
        %v1325 = vpack.c.bf16 %v1315, %v1315
        %1326 = vst.msk [vmem:[#allocation7] sm:$0xf] %vm773, %v1318
        %1328 = vrot.lane.b32.xlu0 %v1319, 4
        %v1329 = vpop.permute.xlu0 %1328
        %vm1331 = vcmask 60448
        %1332 = vst.msk [vmem:[#allocation7] sm:$0xf] %vm1331, %v1329
        %1334 = vrot.lane.b32.xlu0 %v1320, 8
        %v1335 = vpop.permute.xlu0 %1334
        %vm1337 = vcmask 93248
        %1338 = vst.msk [vmem:[#allocation7] sm:$0xf] %vm1337, %v1335
        %1340 = vrot.lane.b32.xlu0 %v1321, 12
        %v1341 = vpop.permute.xlu0 %1340
        %vm1343 = vcmask 126048
        %1344 = vst.msk [vmem:[#allocation7] sm:$0xf] %vm1343, %v1341
        %1346 = vrot.lane.b32.xlu0 %v1322, 16
        %v1347 = vpop.permute.xlu0 %1346
        %vm1349 = vcmask 158848
        %1350 = vst.msk [vmem:[#allocation7] sm:$0xf] %vm1349, %v1347
        %1352 = vrot.lane.b32.xlu0 %v1323, 20
        %v1353 = vpop.permute.xlu0 %1352
        %vm1355 = vcmask 191648
        %1356 = vst.msk [vmem:[#allocation7] sm:$0xf] %vm1355, %v1353
        %1358 = vrot.lane.b32.xlu0 %v1324, 24
        %v1359 = vpop.permute.xlu0 %1358
        %vm1361 = vcmask 224448
        %1362 = vst.msk [vmem:[#allocation7] sm:$0xf] %vm1361, %v1359
        %1364 = vrot.lane.b32.xlu0 %v1325, 28
        %v1365 = vpop.permute.xlu0 %1364
        %vm1367 = vcmask 257248
        %1368 = vst.msk [vmem:[#allocation7] sm:$0xf] %vm1367, %v1365
        %v1369 = vld [vmem:[#allocation7] sm:$0xf]
        %v1370 = vld [vmem:[%s4] sm:$0xf]
        %v1371 = vld [vmem:[%s4 + $0x4] sm:$0xf]
        %v1372 = vld [vmem:[%s4 + $0x8] sm:$0xf]
        %v1373 = vld [vmem:[%s4 + $0xc] sm:$0xf]
        %v1374 = vld [vmem:[#allocation14] sm:$0x1]
        %v1376 = vperm.slane %v1374, 0
        %v1382 = vunpack.c.l.b16 %v1370
        %v1383 = vunpack.c.l.b16 %v1371
        %v1384 = vunpack.c.l.b16 %v1372
        %v1385 = vunpack.c.l.b16 %v1373
        %v1386 = vpack.c.b16 %v1383, %v1382
        %v1387 = vpack.c.b16 %v1385, %v1384
        %v1391 = vsel %vm754, %v1369, 0
        %1393 = vmatpush.bf16.msra.mxu0 0
        %1394 = vmatpush.bf16.msra.mxu0 0
        %1395 = vmatpush.bf16.msra.mxu0 0
        %1396 = vmatpush.bf16.msra.mxu0 0
        %1397 = vmatpush.bf16.msra.mxu0 0
        %1398 = vmatpush.bf16.msra.mxu0 0
        %1399 = vmatpush.bf16.msra.mxu0 %v1387
        %1400 = vmatpush.bf16.msra.mxu0 %v1386
        %1401 = vmatmul.bf16.gmra.mxu0 %v1391
        %v1402 = vpop.f32.mrf.mxu0
        %v1403 = vadd.f32 %v1376, %v1402
        %v1404 = vpop.f32.mrf.mxu0
        %1405 = vdwg.mxu0
        %v1406 = vunpack.c.l.bf16 %v732
        %v1407 = vadd.f32 %v1406, %v1403
        %v1408 = vsel %vm754, %v1407, 0.0
        %1409 = vadd.xlane.f32.xlu0 %v1408
        %v1410 = vpop.xlane.xlu0 %1409
        %v1411 = vrcp.pop 32.0
        %v1412 = vmul.f32 32.0, %v1411
        %v1413 = vsub.f32 1.0, %v1412
        %v1414 = vmul.f32 %v1411, %v1413
        %v1415 = vadd.f32 %v1411, %v1414
        %vm1416 = vweird.f32 %v1411
        %v1417 = vsel %vm1416, %v1411, %v1415
        %v1418 = vmul.f32 %v1410, %v1417
        %v1419 = vsub.f32 %v1407, %v1418
        %v1420 = vmul.f32 %v1419, %v1419
        %v1421 = vsel %vm754, %v1420, 0.0
        %1422 = vadd.xlane.f32.xlu0 %v1421
        %v1423 = vpop.xlane.xlu0 %1422
        %v1424 = vmul.f32 %v1423, %v1417
        %v1426 = vperm.slane %v726, 0
        %v1428 = vmul.f32 %v1426, %v1419
        %v1429 = vadd.f32 %v1424, 1e-05
        %v1430 = vrsqrt.pop %v1429
        %v1431 = vmul.f32 %v1430, %v1429
        %v1432 = vmul.f32 %v1431, %v1430
        %v1433 = vmul.f32 0.5, %v1432
        %v1434 = vsub.f32 1.5, %v1433
        %v1435 = vmul.f32 %v1430, %v1434
        %vm1436 = vweird.f32 %v1429
        %vm1437 = vweird.f32 %v1430
        %vm1438 = vmor %vm1436, %vm1437
        %v1439 = vsel %vm1438, %v1430, %v1435
        %v1440 = vmul.f32 %v1428, %v1439
        %v1442 = vperm.slane %v729, 0
        %v1444 = vadd.f32 %v1440, %v1442
        %v1445 = vpack.c.bf16 %v1444, %v1444
        %v1446 = vld [vmem:[%s6] sm:$0xf]
        %v1447 = vld [vmem:[%s6 + $0x4] sm:$0xf]
        %v1448 = vld [vmem:[%s6 + $0x8] sm:$0xf]
        %v1449 = vld [vmem:[%s6 + $0xc] sm:$0xf]
        %v1450 = vld [vmem:[#allocation16] sm:$0x1]
        %v1452 = vperm.slane %v1450, 0
        %v1458 = vunpack.c.l.b16 %v1446
        %v1459 = vunpack.c.l.b16 %v1447
        %v1460 = vunpack.c.l.b16 %v1448
        %v1461 = vunpack.c.l.b16 %v1449
        %v1462 = vpack.c.b16 %v1459, %v1458
        %v1463 = vpack.c.b16 %v1461, %v1460
        %v1467 = vsel %vm754, %v1445, 0
        %1469 = vmatpush.bf16.msra.mxu0 0
        %1470 = vmatpush.bf16.msra.mxu0 0
        %1471 = vmatpush.bf16.msra.mxu0 0
        %1472 = vmatpush.bf16.msra.mxu0 0
        %1473 = vmatpush.bf16.msra.mxu0 0
        %1474 = vmatpush.bf16.msra.mxu0 0
        %1475 = vmatpush.bf16.msra.mxu0 %v1463
        %1476 = vmatpush.bf16.msra.mxu0 %v1462
        %1477 = vmatmul.bf16.gmra.mxu0 %v1467
        %v1478 = vpop.f32.mrf.mxu0
        %v1479 = vadd.f32 %v1452, %v1478
        %v1480 = vpop.f32.mrf.mxu0
        %1481 = vdwg.mxu0
        %v1482 = vld [vmem:[#allocation17] sm:$0xf]
        %v1483 = vld [vmem:[#allocation17 + $0x4] sm:$0xf]
        %v1484 = vld [vmem:[#allocation17 + $0x8] sm:$0xf]
        %v1485 = vld [vmem:[#allocation17 + $0xc] sm:$0xf]
        %v1486 = vld [vmem:[%s9] sm:$0x1]
        %v1488 = vperm.slane %v1486, 0
        %v1494 = vunpack.c.l.b16 %v1482
        %v1495 = vunpack.c.l.b16 %v1483
        %v1496 = vunpack.c.l.b16 %v1484
        %v1497 = vunpack.c.l.b16 %v1485
        %v1498 = vpack.c.b16 %v1495, %v1494
        %v1499 = vpack.c.b16 %v1497, %v1496
        %v1503 = vsel %vm754, %v733, 0
        %1505 = vmatpush.bf16.msra.mxu0 0
        %1506 = vmatpush.bf16.msra.mxu0 0
        %1507 = vmatpush.bf16.msra.mxu0 0
        %1508 = vmatpush.bf16.msra.mxu0 0
        %1509 = vmatpush.bf16.msra.mxu0 0
        %1510 = vmatpush.bf16.msra.mxu0 0
        %1511 = vmatpush.bf16.msra.mxu0 %v1499
        %1512 = vmatpush.bf16.msra.mxu0 %v1498
        %1513 = vmatmul.bf16.gmra.mxu0 %v1503
        %v1514 = vpop.f32.mrf.mxu0
        %v1515 = vadd.f32 %v1488, %v1514
        %v1516 = vpop.f32.mrf.mxu0
        %1517 = vdwg.mxu0
        %v1518 = vmul.f32 %v1479, 0.17677669
        %v1519 = vpack.c.bf16 %v1518, %v1518
        %1520 = vst.msk [vmem:[#allocation2] sm:$0xf] %vm773, %v1519
        %1522 = vrot.lane.b32.xlu0 %v1519, 124
        %v1523 = vpop.permute.xlu0 %1522
        %1525 = vst.msk [vmem:[%s779] sm:$0xf] %vm773, %v1523
        %1526 = vrot.lane.b32.xlu0 %v1519, 120
        %v1527 = vpop.permute.xlu0 %1526
        %1529 = vst.msk [vmem:[%s784] sm:$0xf] %vm773, %v1527
        %1530 = vrot.lane.b32.xlu0 %v1519, 116
        %v1531 = vpop.permute.xlu0 %1530
        %1533 = vst.msk [vmem:[%s789] sm:$0xf] %vm773, %v1531
        %1534 = vrot.lane.b32.xlu0 %v1519, 112
        %v1535 = vpop.permute.xlu0 %1534
        %1537 = vst.msk [vmem:[%s794] sm:$0xf] %vm773, %v1535
        %1538 = vrot.lane.b32.xlu0 %v1519, 108
        %v1539 = vpop.permute.xlu0 %1538
        %1541 = vst.msk [vmem:[%s799] sm:$0xf] %vm773, %v1539
        %1542 = vrot.lane.b32.xlu0 %v1519, 104
        %v1543 = vpop.permute.xlu0 %1542
        %1545 = vst.msk [vmem:[%s804] sm:$0xf] %vm773, %v1543
        %1546 = vrot.lane.b32.xlu0 %v1519, 100
        %v1547 = vpop.permute.xlu0 %1546
        %1549 = vst.msk [vmem:[%s809] sm:$0xf] %vm773, %v1547
        %v1550 = vpack.c.bf16 %v1515, %v1515
        %1551 = vst.msk [vmem:[#allocation5] sm:$0xf] %vm773, %v1550
        %1553 = vrot.lane.b32.xlu0 %v1550, 124
        %v1554 = vpop.permute.xlu0 %1553
        %s1556 = scalar_lea.vmem [#allocation5], 4
        %1557 = vst.msk [vmem:[%s1556] sm:$0xf] %vm773, %v1554
        %1558 = vrot.lane.b32.xlu0 %v1550, 120
        %v1559 = vpop.permute.xlu0 %1558
        %s1561 = scalar_lea.vmem [#allocation5], 8
        %1562 = vst.msk [vmem:[%s1561] sm:$0xf] %vm773, %v1559
        %1563 = vrot.lane.b32.xlu0 %v1550, 116
        %v1564 = vpop.permute.xlu0 %1563
        %s1566 = scalar_lea.vmem [#allocation5], 12
        %1567 = vst.msk [vmem:[%s1566] sm:$0xf] %vm773, %v1564
        %1568 = vrot.lane.b32.xlu0 %v1550, 112
        %v1569 = vpop.permute.xlu0 %1568
        %s1571 = scalar_lea.vmem [#allocation5], 16
        %1572 = vst.msk [vmem:[%s1571] sm:$0xf] %vm773, %v1569
        %1573 = vrot.lane.b32.xlu0 %v1550, 108
        %v1574 = vpop.permute.xlu0 %1573
        %s1576 = scalar_lea.vmem [#allocation5], 20
        %1577 = vst.msk [vmem:[%s1576] sm:$0xf] %vm773, %v1574
        %1578 = vrot.lane.b32.xlu0 %v1550, 104
        %v1579 = vpop.permute.xlu0 %1578
        %s1581 = scalar_lea.vmem [#allocation5], 24
        %1582 = vst.msk [vmem:[%s1581] sm:$0xf] %vm773, %v1579
        %1583 = vrot.lane.b32.xlu0 %v1550, 100
        %v1584 = vpop.permute.xlu0 %1583
        %s1586 = scalar_lea.vmem [#allocation5], 28
        %1587 = vst.msk [vmem:[%s1586] sm:$0xf] %vm773, %v1584
        %1588 = vrot.lane.b32.xlu0 %v1550, 96
        %v1589 = vpop.permute.xlu0 %1588
        %1591 = vst.msk [vmem:[#allocation6] sm:$0xf] %vm773, %v1589
        %1592 = vrot.lane.b32.xlu0 %v1550, 92
        %v1593 = vpop.permute.xlu0 %1592
        %s1595 = scalar_lea.vmem [#allocation6], 4
        %1596 = vst.msk [vmem:[%s1595] sm:$0xf] %vm773, %v1593
        %1597 = vrot.lane.b32.xlu0 %v1550, 88
        %v1598 = vpop.permute.xlu0 %1597
        %s1600 = scalar_lea.vmem [#allocation6], 8
        %1601 = vst.msk [vmem:[%s1600] sm:$0xf] %vm773, %v1598
        %1602 = vrot.lane.b32.xlu0 %v1550, 84
        %v1603 = vpop.permute.xlu0 %1602
        %s1605 = scalar_lea.vmem [#allocation6], 12
        %1606 = vst.msk [vmem:[%s1605] sm:$0xf] %vm773, %v1603
        %1607 = vrot.lane.b32.xlu0 %v1550, 80
        %v1608 = vpop.permute.xlu0 %1607
        %s1610 = scalar_lea.vmem [#allocation6], 16
        %1611 = vst.msk [vmem:[%s1610] sm:$0xf] %vm773, %v1608
        %1612 = vrot.lane.b32.xlu0 %v1550, 76
        %v1613 = vpop.permute.xlu0 %1612
        %s1615 = scalar_lea.vmem [#allocation6], 20
        %1616 = vst.msk [vmem:[%s1615] sm:$0xf] %vm773, %v1613
        %1617 = vrot.lane.b32.xlu0 %v1550, 72
        %v1618 = vpop.permute.xlu0 %1617
        %s1620 = scalar_lea.vmem [#allocation6], 24
        %1621 = vst.msk [vmem:[%s1620] sm:$0xf] %vm773, %v1618
        %1622 = vrot.lane.b32.xlu0 %v1550, 68
        %v1623 = vpop.permute.xlu0 %1622
        %s1625 = scalar_lea.vmem [#allocation6], 28
        %1626 = vst.msk [vmem:[%s1625] sm:$0xf] %vm773, %v1623
        %v1627 = vld [vmem:[#allocation2] sm:$0xf]
        %v1628 = vld [vmem:[#allocation2 + $0x4] sm:$0xf]
        %v1629 = vld [vmem:[#allocation2 + $0x8] sm:$0xf]
        %v1630 = vld [vmem:[#allocation2 + $0xc] sm:$0xf]
        %v1631 = vld [vmem:[#allocation2 + $0x10] sm:$0xf]
        %v1632 = vld [vmem:[#allocation2 + $0x14] sm:$0xf]
        %v1633 = vld [vmem:[#allocation2 + $0x18] sm:$0xf]
        %v1634 = vld [vmem:[#allocation2 + $0x1c] sm:$0xf]
        %v1635 = vld [vmem:[#allocation5] sm:$0xf]
        %v1636 = vld [vmem:[#allocation5 + $0x4] sm:$0xf]
        %v1637 = vld [vmem:[#allocation5 + $0x8] sm:$0xf]
        %v1638 = vld [vmem:[#allocation5 + $0xc] sm:$0xf]
        %v1639 = vld [vmem:[#allocation5 + $0x10] sm:$0xf]
        %v1640 = vld [vmem:[#allocation5 + $0x14] sm:$0xf]
        %v1641 = vld [vmem:[#allocation5 + $0x18] sm:$0xf]
        %v1642 = vld [vmem:[#allocation5 + $0x1c] sm:$0xf]
        %v1644 = vsel %vm907, %v1627, 0
        %v1647 = vsel %vm907, %v1635, 0
        %1649 = vmatpush.bf16.xpose.msra.mxu0 0
        %1650 = vmatpush.bf16.xpose.msra.mxu0 0
        %1651 = vmatpush.bf16.xpose.msra.mxu0 0
        %1652 = vmatpush.bf16.xpose.msra.mxu0 0
        %1653 = vmatpush.bf16.xpose.msra.mxu0 0
        %1654 = vmatpush.bf16.xpose.msra.mxu0 0
        %1655 = vmatpush.bf16.xpose.msra.mxu0 0
        %1656 = vmatpush.bf16.xpose.msra.mxu0 %v1647
        %1657 = vmatmul.bf16.gmra.mxu0 %v1644
        %v1658 = vpop.f32.mrf.mxu0
        %v1659 = vadd.f32 0.0, %v1658
        %v1660 = vpop.f32.mrf.mxu0
        %1661 = vdwg.mxu0
        %v1663 = vsel %vm907, %v1628, 0
        %v1666 = vsel %vm907, %v1636, 0
        %1668 = vmatpush.bf16.xpose.msra.mxu0 0
        %1669 = vmatpush.bf16.xpose.msra.mxu0 0
        %1670 = vmatpush.bf16.xpose.msra.mxu0 0
        %1671 = vmatpush.bf16.xpose.msra.mxu0 0
        %1672 = vmatpush.bf16.xpose.msra.mxu0 0
        %1673 = vmatpush.bf16.xpose.msra.mxu0 0
        %1674 = vmatpush.bf16.xpose.msra.mxu0 0
        %1675 = vmatpush.bf16.xpose.msra.mxu0 %v1666
        %1676 = vmatmul.bf16.gmra.mxu0 %v1663
        %v1677 = vpop.f32.mrf.mxu0
        %v1678 = vadd.f32 0.0, %v1677
        %v1679 = vpop.f32.mrf.mxu0
        %1680 = vdwg.mxu0
        %v1682 = vsel %vm907, %v1629, 0
        %v1685 = vsel %vm907, %v1637, 0
        %1687 = vmatpush.bf16.xpose.msra.mxu0 0
        %1688 = vmatpush.bf16.xpose.msra.mxu0 0
        %1689 = vmatpush.bf16.xpose.msra.mxu0 0
        %1690 = vmatpush.bf16.xpose.msra.mxu0 0
        %1691 = vmatpush.bf16.xpose.msra.mxu0 0
        %1692 = vmatpush.bf16.xpose.msra.mxu0 0
        %1693 = vmatpush.bf16.xpose.msra.mxu0 0
        %1694 = vmatpush.bf16.xpose.msra.mxu0 %v1685
        %1695 = vmatmul.bf16.gmra.mxu0 %v1682
        %v1696 = vpop.f32.mrf.mxu0
        %v1697 = vadd.f32 0.0, %v1696
        %v1698 = vpop.f32.mrf.mxu0
        %1699 = vdwg.mxu0
        %v1701 = vsel %vm907, %v1630, 0
        %v1704 = vsel %vm907, %v1638, 0
        %1706 = vmatpush.bf16.xpose.msra.mxu0 0
        %1707 = vmatpush.bf16.xpose.msra.mxu0 0
        %1708 = vmatpush.bf16.xpose.msra.mxu0 0
        %1709 = vmatpush.bf16.xpose.msra.mxu0 0
        %1710 = vmatpush.bf16.xpose.msra.mxu0 0
        %1711 = vmatpush.bf16.xpose.msra.mxu0 0
        %1712 = vmatpush.bf16.xpose.msra.mxu0 0
        %1713 = vmatpush.bf16.xpose.msra.mxu0 %v1704
        %1714 = vmatmul.bf16.gmra.mxu0 %v1701
        %v1715 = vpop.f32.mrf.mxu0
        %v1716 = vadd.f32 0.0, %v1715
        %v1717 = vpop.f32.mrf.mxu0
        %1718 = vdwg.mxu0
        %v1720 = vsel %vm907, %v1631, 0
        %v1723 = vsel %vm907, %v1639, 0
        %1725 = vmatpush.bf16.xpose.msra.mxu0 0
        %1726 = vmatpush.bf16.xpose.msra.mxu0 0
        %1727 = vmatpush.bf16.xpose.msra.mxu0 0
        %1728 = vmatpush.bf16.xpose.msra.mxu0 0
        %1729 = vmatpush.bf16.xpose.msra.mxu0 0
        %1730 = vmatpush.bf16.xpose.msra.mxu0 0
        %1731 = vmatpush.bf16.xpose.msra.mxu0 0
        %1732 = vmatpush.bf16.xpose.msra.mxu0 %v1723
        %1733 = vmatmul.bf16.gmra.mxu0 %v1720
        %v1734 = vpop.f32.mrf.mxu0
        %v1735 = vadd.f32 0.0, %v1734
        %v1736 = vpop.f32.mrf.mxu0
        %1737 = vdwg.mxu0
        %v1739 = vsel %vm907, %v1632, 0
        %v1742 = vsel %vm907, %v1640, 0
        %1744 = vmatpush.bf16.xpose.msra.mxu0 0
        %1745 = vmatpush.bf16.xpose.msra.mxu0 0
        %1746 = vmatpush.bf16.xpose.msra.mxu0 0
        %1747 = vmatpush.bf16.xpose.msra.mxu0 0
        %1748 = vmatpush.bf16.xpose.msra.mxu0 0
        %1749 = vmatpush.bf16.xpose.msra.mxu0 0
        %1750 = vmatpush.bf16.xpose.msra.mxu0 0
        %1751 = vmatpush.bf16.xpose.msra.mxu0 %v1742
        %1752 = vmatmul.bf16.gmra.mxu0 %v1739
        %v1753 = vpop.f32.mrf.mxu0
        %v1754 = vadd.f32 0.0, %v1753
        %v1755 = vpop.f32.mrf.mxu0
        %1756 = vdwg.mxu0
        %v1758 = vsel %vm907, %v1633, 0
        %v1761 = vsel %vm907, %v1641, 0
        %1763 = vmatpush.bf16.xpose.msra.mxu0 0
        %1764 = vmatpush.bf16.xpose.msra.mxu0 0
        %1765 = vmatpush.bf16.xpose.msra.mxu0 0
        %1766 = vmatpush.bf16.xpose.msra.mxu0 0
        %1767 = vmatpush.bf16.xpose.msra.mxu0 0
        %1768 = vmatpush.bf16.xpose.msra.mxu0 0
        %1769 = vmatpush.bf16.xpose.msra.mxu0 0
        %1770 = vmatpush.bf16.xpose.msra.mxu0 %v1761
        %1771 = vmatmul.bf16.gmra.mxu0 %v1758
        %v1772 = vpop.f32.mrf.mxu0
        %v1773 = vadd.f32 0.0, %v1772
        %v1774 = vpop.f32.mrf.mxu0
        %1775 = vdwg.mxu0
        %v1777 = vsel %vm907, %v1634, 0
        %v1780 = vsel %vm907, %v1642, 0
        %1782 = vmatpush.bf16.xpose.msra.mxu0 0
        %1783 = vmatpush.bf16.xpose.msra.mxu0 0
        %1784 = vmatpush.bf16.xpose.msra.mxu0 0
        %1785 = vmatpush.bf16.xpose.msra.mxu0 0
        %1786 = vmatpush.bf16.xpose.msra.mxu0 0
        %1787 = vmatpush.bf16.xpose.msra.mxu0 0
        %1788 = vmatpush.bf16.xpose.msra.mxu0 0
        %1789 = vmatpush.bf16.xpose.msra.mxu0 %v1780
        %1790 = vmatmul.bf16.gmra.mxu0 %v1777
        %v1791 = vpop.f32.mrf.mxu0
        %v1792 = vadd.f32 0.0, %v1791
        %v1793 = vpop.f32.mrf.mxu0
        %1794 = vdwg.mxu0
        %v1795 = vsel %vm1060, %v1659, -inf
        %1796 = vmax.xlane.f32.xlu0 %v1795
        %v1797 = vpop.xlane.xlu0 %1796
        %v1798 = vsel %vm1060, %v1678, -inf
        %1799 = vmax.xlane.f32.xlu0 %v1798
        %v1800 = vpop.xlane.xlu0 %1799
        %v1801 = vsel %vm1060, %v1697, -inf
        %1802 = vmax.xlane.f32.xlu0 %v1801
        %v1803 = vpop.xlane.xlu0 %1802
        %v1804 = vsel %vm1060, %v1716, -inf
        %1805 = vmax.xlane.f32.xlu0 %v1804
        %v1806 = vpop.xlane.xlu0 %1805
        %v1807 = vsel %vm1060, %v1735, -inf
        %1808 = vmax.xlane.f32.xlu0 %v1807
        %v1809 = vpop.xlane.xlu0 %1808
        %v1810 = vsel %vm1060, %v1754, -inf
        %1811 = vmax.xlane.f32.xlu0 %v1810
        %v1812 = vpop.xlane.xlu0 %1811
        %v1813 = vsel %vm1060, %v1773, -inf
        %1814 = vmax.xlane.f32.xlu0 %v1813
        %v1815 = vpop.xlane.xlu0 %1814
        %v1816 = vsel %vm1060, %v1792, -inf
        %1817 = vmax.xlane.f32.xlu0 %v1816
        %v1818 = vpop.xlane.xlu0 %1817
        %v1819 = vsub.f32 %v1659, %v1797
        %v1820 = vsub.f32 %v1678, %v1800
        %v1821 = vsub.f32 %v1697, %v1803
        %v1822 = vsub.f32 %v1716, %v1806
        %v1823 = vsub.f32 %v1735, %v1809
        %v1824 = vsub.f32 %v1754, %v1812
        %v1825 = vsub.f32 %v1773, %v1815
        %v1826 = vsub.f32 %v1792, %v1818
        %v1827 = vmul.f32 %v1819, 1.442695
        %v1828 = vpow.pop %v1827
        %v1829 = vmul.f32 %v1820, 1.442695
        %v1830 = vpow.pop %v1829
        %v1831 = vmul.f32 %v1821, 1.442695
        %v1832 = vpow.pop %v1831
        %v1833 = vmul.f32 %v1822, 1.442695
        %v1834 = vpow.pop %v1833
        %v1835 = vmul.f32 %v1823, 1.442695
        %v1836 = vpow.pop %v1835
        %v1837 = vmul.f32 %v1824, 1.442695
        %v1838 = vpow.pop %v1837
        %v1839 = vmul.f32 %v1825, 1.442695
        %v1840 = vpow.pop %v1839
        %v1841 = vmul.f32 %v1826, 1.442695
        %v1842 = vpow.pop %v1841
        %v1843 = vsel %vm1060, %v1828, 0.0
        %1844 = vadd.xlane.f32.xlu0 %v1843
        %v1845 = vpop.xlane.xlu0 %1844
        %v1846 = vsel %vm1060, %v1830, 0.0
        %1847 = vadd.xlane.f32.xlu0 %v1846
        %v1848 = vpop.xlane.xlu0 %1847
        %v1849 = vsel %vm1060, %v1832, 0.0
        %1850 = vadd.xlane.f32.xlu0 %v1849
        %v1851 = vpop.xlane.xlu0 %1850
        %v1852 = vsel %vm1060, %v1834, 0.0
        %1853 = vadd.xlane.f32.xlu0 %v1852
        %v1854 = vpop.xlane.xlu0 %1853
        %v1855 = vsel %vm1060, %v1836, 0.0
        %1856 = vadd.xlane.f32.xlu0 %v1855
        %v1857 = vpop.xlane.xlu0 %1856
        %v1858 = vsel %vm1060, %v1838, 0.0
        %1859 = vadd.xlane.f32.xlu0 %v1858
        %v1860 = vpop.xlane.xlu0 %1859
        %v1861 = vsel %vm1060, %v1840, 0.0
        %1862 = vadd.xlane.f32.xlu0 %v1861
        %v1863 = vpop.xlane.xlu0 %1862
        %v1864 = vsel %vm1060, %v1842, 0.0
        %1865 = vadd.xlane.f32.xlu0 %v1864
        %v1866 = vpop.xlane.xlu0 %1865
        %v1867 = vrcp.pop %v1845
        %v1868 = vrcp.pop %v1848
        %v1869 = vrcp.pop %v1851
        %v1870 = vrcp.pop %v1854
        %v1871 = vrcp.pop %v1857
        %v1872 = vrcp.pop %v1860
        %v1873 = vrcp.pop %v1863
        %v1874 = vrcp.pop %v1866
        %v1875 = vmul.f32 %v1828, %v1867
        %v1876 = vmul.f32 %v1830, %v1868
        %v1877 = vmul.f32 %v1832, %v1869
        %v1878 = vmul.f32 %v1834, %v1870
        %v1879 = vmul.f32 %v1836, %v1871
        %v1880 = vmul.f32 %v1838, %v1872
        %v1881 = vmul.f32 %v1840, %v1873
        %v1882 = vmul.f32 %v1842, %v1874
        %v1883 = vpack.c.bf16 %v1875, %v1875
        %v1884 = vpack.c.bf16 %v1876, %v1876
        %v1885 = vpack.c.bf16 %v1877, %v1877
        %v1886 = vpack.c.bf16 %v1878, %v1878
        %v1887 = vpack.c.bf16 %v1879, %v1879
        %v1888 = vpack.c.bf16 %v1880, %v1880
        %v1889 = vpack.c.bf16 %v1881, %v1881
        %v1890 = vpack.c.bf16 %v1882, %v1882
        %v1891 = vld [vmem:[#allocation6] sm:$0xf]
        %v1892 = vld [vmem:[#allocation6 + $0x4] sm:$0xf]
        %v1893 = vld [vmem:[#allocation6 + $0x8] sm:$0xf]
        %v1894 = vld [vmem:[#allocation6 + $0xc] sm:$0xf]
        %v1895 = vld [vmem:[#allocation6 + $0x10] sm:$0xf]
        %v1896 = vld [vmem:[#allocation6 + $0x14] sm:$0xf]
        %v1897 = vld [vmem:[#allocation6 + $0x18] sm:$0xf]
        %v1898 = vld [vmem:[#allocation6 + $0x1c] sm:$0xf]
        %v1900 = vsel %vm1060, %v1883, 0
        %v1903 = vsel %vm1168, %v1891, 0
        %1905 = vmatpush.bf16.msra.mxu0 0
        %1906 = vmatpush.bf16.msra.mxu0 0
        %1907 = vmatpush.bf16.msra.mxu0 0
        %1908 = vmatpush.bf16.msra.mxu0 0
        %1909 = vmatpush.bf16.msra.mxu0 0
        %1910 = vmatpush.bf16.msra.mxu0 0
        %1911 = vmatpush.bf16.msra.mxu0 0
        %1912 = vmatpush.bf16.msra.mxu0 %v1903
        %1913 = vmatmul.bf16.gmra.mxu0 %v1900
        %v1914 = vpop.f32.mrf.mxu0
        %v1915 = vadd.f32 0.0, %v1914
        %v1916 = vpop.f32.mrf.mxu0
        %1917 = vdwg.mxu0
        %v1919 = vsel %vm1060, %v1884, 0
        %v1922 = vsel %vm1168, %v1892, 0
        %1924 = vmatpush.bf16.msra.mxu0 0
        %1925 = vmatpush.bf16.msra.mxu0 0
        %1926 = vmatpush.bf16.msra.mxu0 0
        %1927 = vmatpush.bf16.msra.mxu0 0
        %1928 = vmatpush.bf16.msra.mxu0 0
        %1929 = vmatpush.bf16.msra.mxu0 0
        %1930 = vmatpush.bf16.msra.mxu0 0
        %1931 = vmatpush.bf16.msra.mxu0 %v1922
        %1932 = vmatmul.bf16.gmra.mxu0 %v1919
        %v1933 = vpop.f32.mrf.mxu0
        %v1934 = vadd.f32 0.0, %v1933
        %v1935 = vpop.f32.mrf.mxu0
        %1936 = vdwg.mxu0
        %v1938 = vsel %vm1060, %v1885, 0
        %v1941 = vsel %vm1168, %v1893, 0
        %1943 = vmatpush.bf16.msra.mxu0 0
        %1944 = vmatpush.bf16.msra.mxu0 0
        %1945 = vmatpush.bf16.msra.mxu0 0
        %1946 = vmatpush.bf16.msra.mxu0 0
        %1947 = vmatpush.bf16.msra.mxu0 0
        %1948 = vmatpush.bf16.msra.mxu0 0
        %1949 = vmatpush.bf16.msra.mxu0 0
        %1950 = vmatpush.bf16.msra.mxu0 %v1941
        %1951 = vmatmul.bf16.gmra.mxu0 %v1938
        %v1952 = vpop.f32.mrf.mxu0
        %v1953 = vadd.f32 0.0, %v1952
        %v1954 = vpop.f32.mrf.mxu0
        %1955 = vdwg.mxu0
        %v1957 = vsel %vm1060, %v1886, 0
        %v1960 = vsel %vm1168, %v1894, 0
        %1962 = vmatpush.bf16.msra.mxu0 0
        %1963 = vmatpush.bf16.msra.mxu0 0
        %1964 = vmatpush.bf16.msra.mxu0 0
        %1965 = vmatpush.bf16.msra.mxu0 0
        %1966 = vmatpush.bf16.msra.mxu0 0
        %1967 = vmatpush.bf16.msra.mxu0 0
        %1968 = vmatpush.bf16.msra.mxu0 0
        %1969 = vmatpush.bf16.msra.mxu0 %v1960
        %1970 = vmatmul.bf16.gmra.mxu0 %v1957
        %v1971 = vpop.f32.mrf.mxu0
        %v1972 = vadd.f32 0.0, %v1971
        %v1973 = vpop.f32.mrf.mxu0
        %1974 = vdwg.mxu0
        %v1976 = vsel %vm1060, %v1887, 0
        %v1979 = vsel %vm1168, %v1895, 0
        %1981 = vmatpush.bf16.msra.mxu0 0
        %1982 = vmatpush.bf16.msra.mxu0 0
        %1983 = vmatpush.bf16.msra.mxu0 0
        %1984 = vmatpush.bf16.msra.mxu0 0
        %1985 = vmatpush.bf16.msra.mxu0 0
        %1986 = vmatpush.bf16.msra.mxu0 0
        %1987 = vmatpush.bf16.msra.mxu0 0
        %1988 = vmatpush.bf16.msra.mxu0 %v1979
        %1989 = vmatmul.bf16.gmra.mxu0 %v1976
        %v1990 = vpop.f32.mrf.mxu0
        %v1991 = vadd.f32 0.0, %v1990
        %v1992 = vpop.f32.mrf.mxu0
        %1993 = vdwg.mxu0
        %v1995 = vsel %vm1060, %v1888, 0
        %v1998 = vsel %vm1168, %v1896, 0
        %2000 = vmatpush.bf16.msra.mxu0 0
        %2001 = vmatpush.bf16.msra.mxu0 0
        %2002 = vmatpush.bf16.msra.mxu0 0
        %2003 = vmatpush.bf16.msra.mxu0 0
        %2004 = vmatpush.bf16.msra.mxu0 0
        %2005 = vmatpush.bf16.msra.mxu0 0
        %2006 = vmatpush.bf16.msra.mxu0 0
        %2007 = vmatpush.bf16.msra.mxu0 %v1998
        %2008 = vmatmul.bf16.gmra.mxu0 %v1995
        %v2009 = vpop.f32.mrf.mxu0
        %v2010 = vadd.f32 0.0, %v2009
        %v2011 = vpop.f32.mrf.mxu0
        %2012 = vdwg.mxu0
        %v2014 = vsel %vm1060, %v1889, 0
        %v2017 = vsel %vm1168, %v1897, 0
        %2019 = vmatpush.bf16.msra.mxu0 0
        %2020 = vmatpush.bf16.msra.mxu0 0
        %2021 = vmatpush.bf16.msra.mxu0 0
        %2022 = vmatpush.bf16.msra.mxu0 0
        %2023 = vmatpush.bf16.msra.mxu0 0
        %2024 = vmatpush.bf16.msra.mxu0 0
        %2025 = vmatpush.bf16.msra.mxu0 0
        %2026 = vmatpush.bf16.msra.mxu0 %v2017
        %2027 = vmatmul.bf16.gmra.mxu0 %v2014
        %v2028 = vpop.f32.mrf.mxu0
        %v2029 = vadd.f32 0.0, %v2028
        %v2030 = vpop.f32.mrf.mxu0
        %2031 = vdwg.mxu0
        %v2033 = vsel %vm1060, %v1890, 0
        %v2036 = vsel %vm1168, %v1898, 0
        %2038 = vmatpush.bf16.msra.mxu0 0
        %2039 = vmatpush.bf16.msra.mxu0 0
        %2040 = vmatpush.bf16.msra.mxu0 0
        %2041 = vmatpush.bf16.msra.mxu0 0
        %2042 = vmatpush.bf16.msra.mxu0 0
        %2043 = vmatpush.bf16.msra.mxu0 0
        %2044 = vmatpush.bf16.msra.mxu0 0
        %2045 = vmatpush.bf16.msra.mxu0 %v2036
        %2046 = vmatmul.bf16.gmra.mxu0 %v2033
        %v2047 = vpop.f32.mrf.mxu0
        %v2048 = vadd.f32 0.0, %v2047
        %v2049 = vpop.f32.mrf.mxu0
        %2050 = vdwg.mxu0
        %v2051 = vpack.c.bf16 %v1915, %v1915
        %v2052 = vpack.c.bf16 %v1934, %v1934
        %v2053 = vpack.c.bf16 %v1953, %v1953
        %v2054 = vpack.c.bf16 %v1972, %v1972
        %v2055 = vpack.c.bf16 %v1991, %v1991
        %v2056 = vpack.c.bf16 %v2010, %v2010
        %v2057 = vpack.c.bf16 %v2029, %v2029
        %v2058 = vpack.c.bf16 %v2048, %v2048
        %2059 = vst.msk [vmem:[#allocation7] sm:$0xf] %vm773, %v2051
        %2061 = vrot.lane.b32.xlu0 %v2052, 4
        %v2062 = vpop.permute.xlu0 %2061
        %2064 = vst.msk [vmem:[#allocation7] sm:$0xf] %vm1331, %v2062
        %2066 = vrot.lane.b32.xlu0 %v2053, 8
        %v2067 = vpop.permute.xlu0 %2066
        %2069 = vst.msk [vmem:[#allocation7] sm:$0xf] %vm1337, %v2067
        %2071 = vrot.lane.b32.xlu0 %v2054, 12
        %v2072 = vpop.permute.xlu0 %2071
        %2074 = vst.msk [vmem:[#allocation7] sm:$0xf] %vm1343, %v2072
        %2076 = vrot.lane.b32.xlu0 %v2055, 16
        %v2077 = vpop.permute.xlu0 %2076
        %2079 = vst.msk [vmem:[#allocation7] sm:$0xf] %vm1349, %v2077
        %2081 = vrot.lane.b32.xlu0 %v2056, 20
        %v2082 = vpop.permute.xlu0 %2081
        %2084 = vst.msk [vmem:[#allocation7] sm:$0xf] %vm1355, %v2082
        %2086 = vrot.lane.b32.xlu0 %v2057, 24
        %v2087 = vpop.permute.xlu0 %2086
        %2089 = vst.msk [vmem:[#allocation7] sm:$0xf] %vm1361, %v2087
        %2091 = vrot.lane.b32.xlu0 %v2058, 28
        %v2092 = vpop.permute.xlu0 %2091
        %2094 = vst.msk [vmem:[#allocation7] sm:$0xf] %vm1367, %v2092
        %v2095 = vld [vmem:[#allocation7] sm:$0xf]
        %v2096 = vld [vmem:[#allocation19] sm:$0xf]
        %v2097 = vld [vmem:[#allocation19 + $0x4] sm:$0xf]
        %v2098 = vld [vmem:[#allocation19 + $0x8] sm:$0xf]
        %v2099 = vld [vmem:[#allocation19 + $0xc] sm:$0xf]
        %v2100 = vld [vmem:[%s11] sm:$0x1]
        %v2102 = vperm.slane %v2100, 0
        %v2108 = vunpack.c.l.b16 %v2096
        %v2109 = vunpack.c.l.b16 %v2097
        %v2110 = vunpack.c.l.b16 %v2098
        %v2111 = vunpack.c.l.b16 %v2099
        %v2112 = vpack.c.b16 %v2109, %v2108
        %v2113 = vpack.c.b16 %v2111, %v2110
        %v2117 = vsel %vm754, %v2095, 0
        %2119 = vmatpush.bf16.msra.mxu0 0
        %2120 = vmatpush.bf16.msra.mxu0 0
        %2121 = vmatpush.bf16.msra.mxu0 0
        %2122 = vmatpush.bf16.msra.mxu0 0
        %2123 = vmatpush.bf16.msra.mxu0 0
        %2124 = vmatpush.bf16.msra.mxu0 0
        %2125 = vmatpush.bf16.msra.mxu0 %v2113
        %2126 = vmatpush.bf16.msra.mxu0 %v2112
        %2127 = vmatmul.bf16.gmra.mxu0 %v2117
        %v2128 = vpop.f32.mrf.mxu0
        %v2129 = vadd.f32 %v2102, %v2128
        %v2130 = vpop.f32.mrf.mxu0
        %2131 = vdwg.mxu0
        %v2132 = vadd.f32 %v1444, %v2129
        %v2133 = vsel %vm754, %v2132, 0.0
        %2134 = vadd.xlane.f32.xlu0 %v2133
        %v2135 = vpop.xlane.xlu0 %2134
        %v2136 = vmul.f32 %v2135, %v1417
        %v2137 = vsub.f32 %v2132, %v2136
        %v2138 = vmul.f32 %v2137, %v2137
        %v2139 = vsel %vm754, %v2138, 0.0
        %2140 = vadd.xlane.f32.xlu0 %v2139
        %v2141 = vpop.xlane.xlu0 %2140
        %v2142 = vmul.f32 %v2141, %v1417
        %v2144 = vperm.slane %v727, 0
        %v2146 = vmul.f32 %v2144, %v2137
        %v2147 = vadd.f32 %v2142, 1e-05
        %v2148 = vrsqrt.pop %v2147
        %v2149 = vmul.f32 %v2148, %v2147
        %v2150 = vmul.f32 %v2149, %v2148
        %v2151 = vmul.f32 0.5, %v2150
        %v2152 = vsub.f32 1.5, %v2151
        %v2153 = vmul.f32 %v2148, %v2152
        %vm2154 = vweird.f32 %v2147
        %vm2155 = vweird.f32 %v2148
        %vm2156 = vmor %vm2154, %vm2155
        %v2157 = vsel %vm2156, %v2148, %v2153
        %v2158 = vmul.f32 %v2146, %v2157
        %v2160 = vperm.slane %v730, 0
        %v2162 = vadd.f32 %v2158, %v2160
        %v2163 = vpack.c.bf16 %v2162, %v2162
        %v2164 = vld [vmem:[#allocation20] sm:$0xf]
        %v2165 = vld [vmem:[#allocation20 + $0x4] sm:$0xf]
        %v2166 = vld [vmem:[#allocation20 + $0x8] sm:$0xf]
        %v2167 = vld [vmem:[#allocation20 + $0xc] sm:$0xf]
        %v2168 = vld [vmem:[%s13] sm:$0x1]
        %v2170 = vperm.slane %v2168, 0
        %v2176 = vunpack.c.l.b16 %v2164
        %v2177 = vunpack.c.l.b16 %v2165
        %v2178 = vunpack.c.l.b16 %v2166
        %v2179 = vunpack.c.l.b16 %v2167
        %v2180 = vpack.c.b16 %v2177, %v2176
        %v2181 = vpack.c.b16 %v2179, %v2178
        %v2185 = vsel %vm754, %v2163, 0
        %2187 = vmatpush.bf16.msra.mxu0 0
        %2188 = vmatpush.bf16.msra.mxu0 0
        %2189 = vmatpush.bf16.msra.mxu0 0
        %2190 = vmatpush.bf16.msra.mxu0 0
        %2191 = vmatpush.bf16.msra.mxu0 0
        %2192 = vmatpush.bf16.msra.mxu0 0
        %2193 = vmatpush.bf16.msra.mxu0 %v2181
        %2194 = vmatpush.bf16.msra.mxu0 %v2180
        %2195 = vmatmul.bf16.gmra.mxu0 %v2185
        %v2196 = vpop.f32.mrf.mxu0
        %v2197 = vadd.f32 %v2170, %v2196
        %v2198 = vpop.f32.mrf.mxu0
        %2199 = vdwg.mxu0
        %v2200 = vmax.f32 %v2197, 0.0
        %v2201 = vpack.c.bf16 %v2200, %v2200
        %v2202 = vld [vmem:[%s14] sm:$0xf]
        %v2203 = vld [vmem:[%s14 + $0x4] sm:$0xf]
        %v2204 = vld [vmem:[%s14 + $0x8] sm:$0xf]
        %v2205 = vld [vmem:[%s14 + $0xc] sm:$0xf]
        %v2206 = vld [vmem:[%s14 + $0x10] sm:$0xf]
        %v2207 = vld [vmem:[%s14 + $0x14] sm:$0xf]
        %v2208 = vld [vmem:[%s14 + $0x18] sm:$0xf]
        %v2209 = vld [vmem:[%s14 + $0x1c] sm:$0xf]
        %v2210 = vld [vmem:[%s15] sm:$0x1]
        %v2212 = vperm.slane %v2210, 0
        %v2222 = vunpack.c.l.b16 %v2202
        %v2223 = vunpack.c.l.b16 %v2203
        %v2224 = vunpack.c.l.b16 %v2204
        %v2225 = vunpack.c.l.b16 %v2205
        %v2226 = vunpack.c.l.b16 %v2206
        %v2227 = vunpack.c.l.b16 %v2207
        %v2228 = vunpack.c.l.b16 %v2208
        %v2229 = vunpack.c.l.b16 %v2209
        %v2230 = vpack.c.b16 %v2223, %v2222
        %v2231 = vpack.c.b16 %v2225, %v2224
        %v2232 = vpack.c.b16 %v2227, %v2226
        %v2233 = vpack.c.b16 %v2229, %v2228
        %vm2238 = vcmask 523264
        %v2240 = vsel %vm2238, %v2201, 0
        %2242 = vmatpush.bf16.msra.mxu0 0
        %2243 = vmatpush.bf16.msra.mxu0 0
        %2244 = vmatpush.bf16.msra.mxu0 0
        %2245 = vmatpush.bf16.msra.mxu0 0
        %2246 = vmatpush.bf16.msra.mxu0 %v2233
        %2247 = vmatpush.bf16.msra.mxu0 %v2232
        %2248 = vmatpush.bf16.msra.mxu0 %v2231
        %2249 = vmatpush.bf16.msra.mxu0 %v2230
        %2250 = vmatmul.bf16.gmra.mxu0 %v2240
        %v2251 = vpop.f32.mrf.mxu0
        %v2252 = vadd.f32 %v2212, %v2251
        %v2253 = vpop.f32.mrf.mxu0
        %2254 = vdwg.mxu0
        %v2255 = vadd.f32 %v2162, %v2252
        %v2256 = vsel %vm754, %v2255, 0.0
        %2257 = vadd.xlane.f32.xlu0 %v2256
        %v2258 = vpop.xlane.xlu0 %2257
        %v2259 = vmul.f32 %v2258, %v1417
        %v2260 = vsub.f32 %v2255, %v2259
        %v2261 = vmul.f32 %v2260, %v2260
        %v2262 = vsel %vm754, %v2261, 0.0
        %2263 = vadd.xlane.f32.xlu0 %v2262
        %v2264 = vpop.xlane.xlu0 %2263
        %v2265 = vmul.f32 %v2264, %v1417
        %v2267 = vperm.slane %v728, 0
        %v2269 = vmul.f32 %v2267, %v2260
        %v2270 = vadd.f32 %v2265, 1e-05
        %v2271 = vrsqrt.pop %v2270
        %v2272 = vmul.f32 %v2271, %v2270
        %v2273 = vmul.f32 %v2272, %v2271
        %v2274 = vmul.f32 0.5, %v2273
        %v2275 = vsub.f32 1.5, %v2274
        %v2276 = vmul.f32 %v2271, %v2275
        %vm2277 = vweird.f32 %v2270
        %vm2278 = vweird.f32 %v2271
        %vm2279 = vmor %vm2277, %vm2278
        %v2280 = vsel %vm2279, %v2271, %v2276
        %v2281 = vmul.f32 %v2269, %v2280
        %v2283 = vperm.slane %v731, 0
        %v2285 = vadd.f32 %v2281, %v2283
        %v2286 = vpack.c.bf16 %v2285, %v2285
        %vm2287 = vcmask 257024
        %2288 = vst.msk [vmem:[%s724] sm:$0xf] %vm2287, %v2286
        %s2289 = sand.u32 %s437, 1
        %s2290 = scalar_lea.sflag [#allocation10], %s2289
        %s2291 = sand.u32 %s437, 1
        %s2292 = smul.addr %s2291, 4
        %s2293 = scalar_lea.vmem [#allocation22], %s2292
        // Predicated region
        $region125: #{tpu_custom_call.1} parent=91 // pred_check
          %p2294 = pneg %p447
        $region126: #{tpu_custom_call.1} parent=91 // pred_check_branch
          %2296 = sbr.rel (%p2294) target = $region128
        $region127: #{tpu_custom_call.1} parent=91 // pred_region
          %2298 = vsyncadd %s2290, 0
          %s2299 = smul.addr %s41, 4
          %s2300 = scalar_lea.hbm %s18, %s2299
          %s2302 = sshll.u32 %s2293, 4
          %s2303 = int_to_ptr.vmem [resolvable:$true] %s2302
          %s2304 = sshll.u32 %s2300, 4
          %s2305 = int_to_ptr.hbm [resolvable:$true] %s2304
          %2307 = dma.vmem_to_hbm [thread:$0]  %s2303, 64, %s2305, %s2290
        $region128: #{tpu_custom_call.1} parent=91 // pred_fallthru
          _
      $region92: #{tpu_custom_call.1} parent=5 // pred_fallthru
        _
      %p2308 = scmp.le.s32.totalorder 2, %s36
      // Predicated region
      $region129: #{tpu_custom_call.1} parent=5 // pred_check
        %p2309 = pneg %p2308
      $region130: #{tpu_custom_call.1} parent=5 // pred_check_branch
        %2311 = sbr.rel (%p2309) target = $region132
      $region131: #{tpu_custom_call.1} parent=5 // pred_region
        %s2312 = ssub.s32 %s36, 2
        // Predicated region
        $region133: #{tpu_custom_call.1} parent=131 // pred_check
          %p2313 = pneg %p453
        $region134: #{tpu_custom_call.1} parent=131 // pred_check_branch
          %2315 = sbr.rel (%p2313) target = $region136
        $region135: #{tpu_custom_call.1} parent=131 // pred_region
          %s2316 = sand.u32 %s438, 1
          %s2317 = scalar_lea.sflag [#allocation10], %s2316
          %s2318 = sand.u32 %s438, 1
          %s2319 = smul.addr %s2318, 4
          %s2320 = scalar_lea.vmem [#allocation22], %s2319
          %2322 = dma.done %s2317, 64
        $region136: #{tpu_custom_call.1} parent=131 // pred_fallthru
          _
      $region132: #{tpu_custom_call.1} parent=5 // pred_fallthru
        _
    $region6: #{tpu_custom_call.1} parent=1 // loop_footer
      %s40 = sadd.s32 1, %s36
    $region7: #{tpu_custom_call.1} parent=1 // loop_footer_branch
      %35 = sbr.rel target = $region3
    $region8: #{tpu_custom_call.1} parent=1 // loop_exit
      _
    %2323 = vsyncpa [#allocation9], 1
    %s2324 = scalar_lea.sflag [#allocation9], 1
    %2325 = vsyncpa %s2324, 1
    %2326 = vsyncpa [#allocation12], 1
    %s2327 = scalar_lea.sflag [#allocation12], 1
    %2328 = vsyncpa %s2327, 1
    %2329 = vsyncpa [#allocation15], 1
    %2330 = vsyncpa [#allocation18], 1
    %2331 = vsyncpa [#allocation21], 1
    %2332 = vsyncpa [#allocation10], 1
    %s2333 = scalar_lea.sflag [#allocation10], 1
    %2334 = vsyncpa %s2333, 1

</llo_original>
